<compile_context>
chip_gen: v5e
topology: v5e:2x2
jax: 0.10.0
libtpu: 0.0.40
codegen_flags: <defaults>
</compile_context>

<pallas_src>
import jax
import jax.numpy as jnp
from jax.experimental import pallas as pl
from jax.experimental.pallas import tpu as pltpu

# ----------------------------- model dims -----------------------------------
NUM_LAYERS = 2
EMB_SIZE = 32
HIDDEN = 32            # emb_size == hidden_size
VOCAB = 128
BATCH = 8
STEPS = 8              # decode steps handled by one pallas_call

GP = 128               # per-gate lane padding (vreg-aligned gate slices)
SHIFT = 32             # lane offset of the layer-1 hidden state inside its vreg
G0 = 3 * GP            # layer-0 gate columns: [r | z | n]       (both i- and h-side)
G1 = 4 * GP            # layer-1 gate columns: [r(i+h) | z(i+h) | i_n | h_n]
TB = STEPS * BATCH


# ----------------------------- Pallas kernel --------------------------------
def rnn_decoder_kernel(embs_ref, h0_ref, w_ih0_ref, b_ih0_ref,
                       w_hh0_ref, b_hh0_ref, w_l1_ref, b_l1_ref,
                       w_out_ref, b_out_ref,
                       scores_ref, h1_ref,
                       i0_ref, top_ref):
    """All T decode steps in one invocation.

    embs_ref   : (T*B, GP)   f32   embeddings, zero-padded past E
    h0_ref     : (L, B, GP)  f32   initial state; layer 0 at lanes [0:H),
                                   layer 1 pre-shifted to lanes [SHIFT:SHIFT+H)
    w_ih0_ref  : (GP, G0)    f32   layer-0 input projection (gate-padded)
    b_ih0_ref  : (1, G0)     f32
    w_hh0_ref  : (GP, G0)    f32   layer-0 hidden projection (b_hh_n on h-side)
    b_hh0_ref  : (1, G0)     f32
    w_l1_ref   : (GP, G1)    f32   layer-1 fused [x|h] weight, merged r/z gates
    b_l1_ref   : (1, G1)     f32
    w_out_ref  : (GP, V)     f32   output projection (rows [SHIFT:SHIFT+H) valid)
    b_out_ref  : (1, V)      f32
    scores_ref : (T*B, V)    f32   out
    h1_ref     : (L, B, GP)  f32   out (same lane layout as h0)
    i0_ref     : (T*B, G0)   f32   scratch: precomputed layer-0 input gates
    top_ref    : (T*B, GP)   f32   scratch: per-step top-layer hidden state
    """
    # ---- prologue: layer-0 input projection for ALL steps (off the serial chain)
    i0_ref[...] = (jnp.dot(embs_ref[...], w_ih0_ref[...],
                           preferred_element_type=jnp.float32) + b_ih0_ref[...])

    h_l0_init = h0_ref[0]          # (B, GP), valid lanes [0:H)
    h_l1_init = h0_ref[1]          # (B, GP), valid lanes [SHIFT:SHIFT+H)

    def step(t, carry):
        h_l0, h_l1 = carry
        off = pl.multiple_of(t * BATCH, BATCH)

        # ---- layer 0 GRU cell (input projection precomputed) ----
        hg0 = (jnp.dot(h_l0, w_hh0_ref[...],
                       preferred_element_type=jnp.float32) + b_hh0_ref[...])
        i0 = i0_ref[pl.ds(off, BATCH), :]
        r0 = jax.nn.sigmoid(i0[:, 0 * GP:1 * GP] + hg0[:, 0 * GP:1 * GP])
        z0 = jax.nn.sigmoid(i0[:, 1 * GP:2 * GP] + hg0[:, 1 * GP:2 * GP])
        n0 = jnp.tanh(i0[:, 2 * GP:3 * GP] + r0 * hg0[:, 2 * GP:3 * GP])
        h_l0_new = n0 + z0 * (h_l0 - n0)               # == (1-z)*n + z*h

        # ---- layer 1 GRU cell: fused K=128 ([x @ lanes 0:32 | h @ lanes 32:64]),
        #      merged r/z gates, n gate split to keep b_hh_n before the r-multiply.
        #      Inter-layer dropout is identity (eval mode / p=0.0).
        zin = h_l0_new + h_l1                          # disjoint lane occupancy
        g1 = (jnp.dot(zin, w_l1_ref[...],
                      preferred_element_type=jnp.float32) + b_l1_ref[...])
        r1 = jax.nn.sigmoid(g1[:, 0 * GP:1 * GP])
        z1 = jax.nn.sigmoid(g1[:, 1 * GP:2 * GP])
        n1 = jnp.tanh(g1[:, 2 * GP:3 * GP] + r1 * g1[:, 3 * GP:4 * GP])
        h_l1_new = n1 + z1 * (h_l1 - n1)               # stays in shifted lanes

        top_ref[pl.ds(off, BATCH), :] = h_l1_new
        return (h_l0_new, h_l1_new)

    h_l0_fin, h_l1_fin = jax.lax.fori_loop(
        0, STEPS, step, (h_l0_init, h_l1_init), unroll=True)

    # ---- epilogue: state writeback + ONE batched output projection (compute_score)
    h1_ref[0] = h_l0_fin
    h1_ref[1] = h_l1_fin
    scores_ref[...] = (jnp.dot(top_ref[...], w_out_ref[...],
                               preferred_element_type=jnp.float32) + b_out_ref[...])


# ----------------------------- param packing ---------------------------------
def build_fused_params(w_ih, w_hh, b_ih, b_hh, w_lin, b_lin):
    """PyTorch-layout GRU/Linear params -> gate-padded, fused kernel params.

    w_ih: (L, 3H, E)   w_hh: (L, 3H, H)   b_ih/b_hh: (L, 3H)   (gate order r,z,n)
    w_lin: (V, H)      b_lin: (V,)
    """
    H, E, V = HIDDEN, EMB_SIZE, VOCAB

    # ---- layer 0: separate i-side (precomputed) / h-side projections, natural lanes
    w_ih0 = jnp.zeros((GP, G0), jnp.float32)
    b_ih0 = jnp.zeros((1, G0), jnp.float32)
    w_hh0 = jnp.zeros((GP, G0), jnp.float32)
    b_hh0 = jnp.zeros((1, G0), jnp.float32)
    for g in range(3):
        w_ih0 = w_ih0.at[0:E, g * GP:g * GP + H].set(w_ih[0, g * H:(g + 1) * H, :].T)
        b_ih0 = b_ih0.at[0, g * GP:g * GP + H].set(b_ih[0, g * H:(g + 1) * H])
        w_hh0 = w_hh0.at[0:H, g * GP:g * GP + H].set(w_hh[0, g * H:(g + 1) * H, :].T)
        b_hh0 = b_hh0.at[0, g * GP:g * GP + H].set(b_hh[0, g * H:(g + 1) * H])

    # ---- layer 1: fused [x | h_shifted] weight; outputs at lanes [SHIFT:SHIFT+H)
    # of each gate block so the carried state stays in shifted lanes.
    def ih1(g):
        return w_ih[1, g * H:(g + 1) * H, :].T          # (H, H)

    def hh1(g):
        return w_hh[1, g * H:(g + 1) * H, :].T          # (H, H)

    w_l1 = jnp.zeros((GP, G1), jnp.float32)
    b_l1 = jnp.zeros((1, G1), jnp.float32)
    co = SHIFT  # output-column offset inside each gate block
    # block 0: merged r gate (i_r + h_r), biases pre-summed
    w_l1 = w_l1.at[0:H, 0 * GP + co:0 * GP + co + H].set(ih1(0))
    w_l1 = w_l1.at[SHIFT:SHIFT + H, 0 * GP + co:0 * GP + co + H].set(hh1(0))
    b_l1 = b_l1.at[0, 0 * GP + co:0 * GP + co + H].set(b_ih[1, 0:H] + b_hh[1, 0:H])
    # block 1: merged z gate
    w_l1 = w_l1.at[0:H, 1 * GP + co:1 * GP + co + H].set(ih1(1))
    w_l1 = w_l1.at[SHIFT:SHIFT + H, 1 * GP + co:1 * GP + co + H].set(hh1(1))
    b_l1 = b_l1.at[0, 1 * GP + co:1 * GP + co + H].set(
        b_ih[1, H:2 * H] + b_hh[1, H:2 * H])
    # block 2: i_n (input side of n gate)
    w_l1 = w_l1.at[0:H, 2 * GP + co:2 * GP + co + H].set(ih1(2))
    b_l1 = b_l1.at[0, 2 * GP + co:2 * GP + co + H].set(b_ih[1, 2 * H:3 * H])
    # block 3: h_n (hidden side of n gate, b_hh_n stays here -> before r-multiply)
    w_l1 = w_l1.at[SHIFT:SHIFT + H, 3 * GP + co:3 * GP + co + H].set(hh1(2))
    b_l1 = b_l1.at[0, 3 * GP + co:3 * GP + co + H].set(b_hh[1, 2 * H:3 * H])

    # ---- output projection: top layer lives in shifted lanes [SHIFT:SHIFT+H)
    w_out = jnp.zeros((GP, V), jnp.float32).at[SHIFT:SHIFT + H, :].set(w_lin.T)
    b_out = b_lin.reshape(1, V)
    return w_ih0, b_ih0, w_hh0, b_hh0, w_l1, b_l1, w_out, b_out


# ----------------------------- wrapper ---------------------------------------
@jax.jit
def rnn_decoder_decode(emb_table_pad, input_ids, h0,
                       w_ih0, b_ih0, w_hh0, b_hh0, w_l1, b_l1, w_out, b_out):
    """Runs STEPS teacher-forced decode steps in ONE pallas_call."""
    T, B = input_ids.shape
    # Glue: embedding gather from the pre-padded table.
    embs_flat = emb_table_pad[input_ids.reshape(T * B)]            # (T*B, GP)
    # Layer 0 state in natural lanes; layer 1 state pre-shifted by SHIFT lanes.
    h0_l0 = jnp.pad(h0[0], ((0, 0), (0, GP - HIDDEN)))
    h0_l1 = jnp.pad(h0[1], ((0, 0), (SHIFT, GP - SHIFT - HIDDEN)))
    h0_pad = jnp.stack([h0_l0, h0_l1])

    scores_flat, h1_pad = pl.pallas_call(
        rnn_decoder_kernel,
        grid=(1,),
        in_specs=[
            pl.BlockSpec((T * B, GP), lambda i: (0, 0)),                 # embs
            pl.BlockSpec((NUM_LAYERS, B, GP), lambda i: (0, 0, 0)),      # h0
            pl.BlockSpec((GP, G0), lambda i: (0, 0)),                    # W_ih0
            pl.BlockSpec((1, G0), lambda i: (0, 0)),                     # b_ih0
            pl.BlockSpec((GP, G0), lambda i: (0, 0)),                    # W_hh0
            pl.BlockSpec((1, G0), lambda i: (0, 0)),                     # b_hh0
            pl.BlockSpec((GP, G1), lambda i: (0, 0)),                    # W layer1
            pl.BlockSpec((1, G1), lambda i: (0, 0)),                     # b layer1
            pl.BlockSpec((GP, VOCAB), lambda i: (0, 0)),                 # W out
            pl.BlockSpec((1, VOCAB), lambda i: (0, 0)),                  # b out
        ],
        out_specs=(
            pl.BlockSpec((T * B, VOCAB), lambda i: (0, 0)),              # scores
            pl.BlockSpec((NUM_LAYERS, B, GP), lambda i: (0, 0, 0)),      # h1
        ),
        out_shape=(
            jax.ShapeDtypeStruct((T * B, VOCAB), jnp.float32),
            jax.ShapeDtypeStruct((NUM_LAYERS, B, GP), jnp.float32),
        ),
        scratch_shapes=[
            pltpu.VMEM((T * B, G0), jnp.float32),    # precomputed layer-0 i-gates
            pltpu.VMEM((T * B, GP), jnp.float32),    # top-layer h per step
        ],
        input_output_aliases={1: 1},                 # h0 buffer updated in place
        compiler_params=pltpu.CompilerParams(
            dimension_semantics=("arbitrary",)),
    )(embs_flat, h0_pad, w_ih0, b_ih0, w_hh0, b_hh0, w_l1, b_l1, w_out, b_out)

    scores = scores_flat.reshape(T, B, VOCAB)
    h1 = jnp.stack([h1_pad[0, :, 0:HIDDEN],
                    h1_pad[1, :, SHIFT:SHIFT + HIDDEN]])
    return scores, h1


# ----------------------------- plain-JAX reference ---------------------------
def gru_cell_ref(x, h, w_ih, w_hh, b_ih, b_hh):
    H = HIDDEN
    gi = x @ w_ih.T + b_ih
    gh = h @ w_hh.T + b_hh
    r = jax.nn.sigmoid(gi[:, :H] + gh[:, :H])
    z = jax.nn.sigmoid(gi[:, H:2 * H] + gh[:, H:2 * H])
    n = jnp.tanh(gi[:, 2 * H:] + r * gh[:, 2 * H:])
    return (1.0 - z) * n + z * h


def decoder_ref(emb_table, input_ids, h0, w_ih, w_hh, b_ih, b_hh, w_lin, b_lin):
    h = h0
    scores_all = []
    for t in range(input_ids.shape[0]):
        x = emb_table[input_ids[t]]
        new_h = []
        for layer in range(NUM_LAYERS):
            h_new = gru_cell_ref(x, h[layer], w_ih[layer], w_hh[layer],
                                 b_ih[layer], b_hh[layer])
            new_h.append(h_new)
            x = h_new
        h = jnp.stack(new_h)
        scores_all.append(x @ w_lin.T + b_lin)
    return jnp.stack(scores_all), h


# ----------------------------- main ------------------------------------------
if __name__ == "__main__":
    key = jax.random.PRNGKey(0)
    keys = jax.random.split(key, 10)

    # Deterministic synthetic parameters in PyTorch layout (no checkpoint load).
    emb_table = jax.random.normal(keys[0], (VOCAB, EMB_SIZE), jnp.float32) * 0.1
    w_ih = jax.random.normal(keys[1], (NUM_LAYERS, 3 * HIDDEN, EMB_SIZE),
                             jnp.float32) * 0.1
    w_hh = jax.random.normal(keys[2], (NUM_LAYERS, 3 * HIDDEN, HIDDEN),
                             jnp.float32) * 0.1
    b_ih = jax.random.normal(keys[3], (NUM_LAYERS, 3 * HIDDEN), jnp.float32) * 0.1
    b_hh = jax.random.normal(keys[4], (NUM_LAYERS, 3 * HIDDEN), jnp.float32) * 0.1
    w_lin = jax.random.normal(keys[5], (VOCAB, HIDDEN), jnp.float32) * 0.1
    b_lin = jax.random.normal(keys[6], (VOCAB,), jnp.float32) * 0.1

    # Inputs: token ids for STEPS decode steps + initial hidden state.
    input_ids = jax.random.randint(keys[7], (STEPS, BATCH), 0, VOCAB, jnp.int32)
    h0 = jax.random.normal(keys[8], (NUM_LAYERS, BATCH, HIDDEN), jnp.float32)

    # One-time packing: pre-padded embedding table + fused gate-padded weights.
    emb_table_pad = jnp.pad(emb_table, ((0, 0), (0, GP - EMB_SIZE)))
    packed = build_fused_params(w_ih, w_hh, b_ih, b_hh, w_lin, b_lin)

    scores, h1 = rnn_decoder_decode(emb_table_pad, input_ids, h0, *packed)
    attn_weights = None  # attention == 'None' in this config
    jax.block_until_ready((scores, h1))

    # Correctness check against pure-JAX reference (per-step GRUCell math).
    scores_ref, h1_ref = decoder_ref(emb_table, input_ids, h0,
                                     w_ih, w_hh, b_ih, b_hh, w_lin, b_lin)
    assert jnp.allclose(scores, scores_ref, atol=1e-4, rtol=1e-4), (
        float(jnp.max(jnp.abs(scores - scores_ref))))
    assert jnp.allclose(h1, h1_ref, atol=1e-4, rtol=1e-4), (
        float(jnp.max(jnp.abs(h1 - h1_ref))))

    # TODO(synk): attention variants (bahdanau/luong/luong_gate), the global_emb
    # branch, and the mask scatter_ are not exercised under this config
    # ('None' attention, global_emb=False, mask=False).
    print("KERNEL_OK")
</pallas_src>

<mosaic_0001>
module attributes {stable_mosaic.version = 11 : i64} {
  func.func @rnn_decoder_kernel(%arg0: i32, %arg1: memref<64x128xf32, #tpu.memory_space<vmem>>, %arg2: memref<2x8x128xf32, #tpu.memory_space<vmem>>, %arg3: memref<128x384xf32, #tpu.memory_space<vmem>>, %arg4: memref<1x384xf32, #tpu.memory_space<vmem>>, %arg5: memref<128x384xf32, #tpu.memory_space<vmem>>, %arg6: memref<1x384xf32, #tpu.memory_space<vmem>>, %arg7: memref<128x512xf32, #tpu.memory_space<vmem>>, %arg8: memref<1x512xf32, #tpu.memory_space<vmem>>, %arg9: memref<128x128xf32, #tpu.memory_space<vmem>>, %arg10: memref<1x128xf32, #tpu.memory_space<vmem>>, %arg11: memref<64x128xf32, #tpu.memory_space<vmem>>, %arg12: memref<2x8x128xf32, #tpu.memory_space<vmem>>, %arg13: memref<64x384xf32, #tpu.memory_space<vmem>>, %arg14: memref<64x128xf32, #tpu.memory_space<vmem>>) attributes {dimension_semantics = [#tpu.dimension_semantics<arbitrary>], iteration_bounds = array<i64: 1>, scalar_prefetch = 0 : i64, scratch_operands = 2 : i64, tpu.core_type = #tpu.core_type<tc>, window_params = [{pipeline_mode = #tpu.pipeline_mode<synchronous>, transform_indices = @transform_0, window_bounds = array<i64: 64, 128>}, {pipeline_mode = #tpu.pipeline_mode<synchronous>, transform_indices = @transform_1, window_bounds = array<i64: 2, 8, 128>}, {pipeline_mode = #tpu.pipeline_mode<synchronous>, transform_indices = @transform_2, window_bounds = array<i64: 128, 384>}, {pipeline_mode = #tpu.pipeline_mode<synchronous>, transform_indices = @transform_3, window_bounds = array<i64: 1, 384>}, {pipeline_mode = #tpu.pipeline_mode<synchronous>, transform_indices = @transform_4, window_bounds = array<i64: 128, 384>}, {pipeline_mode = #tpu.pipeline_mode<synchronous>, transform_indices = @transform_5, window_bounds = array<i64: 1, 384>}, {pipeline_mode = #tpu.pipeline_mode<synchronous>, transform_indices = @transform_6, window_bounds = array<i64: 128, 512>}, {pipeline_mode = #tpu.pipeline_mode<synchronous>, transform_indices = @transform_7, window_bounds = array<i64: 1, 512>}, {pipeline_mode = #tpu.pipeline_mode<synchronous>, transform_indices = @transform_8, window_bounds = array<i64: 128, 128>}, {pipeline_mode = #tpu.pipeline_mode<synchronous>, transform_indices = @transform_9, window_bounds = array<i64: 1, 128>}, {pipeline_mode = #tpu.pipeline_mode<synchronous>, transform_indices = @transform_10, window_bounds = array<i64: 64, 128>}, {pipeline_mode = #tpu.pipeline_mode<synchronous>, transform_indices = @transform_11, window_bounds = array<i64: 2, 8, 128>}]} {
    %c0 = arith.constant 0 : index
    %c0_0 = arith.constant 0 : index
    %0 = vector.load %arg1[%c0, %c0_0] : memref<64x128xf32, #tpu.memory_space<vmem>>, vector<64x128xf32>
    %c0_1 = arith.constant 0 : index
    %c0_2 = arith.constant 0 : index
    %1 = vector.load %arg3[%c0_1, %c0_2] : memref<128x384xf32, #tpu.memory_space<vmem>>, vector<128x384xf32>
    %cst = arith.constant dense<0.000000e+00> : vector<64x384xf32>
    %2 = tpu.matmul %0, %1, %cst {dimension_numbers = #tpu.dot_dimension_numbers<[1], [0], [0], [1], [0, 0, 1, 1], [], []>} : vector<64x128xf32>, vector<128x384xf32>, vector<64x384xf32> -> vector<64x384xf32>
    %c0_3 = arith.constant 0 : index
    %c0_4 = arith.constant 0 : index
    %3 = vector.load %arg4[%c0_3, %c0_4] : memref<1x384xf32, #tpu.memory_space<vmem>>, vector<1x384xf32>
    %4 = vector.broadcast %3 : vector<1x384xf32> to vector<64x384xf32>
    %5 = arith.addf %2, %4 : vector<64x384xf32>
    %c0_5 = arith.constant 0 : index
    %c0_6 = arith.constant 0 : index
    %6 = vector.load %arg13[%c0_5, %c0_6] : memref<64x384xf32, #tpu.memory_space<vmem>>, vector<64x384xf32>
    tpu.vector_store %arg13[%c0_5, %c0_6], %5 {strides = array<i32>} : memref<64x384xf32, #tpu.memory_space<vmem>>, vector<64x384xf32>,
    %c0_7 = arith.constant 0 : index
    %c0_8 = arith.constant 0 : index
    %c0_9 = arith.constant 0 : index
    %7 = vector.load %arg2[%c0_7, %c0_8, %c0_9] : memref<2x8x128xf32, #tpu.memory_space<vmem>>, vector<1x8x128xf32>
    %8 = vector.shape_cast %7 : vector<1x8x128xf32> to vector<8x128xf32>
    %c1 = arith.constant 1 : index
    %c0_10 = arith.constant 0 : index
    %c0_11 = arith.constant 0 : index
    %9 = vector.load %arg2[%c1, %c0_10, %c0_11] : memref<2x8x128xf32, #tpu.memory_space<vmem>>, vector<1x8x128xf32>
    %10 = vector.shape_cast %9 : vector<1x8x128xf32> to vector<8x128xf32>
    %c0_i32 = arith.constant 0 : i32
    %c8_i32 = arith.constant 8 : i32
    %11 = arith.muli %c0_i32, %c8_i32 : i32
    %12 = tpu.assume_multiple %11, 8 : i32
    %c0_12 = arith.constant 0 : index
    %c0_13 = arith.constant 0 : index
    %13 = vector.load %arg5[%c0_12, %c0_13] : memref<128x384xf32, #tpu.memory_space<vmem>>, vector<128x384xf32>
    %cst_14 = arith.constant dense<0.000000e+00> : vector<8x384xf32>
    %14 = tpu.matmul %8, %13, %cst_14 {dimension_numbers = #tpu.dot_dimension_numbers<[1], [0], [0], [1], [0, 0, 1, 1], [], []>} : vector<8x128xf32>, vector<128x384xf32>, vector<8x384xf32> -> vector<8x384xf32>
    %c0_15 = arith.constant 0 : index
    %c0_16 = arith.constant 0 : index
    %15 = vector.load %arg6[%c0_15, %c0_16] : memref<1x384xf32, #tpu.memory_space<vmem>>, vector<1x384xf32>
    %16 = vector.broadcast %15 : vector<1x384xf32> to vector<8x384xf32>
    %17 = arith.addf %14, %16 : vector<8x384xf32>
    %18 = arith.index_cast %12 : i32 to index
    %c0_17 = arith.constant 0 : index
    %19 = vector.load %arg13[%18, %c0_17] : memref<64x384xf32, #tpu.memory_space<vmem>>, vector<8x384xf32>
    %20 = vector.extract_strided_slice %19 {offsets = [0, 0], sizes = [8, 128], strides = [1, 1]} : vector<8x384xf32> to vector<8x128xf32>
    %21 = vector.extract_strided_slice %17 {offsets = [0, 0], sizes = [8, 128], strides = [1, 1]} : vector<8x384xf32> to vector<8x128xf32>
    %22 = arith.addf %20, %21 : vector<8x128xf32>
    %23 = arith.negf %22 : vector<8x128xf32>
    %24 = math.exp %23 : vector<8x128xf32>
    %cst_18 = arith.constant 1.000000e+00 : f32
    %25 = vector.broadcast %cst_18 : f32 to vector<8x128xf32>
    %26 = arith.addf %25, %24 : vector<8x128xf32>
    %27 = arith.divf %25, %26 : vector<8x128xf32>
    %28 = vector.extract_strided_slice %19 {offsets = [0, 128], sizes = [8, 128], strides = [1, 1]} : vector<8x384xf32> to vector<8x128xf32>
    %29 = vector.extract_strided_slice %17 {offsets = [0, 128], sizes = [8, 128], strides = [1, 1]} : vector<8x384xf32> to vector<8x128xf32>
    %30 = arith.addf %28, %29 : vector<8x128xf32>
    %31 = arith.negf %30 : vector<8x128xf32>
    %32 = math.exp %31 : vector<8x128xf32>
    %cst_19 = arith.constant 1.000000e+00 : f32
    %33 = vector.broadcast %cst_19 : f32 to vector<8x128xf32>
    %34 = arith.addf %33, %32 : vector<8x128xf32>
    %35 = arith.divf %33, %34 : vector<8x128xf32>
    %36 = vector.extract_strided_slice %19 {offsets = [0, 256], sizes = [8, 128], strides = [1, 1]} : vector<8x384xf32> to vector<8x128xf32>
    %37 = vector.extract_strided_slice %17 {offsets = [0, 256], sizes = [8, 128], strides = [1, 1]} : vector<8x384xf32> to vector<8x128xf32>
    %38 = arith.mulf %27, %37 : vector<8x128xf32>
    %39 = arith.addf %36, %38 : vector<8x128xf32>
    %40 = math.tanh %39 : vector<8x128xf32>
    %41 = arith.subf %8, %40 : vector<8x128xf32>
    %42 = arith.mulf %35, %41 : vector<8x128xf32>
    %43 = arith.addf %40, %42 : vector<8x128xf32>
    %44 = arith.addf %43, %10 : vector<8x128xf32>
    %c0_20 = arith.constant 0 : index
    %c0_21 = arith.constant 0 : index
    %45 = vector.load %arg7[%c0_20, %c0_21] : memref<128x512xf32, #tpu.memory_space<vmem>>, vector<128x512xf32>
    %cst_22 = arith.constant dense<0.000000e+00> : vector<8x512xf32>
    %46 = tpu.matmul %44, %45, %cst_22 {dimension_numbers = #tpu.dot_dimension_numbers<[1], [0], [0], [1], [0, 0, 1, 1], [], []>} : vector<8x128xf32>, vector<128x512xf32>, vector<8x512xf32> -> vector<8x512xf32>
    %c0_23 = arith.constant 0 : index
    %c0_24 = arith.constant 0 : index
    %47 = vector.load %arg8[%c0_23, %c0_24] : memref<1x512xf32, #tpu.memory_space<vmem>>, vector<1x512xf32>
    %48 = vector.broadcast %47 : vector<1x512xf32> to vector<8x512xf32>
    %49 = arith.addf %46, %48 : vector<8x512xf32>
    %50 = vector.extract_strided_slice %49 {offsets = [0, 0], sizes = [8, 128], strides = [1, 1]} : vector<8x512xf32> to vector<8x128xf32>
    %51 = arith.negf %50 : vector<8x128xf32>
    %52 = math.exp %51 : vector<8x128xf32>
    %cst_25 = arith.constant 1.000000e+00 : f32
    %53 = vector.broadcast %cst_25 : f32 to vector<8x128xf32>
    %54 = arith.addf %53, %52 : vector<8x128xf32>
    %55 = arith.divf %53, %54 : vector<8x128xf32>
    %56 = vector.extract_strided_slice %49 {offsets = [0, 128], sizes = [8, 128], strides = [1, 1]} : vector<8x512xf32> to vector<8x128xf32>
    %57 = arith.negf %56 : vector<8x128xf32>
    %58 = math.exp %57 : vector<8x128xf32>
    %cst_26 = arith.constant 1.000000e+00 : f32
    %59 = vector.broadcast %cst_26 : f32 to vector<8x128xf32>
    %60 = arith.addf %59, %58 : vector<8x128xf32>
    %61 = arith.divf %59, %60 : vector<8x128xf32>
    %62 = vector.extract_strided_slice %49 {offsets = [0, 256], sizes = [8, 128], strides = [1, 1]} : vector<8x512xf32> to vector<8x128xf32>
    %63 = vector.extract_strided_slice %49 {offsets = [0, 384], sizes = [8, 128], strides = [1, 1]} : vector<8x512xf32> to vector<8x128xf32>
    %64 = arith.mulf %55, %63 : vector<8x128xf32>
    %65 = arith.addf %62, %64 : vector<8x128xf32>
    %66 = math.tanh %65 : vector<8x128xf32>
    %67 = arith.subf %10, %66 : vector<8x128xf32>
    %68 = arith.mulf %61, %67 : vector<8x128xf32>
    %69 = arith.addf %66, %68 : vector<8x128xf32>
    %70 = arith.index_cast %12 : i32 to index
    %c0_27 = arith.constant 0 : index
    %71 = vector.load %arg14[%70, %c0_27] : memref<64x128xf32, #tpu.memory_space<vmem>>, vector<8x128xf32>
    tpu.vector_store %arg14[%70, %c0_27], %69 {strides = array<i32>} : memref<64x128xf32, #tpu.memory_space<vmem>>, vector<8x128xf32>,
    %c1_i32 = arith.constant 1 : i32
    %c8_i32_28 = arith.constant 8 : i32
    %72 = arith.muli %c1_i32, %c8_i32_28 : i32
    %73 = tpu.assume_multiple %72, 8 : i32
    %c0_29 = arith.constant 0 : index
    %c0_30 = arith.constant 0 : index
    %74 = vector.load %arg5[%c0_29, %c0_30] : memref<128x384xf32, #tpu.memory_space<vmem>>, vector<128x384xf32>
    %cst_31 = arith.constant dense<0.000000e+00> : vector<8x384xf32>
    %75 = tpu.matmul %43, %74, %cst_31 {dimension_numbers = #tpu.dot_dimension_numbers<[1], [0], [0], [1], [0, 0, 1, 1], [], []>} : vector<8x128xf32>, vector<128x384xf32>, vector<8x384xf32> -> vector<8x384xf32>
    %c0_32 = arith.constant 0 : index
    %c0_33 = arith.constant 0 : index
    %76 = vector.load %arg6[%c0_32, %c0_33] : memref<1x384xf32, #tpu.memory_space<vmem>>, vector<1x384xf32>
    %77 = vector.broadcast %76 : vector<1x384xf32> to vector<8x384xf32>
    %78 = arith.addf %75, %77 : vector<8x384xf32>
    %79 = arith.index_cast %73 : i32 to index
    %c0_34 = arith.constant 0 : index
    %80 = vector.load %arg13[%79, %c0_34] : memref<64x384xf32, #tpu.memory_space<vmem>>, vector<8x384xf32>
    %81 = vector.extract_strided_slice %80 {offsets = [0, 0], sizes = [8, 128], strides = [1, 1]} : vector<8x384xf32> to vector<8x128xf32>
    %82 = vector.extract_strided_slice %78 {offsets = [0, 0], sizes = [8, 128], strides = [1, 1]} : vector<8x384xf32> to vector<8x128xf32>
    %83 = arith.addf %81, %82 : vector<8x128xf32>
    %84 = arith.negf %83 : vector<8x128xf32>
    %85 = math.exp %84 : vector<8x128xf32>
    %cst_35 = arith.constant 1.000000e+00 : f32
    %86 = vector.broadcast %cst_35 : f32 to vector<8x128xf32>
    %87 = arith.addf %86, %85 : vector<8x128xf32>
    %88 = arith.divf %86, %87 : vector<8x128xf32>
    %89 = vector.extract_strided_slice %80 {offsets = [0, 128], sizes = [8, 128], strides = [1, 1]} : vector<8x384xf32> to vector<8x128xf32>
    %90 = vector.extract_strided_slice %78 {offsets = [0, 128], sizes = [8, 128], strides = [1, 1]} : vector<8x384xf32> to vector<8x128xf32>
    %91 = arith.addf %89, %90 : vector<8x128xf32>
    %92 = arith.negf %91 : vector<8x128xf32>
    %93 = math.exp %92 : vector<8x128xf32>
    %cst_36 = arith.constant 1.000000e+00 : f32
    %94 = vector.broadcast %cst_36 : f32 to vector<8x128xf32>
    %95 = arith.addf %94, %93 : vector<8x128xf32>
    %96 = arith.divf %94, %95 : vector<8x128xf32>
    %97 = vector.extract_strided_slice %80 {offsets = [0, 256], sizes = [8, 128], strides = [1, 1]} : vector<8x384xf32> to vector<8x128xf32>
    %98 = vector.extract_strided_slice %78 {offsets = [0, 256], sizes = [8, 128], strides = [1, 1]} : vector<8x384xf32> to vector<8x128xf32>
    %99 = arith.mulf %88, %98 : vector<8x128xf32>
    %100 = arith.addf %97, %99 : vector<8x128xf32>
    %101 = math.tanh %100 : vector<8x128xf32>
    %102 = arith.subf %43, %101 : vector<8x128xf32>
    %103 = arith.mulf %96, %102 : vector<8x128xf32>
    %104 = arith.addf %101, %103 : vector<8x128xf32>
    %105 = arith.addf %104, %69 : vector<8x128xf32>
    %c0_37 = arith.constant 0 : index
    %c0_38 = arith.constant 0 : index
    %106 = vector.load %arg7[%c0_37, %c0_38] : memref<128x512xf32, #tpu.memory_space<vmem>>, vector<128x512xf32>
    %cst_39 = arith.constant dense<0.000000e+00> : vector<8x512xf32>
    %107 = tpu.matmul %105, %106, %cst_39 {dimension_numbers = #tpu.dot_dimension_numbers<[1], [0], [0], [1], [0, 0, 1, 1], [], []>} : vector<8x128xf32>, vector<128x512xf32>, vector<8x512xf32> -> vector<8x512xf32>
    %c0_40 = arith.constant 0 : index
    %c0_41 = arith.constant 0 : index
    %108 = vector.load %arg8[%c0_40, %c0_41] : memref<1x512xf32, #tpu.memory_space<vmem>>, vector<1x512xf32>
    %109 = vector.broadcast %108 : vector<1x512xf32> to vector<8x512xf32>
    %110 = arith.addf %107, %109 : vector<8x512xf32>
    %111 = vector.extract_strided_slice %110 {offsets = [0, 0], sizes = [8, 128], strides = [1, 1]} : vector<8x512xf32> to vector<8x128xf32>
    %112 = arith.negf %111 : vector<8x128xf32>
    %113 = math.exp %112 : vector<8x128xf32>
    %cst_42 = arith.constant 1.000000e+00 : f32
    %114 = vector.broadcast %cst_42 : f32 to vector<8x128xf32>
    %115 = arith.addf %114, %113 : vector<8x128xf32>
    %116 = arith.divf %114, %115 : vector<8x128xf32>
    %117 = vector.extract_strided_slice %110 {offsets = [0, 128], sizes = [8, 128], strides = [1, 1]} : vector<8x512xf32> to vector<8x128xf32>
    %118 = arith.negf %117 : vector<8x128xf32>
    %119 = math.exp %118 : vector<8x128xf32>
    %cst_43 = arith.constant 1.000000e+00 : f32
    %120 = vector.broadcast %cst_43 : f32 to vector<8x128xf32>
    %121 = arith.addf %120, %119 : vector<8x128xf32>
    %122 = arith.divf %120, %121 : vector<8x128xf32>
    %123 = vector.extract_strided_slice %110 {offsets = [0, 256], sizes = [8, 128], strides = [1, 1]} : vector<8x512xf32> to vector<8x128xf32>
    %124 = vector.extract_strided_slice %110 {offsets = [0, 384], sizes = [8, 128], strides = [1, 1]} : vector<8x512xf32> to vector<8x128xf32>
    %125 = arith.mulf %116, %124 : vector<8x128xf32>
    %126 = arith.addf %123, %125 : vector<8x128xf32>
    %127 = math.tanh %126 : vector<8x128xf32>
    %128 = arith.subf %69, %127 : vector<8x128xf32>
    %129 = arith.mulf %122, %128 : vector<8x128xf32>
    %130 = arith.addf %127, %129 : vector<8x128xf32>
    %131 = arith.index_cast %73 : i32 to index
    %c0_44 = arith.constant 0 : index
    %132 = vector.load %arg14[%131, %c0_44] : memref<64x128xf32, #tpu.memory_space<vmem>>, vector<8x128xf32>
    tpu.vector_store %arg14[%131, %c0_44], %130 {strides = array<i32>} : memref<64x128xf32, #tpu.memory_space<vmem>>, vector<8x128xf32>,
    %c2_i32 = arith.constant 2 : i32
    %c8_i32_45 = arith.constant 8 : i32
    %133 = arith.muli %c2_i32, %c8_i32_45 : i32
    %134 = tpu.assume_multiple %133, 8 : i32
    %c0_46 = arith.constant 0 : index
    %c0_47 = arith.constant 0 : index
    %135 = vector.load %arg5[%c0_46, %c0_47] : memref<128x384xf32, #tpu.memory_space<vmem>>, vector<128x384xf32>
    %cst_48 = arith.constant dense<0.000000e+00> : vector<8x384xf32>
    %136 = tpu.matmul %104, %135, %cst_48 {dimension_numbers = #tpu.dot_dimension_numbers<[1], [0], [0], [1], [0, 0, 1, 1], [], []>} : vector<8x128xf32>, vector<128x384xf32>, vector<8x384xf32> -> vector<8x384xf32>
    %c0_49 = arith.constant 0 : index
    %c0_50 = arith.constant 0 : index
    %137 = vector.load %arg6[%c0_49, %c0_50] : memref<1x384xf32, #tpu.memory_space<vmem>>, vector<1x384xf32>
    %138 = vector.broadcast %137 : vector<1x384xf32> to vector<8x384xf32>
    %139 = arith.addf %136, %138 : vector<8x384xf32>
    %140 = arith.index_cast %134 : i32 to index
    %c0_51 = arith.constant 0 : index
    %141 = vector.load %arg13[%140, %c0_51] : memref<64x384xf32, #tpu.memory_space<vmem>>, vector<8x384xf32>
    %142 = vector.extract_strided_slice %141 {offsets = [0, 0], sizes = [8, 128], strides = [1, 1]} : vector<8x384xf32> to vector<8x128xf32>
    %143 = vector.extract_strided_slice %139 {offsets = [0, 0], sizes = [8, 128], strides = [1, 1]} : vector<8x384xf32> to vector<8x128xf32>
    %144 = arith.addf %142, %143 : vector<8x128xf32>
    %145 = arith.negf %144 : vector<8x128xf32>
    %146 = math.exp %145 : vector<8x128xf32>
    %cst_52 = arith.constant 1.000000e+00 : f32
    %147 = vector.broadcast %cst_52 : f32 to vector<8x128xf32>
    %148 = arith.addf %147, %146 : vector<8x128xf32>
    %149 = arith.divf %147, %148 : vector<8x128xf32>
    %150 = vector.extract_strided_slice %141 {offsets = [0, 128], sizes = [8, 128], strides = [1, 1]} : vector<8x384xf32> to vector<8x128xf32>
    %151 = vector.extract_strided_slice %139 {offsets = [0, 128], sizes = [8, 128], strides = [1, 1]} : vector<8x384xf32> to vector<8x128xf32>
    %152 = arith.addf %150, %151 : vector<8x128xf32>
    %153 = arith.negf %152 : vector<8x128xf32>
    %154 = math.exp %153 : vector<8x128xf32>
    %cst_53 = arith.constant 1.000000e+00 : f32
    %155 = vector.broadcast %cst_53 : f32 to vector<8x128xf32>
    %156 = arith.addf %155, %154 : vector<8x128xf32>
    %157 = arith.divf %155, %156 : vector<8x128xf32>
    %158 = vector.extract_strided_slice %141 {offsets = [0, 256], sizes = [8, 128], strides = [1, 1]} : vector<8x384xf32> to vector<8x128xf32>
    %159 = vector.extract_strided_slice %139 {offsets = [0, 256], sizes = [8, 128], strides = [1, 1]} : vector<8x384xf32> to vector<8x128xf32>
    %160 = arith.mulf %149, %159 : vector<8x128xf32>
    %161 = arith.addf %158, %160 : vector<8x128xf32>
    %162 = math.tanh %161 : vector<8x128xf32>
    %163 = arith.subf %104, %162 : vector<8x128xf32>
    %164 = arith.mulf %157, %163 : vector<8x128xf32>
    %165 = arith.addf %162, %164 : vector<8x128xf32>
    %166 = arith.addf %165, %130 : vector<8x128xf32>
    %c0_54 = arith.constant 0 : index
    %c0_55 = arith.constant 0 : index
    %167 = vector.load %arg7[%c0_54, %c0_55] : memref<128x512xf32, #tpu.memory_space<vmem>>, vector<128x512xf32>
    %cst_56 = arith.constant dense<0.000000e+00> : vector<8x512xf32>
    %168 = tpu.matmul %166, %167, %cst_56 {dimension_numbers = #tpu.dot_dimension_numbers<[1], [0], [0], [1], [0, 0, 1, 1], [], []>} : vector<8x128xf32>, vector<128x512xf32>, vector<8x512xf32> -> vector<8x512xf32>
    %c0_57 = arith.constant 0 : index
    %c0_58 = arith.constant 0 : index
    %169 = vector.load %arg8[%c0_57, %c0_58] : memref<1x512xf32, #tpu.memory_space<vmem>>, vector<1x512xf32>
    %170 = vector.broadcast %169 : vector<1x512xf32> to vector<8x512xf32>
    %171 = arith.addf %168, %170 : vector<8x512xf32>
    %172 = vector.extract_strided_slice %171 {offsets = [0, 0], sizes = [8, 128], strides = [1, 1]} : vector<8x512xf32> to vector<8x128xf32>
    %173 = arith.negf %172 : vector<8x128xf32>
    %174 = math.exp %173 : vector<8x128xf32>
    %cst_59 = arith.constant 1.000000e+00 : f32
    %175 = vector.broadcast %cst_59 : f32 to vector<8x128xf32>
    %176 = arith.addf %175, %174 : vector<8x128xf32>
    %177 = arith.divf %175, %176 : vector<8x128xf32>
    %178 = vector.extract_strided_slice %171 {offsets = [0, 128], sizes = [8, 128], strides = [1, 1]} : vector<8x512xf32> to vector<8x128xf32>
    %179 = arith.negf %178 : vector<8x128xf32>
    %180 = math.exp %179 : vector<8x128xf32>
    %cst_60 = arith.constant 1.000000e+00 : f32
    %181 = vector.broadcast %cst_60 : f32 to vector<8x128xf32>
    %182 = arith.addf %181, %180 : vector<8x128xf32>
    %183 = arith.divf %181, %182 : vector<8x128xf32>
    %184 = vector.extract_strided_slice %171 {offsets = [0, 256], sizes = [8, 128], strides = [1, 1]} : vector<8x512xf32> to vector<8x128xf32>
    %185 = vector.extract_strided_slice %171 {offsets = [0, 384], sizes = [8, 128], strides = [1, 1]} : vector<8x512xf32> to vector<8x128xf32>
    %186 = arith.mulf %177, %185 : vector<8x128xf32>
    %187 = arith.addf %184, %186 : vector<8x128xf32>
    %188 = math.tanh %187 : vector<8x128xf32>
    %189 = arith.subf %130, %188 : vector<8x128xf32>
    %190 = arith.mulf %183, %189 : vector<8x128xf32>
    %191 = arith.addf %188, %190 : vector<8x128xf32>
    %192 = arith.index_cast %134 : i32 to index
    %c0_61 = arith.constant 0 : index
    %193 = vector.load %arg14[%192, %c0_61] : memref<64x128xf32, #tpu.memory_space<vmem>>, vector<8x128xf32>
    tpu.vector_store %arg14[%192, %c0_61], %191 {strides = array<i32>} : memref<64x128xf32, #tpu.memory_space<vmem>>, vector<8x128xf32>,
    %c3_i32 = arith.constant 3 : i32
    %c8_i32_62 = arith.constant 8 : i32
    %194 = arith.muli %c3_i32, %c8_i32_62 : i32
    %195 = tpu.assume_multiple %194, 8 : i32
    %c0_63 = arith.constant 0 : index
    %c0_64 = arith.constant 0 : index
    %196 = vector.load %arg5[%c0_63, %c0_64] : memref<128x384xf32, #tpu.memory_space<vmem>>, vector<128x384xf32>
    %cst_65 = arith.constant dense<0.000000e+00> : vector<8x384xf32>
    %197 = tpu.matmul %165, %196, %cst_65 {dimension_numbers = #tpu.dot_dimension_numbers<[1], [0], [0], [1], [0, 0, 1, 1], [], []>} : vector<8x128xf32>, vector<128x384xf32>, vector<8x384xf32> -> vector<8x384xf32>
    %c0_66 = arith.constant 0 : index
    %c0_67 = arith.constant 0 : index
    %198 = vector.load %arg6[%c0_66, %c0_67] : memref<1x384xf32, #tpu.memory_space<vmem>>, vector<1x384xf32>
    %199 = vector.broadcast %198 : vector<1x384xf32> to vector<8x384xf32>
    %200 = arith.addf %197, %199 : vector<8x384xf32>
    %201 = arith.index_cast %195 : i32 to index
    %c0_68 = arith.constant 0 : index
    %202 = vector.load %arg13[%201, %c0_68] : memref<64x384xf32, #tpu.memory_space<vmem>>, vector<8x384xf32>
    %203 = vector.extract_strided_slice %202 {offsets = [0, 0], sizes = [8, 128], strides = [1, 1]} : vector<8x384xf32> to vector<8x128xf32>
    %204 = vector.extract_strided_slice %200 {offsets = [0, 0], sizes = [8, 128], strides = [1, 1]} : vector<8x384xf32> to vector<8x128xf32>
    %205 = arith.addf %203, %204 : vector<8x128xf32>
    %206 = arith.negf %205 : vector<8x128xf32>
    %207 = math.exp %206 : vector<8x128xf32>
    %cst_69 = arith.constant 1.000000e+00 : f32
    %208 = vector.broadcast %cst_69 : f32 to vector<8x128xf32>
    %209 = arith.addf %208, %207 : vector<8x128xf32>
    %210 = arith.divf %208, %209 : vector<8x128xf32>
    %211 = vector.extract_strided_slice %202 {offsets = [0, 128], sizes = [8, 128], strides = [1, 1]} : vector<8x384xf32> to vector<8x128xf32>
    %212 = vector.extract_strided_slice %200 {offsets = [0, 128], sizes = [8, 128], strides = [1, 1]} : vector<8x384xf32> to vector<8x128xf32>
    %213 = arith.addf %211, %212 : vector<8x128xf32>
    %214 = arith.negf %213 : vector<8x128xf32>
    %215 = math.exp %214 : vector<8x128xf32>
    %cst_70 = arith.constant 1.000000e+00 : f32
    %216 = vector.broadcast %cst_70 : f32 to vector<8x128xf32>
    %217 = arith.addf %216, %215 : vector<8x128xf32>
    %218 = arith.divf %216, %217 : vector<8x128xf32>
    %219 = vector.extract_strided_slice %202 {offsets = [0, 256], sizes = [8, 128], strides = [1, 1]} : vector<8x384xf32> to vector<8x128xf32>
    %220 = vector.extract_strided_slice %200 {offsets = [0, 256], sizes = [8, 128], strides = [1, 1]} : vector<8x384xf32> to vector<8x128xf32>
    %221 = arith.mulf %210, %220 : vector<8x128xf32>
    %222 = arith.addf %219, %221 : vector<8x128xf32>
    %223 = math.tanh %222 : vector<8x128xf32>
    %224 = arith.subf %165, %223 : vector<8x128xf32>
    %225 = arith.mulf %218, %224 : vector<8x128xf32>
    %226 = arith.addf %223, %225 : vector<8x128xf32>
    %227 = arith.addf %226, %191 : vector<8x128xf32>
    %c0_71 = arith.constant 0 : index
    %c0_72 = arith.constant 0 : index
    %228 = vector.load %arg7[%c0_71, %c0_72] : memref<128x512xf32, #tpu.memory_space<vmem>>, vector<128x512xf32>
    %cst_73 = arith.constant dense<0.000000e+00> : vector<8x512xf32>
    %229 = tpu.matmul %227, %228, %cst_73 {dimension_numbers = #tpu.dot_dimension_numbers<[1], [0], [0], [1], [0, 0, 1, 1], [], []>} : vector<8x128xf32>, vector<128x512xf32>, vector<8x512xf32> -> vector<8x512xf32>
    %c0_74 = arith.constant 0 : index
    %c0_75 = arith.constant 0 : index
    %230 = vector.load %arg8[%c0_74, %c0_75] : memref<1x512xf32, #tpu.memory_space<vmem>>, vector<1x512xf32>
    %231 = vector.broadcast %230 : vector<1x512xf32> to vector<8x512xf32>
    %232 = arith.addf %229, %231 : vector<8x512xf32>
    %233 = vector.extract_strided_slice %232 {offsets = [0, 0], sizes = [8, 128], strides = [1, 1]} : vector<8x512xf32> to vector<8x128xf32>
    %234 = arith.negf %233 : vector<8x128xf32>
    %235 = math.exp %234 : vector<8x128xf32>
    %cst_76 = arith.constant 1.000000e+00 : f32
    %236 = vector.broadcast %cst_76 : f32 to vector<8x128xf32>
    %237 = arith.addf %236, %235 : vector<8x128xf32>
    %238 = arith.divf %236, %237 : vector<8x128xf32>
    %239 = vector.extract_strided_slice %232 {offsets = [0, 128], sizes = [8, 128], strides = [1, 1]} : vector<8x512xf32> to vector<8x128xf32>
    %240 = arith.negf %239 : vector<8x128xf32>
    %241 = math.exp %240 : vector<8x128xf32>
    %cst_77 = arith.constant 1.000000e+00 : f32
    %242 = vector.broadcast %cst_77 : f32 to vector<8x128xf32>
    %243 = arith.addf %242, %241 : vector<8x128xf32>
    %244 = arith.divf %242, %243 : vector<8x128xf32>
    %245 = vector.extract_strided_slice %232 {offsets = [0, 256], sizes = [8, 128], strides = [1, 1]} : vector<8x512xf32> to vector<8x128xf32>
    %246 = vector.extract_strided_slice %232 {offsets = [0, 384], sizes = [8, 128], strides = [1, 1]} : vector<8x512xf32> to vector<8x128xf32>
    %247 = arith.mulf %238, %246 : vector<8x128xf32>
    %248 = arith.addf %245, %247 : vector<8x128xf32>
    %249 = math.tanh %248 : vector<8x128xf32>
    %250 = arith.subf %191, %249 : vector<8x128xf32>
    %251 = arith.mulf %244, %250 : vector<8x128xf32>
    %252 = arith.addf %249, %251 : vector<8x128xf32>
    %253 = arith.index_cast %195 : i32 to index
    %c0_78 = arith.constant 0 : index
    %254 = vector.load %arg14[%253, %c0_78] : memref<64x128xf32, #tpu.memory_space<vmem>>, vector<8x128xf32>
    tpu.vector_store %arg14[%253, %c0_78], %252 {strides = array<i32>} : memref<64x128xf32, #tpu.memory_space<vmem>>, vector<8x128xf32>,
    %c4_i32 = arith.constant 4 : i32
    %c8_i32_79 = arith.constant 8 : i32
    %255 = arith.muli %c4_i32, %c8_i32_79 : i32
    %256 = tpu.assume_multiple %255, 8 : i32
    %c0_80 = arith.constant 0 : index
    %c0_81 = arith.constant 0 : index
    %257 = vector.load %arg5[%c0_80, %c0_81] : memref<128x384xf32, #tpu.memory_space<vmem>>, vector<128x384xf32>
    %cst_82 = arith.constant dense<0.000000e+00> : vector<8x384xf32>
    %258 = tpu.matmul %226, %257, %cst_82 {dimension_numbers = #tpu.dot_dimension_numbers<[1], [0], [0], [1], [0, 0, 1, 1], [], []>} : vector<8x128xf32>, vector<128x384xf32>, vector<8x384xf32> -> vector<8x384xf32>
    %c0_83 = arith.constant 0 : index
    %c0_84 = arith.constant 0 : index
    %259 = vector.load %arg6[%c0_83, %c0_84] : memref<1x384xf32, #tpu.memory_space<vmem>>, vector<1x384xf32>
    %260 = vector.broadcast %259 : vector<1x384xf32> to vector<8x384xf32>
    %261 = arith.addf %258, %260 : vector<8x384xf32>
    %262 = arith.index_cast %256 : i32 to index
    %c0_85 = arith.constant 0 : index
    %263 = vector.load %arg13[%262, %c0_85] : memref<64x384xf32, #tpu.memory_space<vmem>>, vector<8x384xf32>
    %264 = vector.extract_strided_slice %263 {offsets = [0, 0], sizes = [8, 128], strides = [1, 1]} : vector<8x384xf32> to vector<8x128xf32>
    %265 = vector.extract_strided_slice %261 {offsets = [0, 0], sizes = [8, 128], strides = [1, 1]} : vector<8x384xf32> to vector<8x128xf32>
    %266 = arith.addf %264, %265 : vector<8x128xf32>
    %267 = arith.negf %266 : vector<8x128xf32>
    %268 = math.exp %267 : vector<8x128xf32>
    %cst_86 = arith.constant 1.000000e+00 : f32
    %269 = vector.broadcast %cst_86 : f32 to vector<8x128xf32>
    %270 = arith.addf %269, %268 : vector<8x128xf32>
    %271 = arith.divf %269, %270 : vector<8x128xf32>
    %272 = vector.extract_strided_slice %263 {offsets = [0, 128], sizes = [8, 128], strides = [1, 1]} : vector<8x384xf32> to vector<8x128xf32>
    %273 = vector.extract_strided_slice %261 {offsets = [0, 128], sizes = [8, 128], strides = [1, 1]} : vector<8x384xf32> to vector<8x128xf32>
    %274 = arith.addf %272, %273 : vector<8x128xf32>
    %275 = arith.negf %274 : vector<8x128xf32>
    %276 = math.exp %275 : vector<8x128xf32>
    %cst_87 = arith.constant 1.000000e+00 : f32
    %277 = vector.broadcast %cst_87 : f32 to vector<8x128xf32>
    %278 = arith.addf %277, %276 : vector<8x128xf32>
    %279 = arith.divf %277, %278 : vector<8x128xf32>
    %280 = vector.extract_strided_slice %263 {offsets = [0, 256], sizes = [8, 128], strides = [1, 1]} : vector<8x384xf32> to vector<8x128xf32>
    %281 = vector.extract_strided_slice %261 {offsets = [0, 256], sizes = [8, 128], strides = [1, 1]} : vector<8x384xf32> to vector<8x128xf32>
    %282 = arith.mulf %271, %281 : vector<8x128xf32>
    %283 = arith.addf %280, %282 : vector<8x128xf32>
    %284 = math.tanh %283 : vector<8x128xf32>
    %285 = arith.subf %226, %284 : vector<8x128xf32>
    %286 = arith.mulf %279, %285 : vector<8x128xf32>
    %287 = arith.addf %284, %286 : vector<8x128xf32>
    %288 = arith.addf %287, %252 : vector<8x128xf32>
    %c0_88 = arith.constant 0 : index
    %c0_89 = arith.constant 0 : index
    %289 = vector.load %arg7[%c0_88, %c0_89] : memref<128x512xf32, #tpu.memory_space<vmem>>, vector<128x512xf32>
    %cst_90 = arith.constant dense<0.000000e+00> : vector<8x512xf32>
    %290 = tpu.matmul %288, %289, %cst_90 {dimension_numbers = #tpu.dot_dimension_numbers<[1], [0], [0], [1], [0, 0, 1, 1], [], []>} : vector<8x128xf32>, vector<128x512xf32>, vector<8x512xf32> -> vector<8x512xf32>
    %c0_91 = arith.constant 0 : index
    %c0_92 = arith.constant 0 : index
    %291 = vector.load %arg8[%c0_91, %c0_92] : memref<1x512xf32, #tpu.memory_space<vmem>>, vector<1x512xf32>
    %292 = vector.broadcast %291 : vector<1x512xf32> to vector<8x512xf32>
    %293 = arith.addf %290, %292 : vector<8x512xf32>
    %294 = vector.extract_strided_slice %293 {offsets = [0, 0], sizes = [8, 128], strides = [1, 1]} : vector<8x512xf32> to vector<8x128xf32>
    %295 = arith.negf %294 : vector<8x128xf32>
    %296 = math.exp %295 : vector<8x128xf32>
    %cst_93 = arith.constant 1.000000e+00 : f32
    %297 = vector.broadcast %cst_93 : f32 to vector<8x128xf32>
    %298 = arith.addf %297, %296 : vector<8x128xf32>
    %299 = arith.divf %297, %298 : vector<8x128xf32>
    %300 = vector.extract_strided_slice %293 {offsets = [0, 128], sizes = [8, 128], strides = [1, 1]} : vector<8x512xf32> to vector<8x128xf32>
    %301 = arith.negf %300 : vector<8x128xf32>
    %302 = math.exp %301 : vector<8x128xf32>
    %cst_94 = arith.constant 1.000000e+00 : f32
    %303 = vector.broadcast %cst_94 : f32 to vector<8x128xf32>
    %304 = arith.addf %303, %302 : vector<8x128xf32>
    %305 = arith.divf %303, %304 : vector<8x128xf32>
    %306 = vector.extract_strided_slice %293 {offsets = [0, 256], sizes = [8, 128], strides = [1, 1]} : vector<8x512xf32> to vector<8x128xf32>
    %307 = vector.extract_strided_slice %293 {offsets = [0, 384], sizes = [8, 128], strides = [1, 1]} : vector<8x512xf32> to vector<8x128xf32>
    %308 = arith.mulf %299, %307 : vector<8x128xf32>
    %309 = arith.addf %306, %308 : vector<8x128xf32>
    %310 = math.tanh %309 : vector<8x128xf32>
    %311 = arith.subf %252, %310 : vector<8x128xf32>
    %312 = arith.mulf %305, %311 : vector<8x128xf32>
    %313 = arith.addf %310, %312 : vector<8x128xf32>
    %314 = arith.index_cast %256 : i32 to index
    %c0_95 = arith.constant 0 : index
    %315 = vector.load %arg14[%314, %c0_95] : memref<64x128xf32, #tpu.memory_space<vmem>>, vector<8x128xf32>
    tpu.vector_store %arg14[%314, %c0_95], %313 {strides = array<i32>} : memref<64x128xf32, #tpu.memory_space<vmem>>, vector<8x128xf32>,
    %c5_i32 = arith.constant 5 : i32
    %c8_i32_96 = arith.constant 8 : i32
    %316 = arith.muli %c5_i32, %c8_i32_96 : i32
    %317 = tpu.assume_multiple %316, 8 : i32
    %c0_97 = arith.constant 0 : index
    %c0_98 = arith.constant 0 : index
    %318 = vector.load %arg5[%c0_97, %c0_98] : memref<128x384xf32, #tpu.memory_space<vmem>>, vector<128x384xf32>
    %cst_99 = arith.constant dense<0.000000e+00> : vector<8x384xf32>
    %319 = tpu.matmul %287, %318, %cst_99 {dimension_numbers = #tpu.dot_dimension_numbers<[1], [0], [0], [1], [0, 0, 1, 1], [], []>} : vector<8x128xf32>, vector<128x384xf32>, vector<8x384xf32> -> vector<8x384xf32>
    %c0_100 = arith.constant 0 : index
    %c0_101 = arith.constant 0 : index
    %320 = vector.load %arg6[%c0_100, %c0_101] : memref<1x384xf32, #tpu.memory_space<vmem>>, vector<1x384xf32>
    %321 = vector.broadcast %320 : vector<1x384xf32> to vector<8x384xf32>
    %322 = arith.addf %319, %321 : vector<8x384xf32>
    %323 = arith.index_cast %317 : i32 to index
    %c0_102 = arith.constant 0 : index
    %324 = vector.load %arg13[%323, %c0_102] : memref<64x384xf32, #tpu.memory_space<vmem>>, vector<8x384xf32>
    %325 = vector.extract_strided_slice %324 {offsets = [0, 0], sizes = [8, 128], strides = [1, 1]} : vector<8x384xf32> to vector<8x128xf32>
    %326 = vector.extract_strided_slice %322 {offsets = [0, 0], sizes = [8, 128], strides = [1, 1]} : vector<8x384xf32> to vector<8x128xf32>
    %327 = arith.addf %325, %326 : vector<8x128xf32>
    %328 = arith.negf %327 : vector<8x128xf32>
    %329 = math.exp %328 : vector<8x128xf32>
    %cst_103 = arith.constant 1.000000e+00 : f32
    %330 = vector.broadcast %cst_103 : f32 to vector<8x128xf32>
    %331 = arith.addf %330, %329 : vector<8x128xf32>
    %332 = arith.divf %330, %331 : vector<8x128xf32>
    %333 = vector.extract_strided_slice %324 {offsets = [0, 128], sizes = [8, 128], strides = [1, 1]} : vector<8x384xf32> to vector<8x128xf32>
    %334 = vector.extract_strided_slice %322 {offsets = [0, 128], sizes = [8, 128], strides = [1, 1]} : vector<8x384xf32> to vector<8x128xf32>
    %335 = arith.addf %333, %334 : vector<8x128xf32>
    %336 = arith.negf %335 : vector<8x128xf32>
    %337 = math.exp %336 : vector<8x128xf32>
    %cst_104 = arith.constant 1.000000e+00 : f32
    %338 = vector.broadcast %cst_104 : f32 to vector<8x128xf32>
    %339 = arith.addf %338, %337 : vector<8x128xf32>
    %340 = arith.divf %338, %339 : vector<8x128xf32>
    %341 = vector.extract_strided_slice %324 {offsets = [0, 256], sizes = [8, 128], strides = [1, 1]} : vector<8x384xf32> to vector<8x128xf32>
    %342 = vector.extract_strided_slice %322 {offsets = [0, 256], sizes = [8, 128], strides = [1, 1]} : vector<8x384xf32> to vector<8x128xf32>
    %343 = arith.mulf %332, %342 : vector<8x128xf32>
    %344 = arith.addf %341, %343 : vector<8x128xf32>
    %345 = math.tanh %344 : vector<8x128xf32>
    %346 = arith.subf %287, %345 : vector<8x128xf32>
    %347 = arith.mulf %340, %346 : vector<8x128xf32>
    %348 = arith.addf %345, %347 : vector<8x128xf32>
    %349 = arith.addf %348, %313 : vector<8x128xf32>
    %c0_105 = arith.constant 0 : index
    %c0_106 = arith.constant 0 : index
    %350 = vector.load %arg7[%c0_105, %c0_106] : memref<128x512xf32, #tpu.memory_space<vmem>>, vector<128x512xf32>
    %cst_107 = arith.constant dense<0.000000e+00> : vector<8x512xf32>
    %351 = tpu.matmul %349, %350, %cst_107 {dimension_numbers = #tpu.dot_dimension_numbers<[1], [0], [0], [1], [0, 0, 1, 1], [], []>} : vector<8x128xf32>, vector<128x512xf32>, vector<8x512xf32> -> vector<8x512xf32>
    %c0_108 = arith.constant 0 : index
    %c0_109 = arith.constant 0 : index
    %352 = vector.load %arg8[%c0_108, %c0_109] : memref<1x512xf32, #tpu.memory_space<vmem>>, vector<1x512xf32>
    %353 = vector.broadcast %352 : vector<1x512xf32> to vector<8x512xf32>
    %354 = arith.addf %351, %353 : vector<8x512xf32>
    %355 = vector.extract_strided_slice %354 {offsets = [0, 0], sizes = [8, 128], strides = [1, 1]} : vector<8x512xf32> to vector<8x128xf32>
    %356 = arith.negf %355 : vector<8x128xf32>
    %357 = math.exp %356 : vector<8x128xf32>
    %cst_110 = arith.constant 1.000000e+00 : f32
    %358 = vector.broadcast %cst_110 : f32 to vector<8x128xf32>
    %359 = arith.addf %358, %357 : vector<8x128xf32>
    %360 = arith.divf %358, %359 : vector<8x128xf32>
    %361 = vector.extract_strided_slice %354 {offsets = [0, 128], sizes = [8, 128], strides = [1, 1]} : vector<8x512xf32> to vector<8x128xf32>
    %362 = arith.negf %361 : vector<8x128xf32>
    %363 = math.exp %362 : vector<8x128xf32>
    %cst_111 = arith.constant 1.000000e+00 : f32
    %364 = vector.broadcast %cst_111 : f32 to vector<8x128xf32>
    %365 = arith.addf %364, %363 : vector<8x128xf32>
    %366 = arith.divf %364, %365 : vector<8x128xf32>
    %367 = vector.extract_strided_slice %354 {offsets = [0, 256], sizes = [8, 128], strides = [1, 1]} : vector<8x512xf32> to vector<8x128xf32>
    %368 = vector.extract_strided_slice %354 {offsets = [0, 384], sizes = [8, 128], strides = [1, 1]} : vector<8x512xf32> to vector<8x128xf32>
    %369 = arith.mulf %360, %368 : vector<8x128xf32>
    %370 = arith.addf %367, %369 : vector<8x128xf32>
    %371 = math.tanh %370 : vector<8x128xf32>
    %372 = arith.subf %313, %371 : vector<8x128xf32>
    %373 = arith.mulf %366, %372 : vector<8x128xf32>
    %374 = arith.addf %371, %373 : vector<8x128xf32>
    %375 = arith.index_cast %317 : i32 to index
    %c0_112 = arith.constant 0 : index
    %376 = vector.load %arg14[%375, %c0_112] : memref<64x128xf32, #tpu.memory_space<vmem>>, vector<8x128xf32>
    tpu.vector_store %arg14[%375, %c0_112], %374 {strides = array<i32>} : memref<64x128xf32, #tpu.memory_space<vmem>>, vector<8x128xf32>,
    %c6_i32 = arith.constant 6 : i32
    %c8_i32_113 = arith.constant 8 : i32
    %377 = arith.muli %c6_i32, %c8_i32_113 : i32
    %378 = tpu.assume_multiple %377, 8 : i32
    %c0_114 = arith.constant 0 : index
    %c0_115 = arith.constant 0 : index
    %379 = vector.load %arg5[%c0_114, %c0_115] : memref<128x384xf32, #tpu.memory_space<vmem>>, vector<128x384xf32>
    %cst_116 = arith.constant dense<0.000000e+00> : vector<8x384xf32>
    %380 = tpu.matmul %348, %379, %cst_116 {dimension_numbers = #tpu.dot_dimension_numbers<[1], [0], [0], [1], [0, 0, 1, 1], [], []>} : vector<8x128xf32>, vector<128x384xf32>, vector<8x384xf32> -> vector<8x384xf32>
    %c0_117 = arith.constant 0 : index
    %c0_118 = arith.constant 0 : index
    %381 = vector.load %arg6[%c0_117, %c0_118] : memref<1x384xf32, #tpu.memory_space<vmem>>, vector<1x384xf32>
    %382 = vector.broadcast %381 : vector<1x384xf32> to vector<8x384xf32>
    %383 = arith.addf %380, %382 : vector<8x384xf32>
    %384 = arith.index_cast %378 : i32 to index
    %c0_119 = arith.constant 0 : index
    %385 = vector.load %arg13[%384, %c0_119] : memref<64x384xf32, #tpu.memory_space<vmem>>, vector<8x384xf32>
    %386 = vector.extract_strided_slice %385 {offsets = [0, 0], sizes = [8, 128], strides = [1, 1]} : vector<8x384xf32> to vector<8x128xf32>
    %387 = vector.extract_strided_slice %383 {offsets = [0, 0], sizes = [8, 128], strides = [1, 1]} : vector<8x384xf32> to vector<8x128xf32>
    %388 = arith.addf %386, %387 : vector<8x128xf32>
    %389 = arith.negf %388 : vector<8x128xf32>
    %390 = math.exp %389 : vector<8x128xf32>
    %cst_120 = arith.constant 1.000000e+00 : f32
    %391 = vector.broadcast %cst_120 : f32 to vector<8x128xf32>
    %392 = arith.addf %391, %390 : vector<8x128xf32>
    %393 = arith.divf %391, %392 : vector<8x128xf32>
    %394 = vector.extract_strided_slice %385 {offsets = [0, 128], sizes = [8, 128], strides = [1, 1]} : vector<8x384xf32> to vector<8x128xf32>
    %395 = vector.extract_strided_slice %383 {offsets = [0, 128], sizes = [8, 128], strides = [1, 1]} : vector<8x384xf32> to vector<8x128xf32>
    %396 = arith.addf %394, %395 : vector<8x128xf32>
    %397 = arith.negf %396 : vector<8x128xf32>
    %398 = math.exp %397 : vector<8x128xf32>
    %cst_121 = arith.constant 1.000000e+00 : f32
    %399 = vector.broadcast %cst_121 : f32 to vector<8x128xf32>
    %400 = arith.addf %399, %398 : vector<8x128xf32>
    %401 = arith.divf %399, %400 : vector<8x128xf32>
    %402 = vector.extract_strided_slice %385 {offsets = [0, 256], sizes = [8, 128], strides = [1, 1]} : vector<8x384xf32> to vector<8x128xf32>
    %403 = vector.extract_strided_slice %383 {offsets = [0, 256], sizes = [8, 128], strides = [1, 1]} : vector<8x384xf32> to vector<8x128xf32>
    %404 = arith.mulf %393, %403 : vector<8x128xf32>
    %405 = arith.addf %402, %404 : vector<8x128xf32>
    %406 = math.tanh %405 : vector<8x128xf32>
    %407 = arith.subf %348, %406 : vector<8x128xf32>
    %408 = arith.mulf %401, %407 : vector<8x128xf32>
    %409 = arith.addf %406, %408 : vector<8x128xf32>
    %410 = arith.addf %409, %374 : vector<8x128xf32>
    %c0_122 = arith.constant 0 : index
    %c0_123 = arith.constant 0 : index
    %411 = vector.load %arg7[%c0_122, %c0_123] : memref<128x512xf32, #tpu.memory_space<vmem>>, vector<128x512xf32>
    %cst_124 = arith.constant dense<0.000000e+00> : vector<8x512xf32>
    %412 = tpu.matmul %410, %411, %cst_124 {dimension_numbers = #tpu.dot_dimension_numbers<[1], [0], [0], [1], [0, 0, 1, 1], [], []>} : vector<8x128xf32>, vector<128x512xf32>, vector<8x512xf32> -> vector<8x512xf32>
    %c0_125 = arith.constant 0 : index
    %c0_126 = arith.constant 0 : index
    %413 = vector.load %arg8[%c0_125, %c0_126] : memref<1x512xf32, #tpu.memory_space<vmem>>, vector<1x512xf32>
    %414 = vector.broadcast %413 : vector<1x512xf32> to vector<8x512xf32>
    %415 = arith.addf %412, %414 : vector<8x512xf32>
    %416 = vector.extract_strided_slice %415 {offsets = [0, 0], sizes = [8, 128], strides = [1, 1]} : vector<8x512xf32> to vector<8x128xf32>
    %417 = arith.negf %416 : vector<8x128xf32>
    %418 = math.exp %417 : vector<8x128xf32>
    %cst_127 = arith.constant 1.000000e+00 : f32
    %419 = vector.broadcast %cst_127 : f32 to vector<8x128xf32>
    %420 = arith.addf %419, %418 : vector<8x128xf32>
    %421 = arith.divf %419, %420 : vector<8x128xf32>
    %422 = vector.extract_strided_slice %415 {offsets = [0, 128], sizes = [8, 128], strides = [1, 1]} : vector<8x512xf32> to vector<8x128xf32>
    %423 = arith.negf %422 : vector<8x128xf32>
    %424 = math.exp %423 : vector<8x128xf32>
    %cst_128 = arith.constant 1.000000e+00 : f32
    %425 = vector.broadcast %cst_128 : f32 to vector<8x128xf32>
    %426 = arith.addf %425, %424 : vector<8x128xf32>
    %427 = arith.divf %425, %426 : vector<8x128xf32>
    %428 = vector.extract_strided_slice %415 {offsets = [0, 256], sizes = [8, 128], strides = [1, 1]} : vector<8x512xf32> to vector<8x128xf32>
    %429 = vector.extract_strided_slice %415 {offsets = [0, 384], sizes = [8, 128], strides = [1, 1]} : vector<8x512xf32> to vector<8x128xf32>
    %430 = arith.mulf %421, %429 : vector<8x128xf32>
    %431 = arith.addf %428, %430 : vector<8x128xf32>
    %432 = math.tanh %431 : vector<8x128xf32>
    %433 = arith.subf %374, %432 : vector<8x128xf32>
    %434 = arith.mulf %427, %433 : vector<8x128xf32>
    %435 = arith.addf %432, %434 : vector<8x128xf32>
    %436 = arith.index_cast %378 : i32 to index
    %c0_129 = arith.constant 0 : index
    %437 = vector.load %arg14[%436, %c0_129] : memref<64x128xf32, #tpu.memory_space<vmem>>, vector<8x128xf32>
    tpu.vector_store %arg14[%436, %c0_129], %435 {strides = array<i32>} : memref<64x128xf32, #tpu.memory_space<vmem>>, vector<8x128xf32>,
    %c7_i32 = arith.constant 7 : i32
    %c8_i32_130 = arith.constant 8 : i32
    %438 = arith.muli %c7_i32, %c8_i32_130 : i32
    %439 = tpu.assume_multiple %438, 8 : i32
    %c0_131 = arith.constant 0 : index
    %c0_132 = arith.constant 0 : index
    %440 = vector.load %arg5[%c0_131, %c0_132] : memref<128x384xf32, #tpu.memory_space<vmem>>, vector<128x384xf32>
    %cst_133 = arith.constant dense<0.000000e+00> : vector<8x384xf32>
    %441 = tpu.matmul %409, %440, %cst_133 {dimension_numbers = #tpu.dot_dimension_numbers<[1], [0], [0], [1], [0, 0, 1, 1], [], []>} : vector<8x128xf32>, vector<128x384xf32>, vector<8x384xf32> -> vector<8x384xf32>
    %c0_134 = arith.constant 0 : index
    %c0_135 = arith.constant 0 : index
    %442 = vector.load %arg6[%c0_134, %c0_135] : memref<1x384xf32, #tpu.memory_space<vmem>>, vector<1x384xf32>
    %443 = vector.broadcast %442 : vector<1x384xf32> to vector<8x384xf32>
    %444 = arith.addf %441, %443 : vector<8x384xf32>
    %445 = arith.index_cast %439 : i32 to index
    %c0_136 = arith.constant 0 : index
    %446 = vector.load %arg13[%445, %c0_136] : memref<64x384xf32, #tpu.memory_space<vmem>>, vector<8x384xf32>
    %447 = vector.extract_strided_slice %446 {offsets = [0, 0], sizes = [8, 128], strides = [1, 1]} : vector<8x384xf32> to vector<8x128xf32>
    %448 = vector.extract_strided_slice %444 {offsets = [0, 0], sizes = [8, 128], strides = [1, 1]} : vector<8x384xf32> to vector<8x128xf32>
    %449 = arith.addf %447, %448 : vector<8x128xf32>
    %450 = arith.negf %449 : vector<8x128xf32>
    %451 = math.exp %450 : vector<8x128xf32>
    %cst_137 = arith.constant 1.000000e+00 : f32
    %452 = vector.broadcast %cst_137 : f32 to vector<8x128xf32>
    %453 = arith.addf %452, %451 : vector<8x128xf32>
    %454 = arith.divf %452, %453 : vector<8x128xf32>
    %455 = vector.extract_strided_slice %446 {offsets = [0, 128], sizes = [8, 128], strides = [1, 1]} : vector<8x384xf32> to vector<8x128xf32>
    %456 = vector.extract_strided_slice %444 {offsets = [0, 128], sizes = [8, 128], strides = [1, 1]} : vector<8x384xf32> to vector<8x128xf32>
    %457 = arith.addf %455, %456 : vector<8x128xf32>
    %458 = arith.negf %457 : vector<8x128xf32>
    %459 = math.exp %458 : vector<8x128xf32>
    %cst_138 = arith.constant 1.000000e+00 : f32
    %460 = vector.broadcast %cst_138 : f32 to vector<8x128xf32>
    %461 = arith.addf %460, %459 : vector<8x128xf32>
    %462 = arith.divf %460, %461 : vector<8x128xf32>
    %463 = vector.extract_strided_slice %446 {offsets = [0, 256], sizes = [8, 128], strides = [1, 1]} : vector<8x384xf32> to vector<8x128xf32>
    %464 = vector.extract_strided_slice %444 {offsets = [0, 256], sizes = [8, 128], strides = [1, 1]} : vector<8x384xf32> to vector<8x128xf32>
    %465 = arith.mulf %454, %464 : vector<8x128xf32>
    %466 = arith.addf %463, %465 : vector<8x128xf32>
    %467 = math.tanh %466 : vector<8x128xf32>
    %468 = arith.subf %409, %467 : vector<8x128xf32>
    %469 = arith.mulf %462, %468 : vector<8x128xf32>
    %470 = arith.addf %467, %469 : vector<8x128xf32>
    %471 = arith.addf %470, %435 : vector<8x128xf32>
    %c0_139 = arith.constant 0 : index
    %c0_140 = arith.constant 0 : index
    %472 = vector.load %arg7[%c0_139, %c0_140] : memref<128x512xf32, #tpu.memory_space<vmem>>, vector<128x512xf32>
    %cst_141 = arith.constant dense<0.000000e+00> : vector<8x512xf32>
    %473 = tpu.matmul %471, %472, %cst_141 {dimension_numbers = #tpu.dot_dimension_numbers<[1], [0], [0], [1], [0, 0, 1, 1], [], []>} : vector<8x128xf32>, vector<128x512xf32>, vector<8x512xf32> -> vector<8x512xf32>
    %c0_142 = arith.constant 0 : index
    %c0_143 = arith.constant 0 : index
    %474 = vector.load %arg8[%c0_142, %c0_143] : memref<1x512xf32, #tpu.memory_space<vmem>>, vector<1x512xf32>
    %475 = vector.broadcast %474 : vector<1x512xf32> to vector<8x512xf32>
    %476 = arith.addf %473, %475 : vector<8x512xf32>
    %477 = vector.extract_strided_slice %476 {offsets = [0, 0], sizes = [8, 128], strides = [1, 1]} : vector<8x512xf32> to vector<8x128xf32>
    %478 = arith.negf %477 : vector<8x128xf32>
    %479 = math.exp %478 : vector<8x128xf32>
    %cst_144 = arith.constant 1.000000e+00 : f32
    %480 = vector.broadcast %cst_144 : f32 to vector<8x128xf32>
    %481 = arith.addf %480, %479 : vector<8x128xf32>
    %482 = arith.divf %480, %481 : vector<8x128xf32>
    %483 = vector.extract_strided_slice %476 {offsets = [0, 128], sizes = [8, 128], strides = [1, 1]} : vector<8x512xf32> to vector<8x128xf32>
    %484 = arith.negf %483 : vector<8x128xf32>
    %485 = math.exp %484 : vector<8x128xf32>
    %cst_145 = arith.constant 1.000000e+00 : f32
    %486 = vector.broadcast %cst_145 : f32 to vector<8x128xf32>
    %487 = arith.addf %486, %485 : vector<8x128xf32>
    %488 = arith.divf %486, %487 : vector<8x128xf32>
    %489 = vector.extract_strided_slice %476 {offsets = [0, 256], sizes = [8, 128], strides = [1, 1]} : vector<8x512xf32> to vector<8x128xf32>
    %490 = vector.extract_strided_slice %476 {offsets = [0, 384], sizes = [8, 128], strides = [1, 1]} : vector<8x512xf32> to vector<8x128xf32>
    %491 = arith.mulf %482, %490 : vector<8x128xf32>
    %492 = arith.addf %489, %491 : vector<8x128xf32>
    %493 = math.tanh %492 : vector<8x128xf32>
    %494 = arith.subf %435, %493 : vector<8x128xf32>
    %495 = arith.mulf %488, %494 : vector<8x128xf32>
    %496 = arith.addf %493, %495 : vector<8x128xf32>
    %497 = arith.index_cast %439 : i32 to index
    %c0_146 = arith.constant 0 : index
    %498 = vector.load %arg14[%497, %c0_146] : memref<64x128xf32, #tpu.memory_space<vmem>>, vector<8x128xf32>
    tpu.vector_store %arg14[%497, %c0_146], %496 {strides = array<i32>} : memref<64x128xf32, #tpu.memory_space<vmem>>, vector<8x128xf32>,
    %c8_i32_147 = arith.constant 8 : i32
    %c0_148 = arith.constant 0 : index
    %c0_149 = arith.constant 0 : index
    %c0_150 = arith.constant 0 : index
    %499 = vector.load %arg12[%c0_148, %c0_149, %c0_150] : memref<2x8x128xf32, #tpu.memory_space<vmem>>, vector<1x8x128xf32>
    %500 = vector.shape_cast %499 : vector<1x8x128xf32> to vector<8x128xf32>
    %501 = vector.shape_cast %470 : vector<8x128xf32> to vector<1x8x128xf32>
    tpu.vector_store %arg12[%c0_148, %c0_149, %c0_150], %501 {strides = array<i32>} : memref<2x8x128xf32, #tpu.memory_space<vmem>>, vector<1x8x128xf32>,
    %c1_151 = arith.constant 1 : index
    %c0_152 = arith.constant 0 : index
    %c0_153 = arith.constant 0 : index
    %502 = vector.load %arg12[%c1_151, %c0_152, %c0_153] : memref<2x8x128xf32, #tpu.memory_space<vmem>>, vector<1x8x128xf32>
    %503 = vector.shape_cast %502 : vector<1x8x128xf32> to vector<8x128xf32>
    %504 = vector.shape_cast %496 : vector<8x128xf32> to vector<1x8x128xf32>
    tpu.vector_store %arg12[%c1_151, %c0_152, %c0_153], %504 {strides = array<i32>} : memref<2x8x128xf32, #tpu.memory_space<vmem>>, vector<1x8x128xf32>,
    %c0_154 = arith.constant 0 : index
    %c0_155 = arith.constant 0 : index
    %505 = vector.load %arg14[%c0_154, %c0_155] : memref<64x128xf32, #tpu.memory_space<vmem>>, vector<64x128xf32>
    %c0_156 = arith.constant 0 : index
    %c0_157 = arith.constant 0 : index
    %506 = vector.load %arg9[%c0_156, %c0_157] : memref<128x128xf32, #tpu.memory_space<vmem>>, vector<128x128xf32>
    %cst_158 = arith.constant dense<0.000000e+00> : vector<64x128xf32>
    %507 = tpu.matmul %505, %506, %cst_158 {dimension_numbers = #tpu.dot_dimension_numbers<[1], [0], [0], [1], [0, 0, 1, 1], [], []>} : vector<64x128xf32>, vector<128x128xf32>, vector<64x128xf32> -> vector<64x128xf32>
    %c0_159 = arith.constant 0 : index
    %c0_160 = arith.constant 0 : index
    %508 = vector.load %arg10[%c0_159, %c0_160] : memref<1x128xf32, #tpu.memory_space<vmem>>, vector<1x128xf32>
    %509 = vector.broadcast %508 : vector<1x128xf32> to vector<64x128xf32>
    %510 = arith.addf %507, %509 : vector<64x128xf32>
    %c0_161 = arith.constant 0 : index
    %c0_162 = arith.constant 0 : index
    %511 = vector.load %arg11[%c0_161, %c0_162] : memref<64x128xf32, #tpu.memory_space<vmem>>, vector<64x128xf32>
    tpu.vector_store %arg11[%c0_161, %c0_162], %510 {strides = array<i32>} : memref<64x128xf32, #tpu.memory_space<vmem>>, vector<64x128xf32>,
    return
  }
  func.func @transform_0(%arg0: i32) -> (i32, i32) {
    %c0_i32 = arith.constant 0 : i32
    %c0_i32_0 = arith.constant 0 : i32
    %c0_i32_1 = arith.constant 0 : i32
    return %c0_i32, %c0_i32_0 : i32, i32
  }
  func.func @transform_1(%arg0: i32) -> (i32, i32, i32) {
    %c0_i32 = arith.constant 0 : i32
    %c0_i32_0 = arith.constant 0 : i32
    %c0_i32_1 = arith.constant 0 : i32
    %c0_i32_2 = arith.constant 0 : i32
    return %c0_i32, %c0_i32_0, %c0_i32_1 : i32, i32, i32
  }
  func.func @transform_2(%arg0: i32) -> (i32, i32) {
    %c0_i32 = arith.constant 0 : i32
    %c0_i32_0 = arith.constant 0 : i32
    %c0_i32_1 = arith.constant 0 : i32
    return %c0_i32, %c0_i32_0 : i32, i32
  }
  func.func @transform_3(%arg0: i32) -> (i32, i32) {
    %c0_i32 = arith.constant 0 : i32
    %c0_i32_0 = arith.constant 0 : i32
    %c0_i32_1 = arith.constant 0 : i32
    return %c0_i32, %c0_i32_0 : i32, i32
  }
  func.func @transform_4(%arg0: i32) -> (i32, i32) {
    %c0_i32 = arith.constant 0 : i32
    %c0_i32_0 = arith.constant 0 : i32
    %c0_i32_1 = arith.constant 0 : i32
    return %c0_i32, %c0_i32_0 : i32, i32
  }
  func.func @transform_5(%arg0: i32) -> (i32, i32) {
    %c0_i32 = arith.constant 0 : i32
    %c0_i32_0 = arith.constant 0 : i32
    %c0_i32_1 = arith.constant 0 : i32
    return %c0_i32, %c0_i32_0 : i32, i32
  }
  func.func @transform_6(%arg0: i32) -> (i32, i32) {
    %c0_i32 = arith.constant 0 : i32
    %c0_i32_0 = arith.constant 0 : i32
    %c0_i32_1 = arith.constant 0 : i32
    return %c0_i32, %c0_i32_0 : i32, i32
  }
  func.func @transform_7(%arg0: i32) -> (i32, i32) {
    %c0_i32 = arith.constant 0 : i32
    %c0_i32_0 = arith.constant 0 : i32
    %c0_i32_1 = arith.constant 0 : i32
    return %c0_i32, %c0_i32_0 : i32, i32
  }
  func.func @transform_8(%arg0: i32) -> (i32, i32) {
    %c0_i32 = arith.constant 0 : i32
    %c0_i32_0 = arith.constant 0 : i32
    %c0_i32_1 = arith.constant 0 : i32
    return %c0_i32, %c0_i32_0 : i32, i32
  }
  func.func @transform_9(%arg0: i32) -> (i32, i32) {
    %c0_i32 = arith.constant 0 : i32
    %c0_i32_0 = arith.constant 0 : i32
    %c0_i32_1 = arith.constant 0 : i32
    return %c0_i32, %c0_i32_0 : i32, i32
  }
  func.func @transform_10(%arg0: i32) -> (i32, i32) {
    %c0_i32 = arith.constant 0 : i32
    %c0_i32_0 = arith.constant 0 : i32
    %c0_i32_1 = arith.constant 0 : i32
    return %c0_i32, %c0_i32_0 : i32, i32
  }
  func.func @transform_11(%arg0: i32) -> (i32, i32, i32) {
    %c0_i32 = arith.constant 0 : i32
    %c0_i32_0 = arith.constant 0 : i32
    %c0_i32_1 = arith.constant 0 : i32
    %c0_i32_2 = arith.constant 0 : i32
    return %c0_i32, %c0_i32_0, %c0_i32_1 : i32, i32, i32
  }
}

</mosaic_0001>

<llo_original>
// kernel: rnn_decoder_decode.1
$region0: #{rnn_decoder_decode.1}
  #allocation0 [shape = 'u32[]', space=smem, size = 0x4, offset = 0x4, fixed_abs, tag = 'smem constant byte address 0x4 - core index']
  #allocation1 [shape = 'u32[72,128]{1,0:T(1,128)}', space=vmem, size = 0x9000, scoped, tag = 'internal scratch']
  #allocation2 [shape = 'f32[64,384]{1,0:T(8,128)}', space=vmem, size = 0x18000, scoped, tag = 'scratch operand']
  #allocation3 [shape = 'f32[64,128]{1,0:T(8,128)}', space=vmem, size = 0x8000, scoped, tag = 'scratch operand']
  %s0 = inlined_call_operand.vmem [shape: f32[64,128], index: 0, kind: input, shape index: {}]
  %s1 = inlined_call_operand.vmem [shape: f32[2,8,128], index: 1, kind: input, shape index: {}, may-alias: {1,11}]
  %s2 = inlined_call_operand.hbm [shape: f32[128,384], index: 2, kind: input, shape index: {}]
  %s3 = inlined_call_operand.vmem [shape: f32[1,384], index: 3, kind: input, shape index: {}]
  %s4 = inlined_call_operand.hbm [shape: f32[128,384], index: 4, kind: input, shape index: {}]
  %s5 = inlined_call_operand.vmem [shape: f32[1,384], index: 5, kind: input, shape index: {}]
  %s6 = inlined_call_operand.vmem [shape: f32[128,512], index: 6, kind: input, shape index: {}]
  %s7 = inlined_call_operand.vmem [shape: f32[1,512], index: 7, kind: input, shape index: {}]
  %s8 = inlined_call_operand.vmem [shape: f32[128,128], index: 8, kind: input, shape index: {}]
  %s9 = inlined_call_operand.vmem [shape: f32[1,128], index: 9, kind: input, shape index: {}]
  %s10 = inlined_call_operand.hbm [shape: f32[64,128], index: 10, kind: output, shape index: {0}]
  %s11 = inlined_call_operand.vmem [shape: f32[2,8,128], index: 11, kind: output, shape index: {1}, may-alias: {1,11}]
  %12 = xla_tuple %s10, %s11
  %s13 = sld [smem:[#allocation0]]
  $region66: #{rnn_decoder_decode.1} parent=0
    _
  %s15 = ssub.s32 1, %s13
  %s16 = scalar_select 0, %s15, %s13
  $region1: #{rnn_decoder_decode.1} parent=0
    #allocation4 [shape = 'u8[196608]{0}', space=vmem, size = 0x30000, scoped, tag = 'input window, operand 2, single buffered']
    #allocation5 [shape = 's32[1]{0}', space=sflag, size = 0x4, scoped, tag = 'scoped memory for rnn_decoder_decode.1']
    #allocation6 [shape = 's32[1]{0}', space=sflag, size = 0x4, scoped, tag = 'scoped memory for rnn_decoder_decode.1']
    #allocation7 [shape = 'u8[196608]{0}', space=vmem, size = 0x30000, scoped, tag = 'input window, operand 4, single buffered']
    #allocation8 [shape = 's32[1]{0}', space=sflag, size = 0x4, scoped, tag = 'scoped memory for rnn_decoder_decode.1']
    #allocation9 [shape = 'u8[32768]{0}', space=vmem, size = 0x8000, scoped, tag = 'output window, operand 0, single buffered']
    %17 = vsyncpa [#allocation5], 0
    %18 = vsyncpa [#allocation8], 0
    %19 = vsyncpa [#allocation6], 0
    // Predicated region
    $region2: #{rnn_decoder_decode.1} parent=1 // pred_check
      _
    $region3: #{rnn_decoder_decode.1} parent=1 // pred_check_branch
      %21 = sbr.rel (0) target = $region5
    $region4: #{rnn_decoder_decode.1} parent=1 // pred_region
      _
    $region5: #{rnn_decoder_decode.1} parent=1 // pred_fallthru
      _
    // Predicated region
    $region6: #{rnn_decoder_decode.1} parent=1 // pred_check
      _
    $region7: #{rnn_decoder_decode.1} parent=1 // pred_check_branch
      %23 = sbr.rel (0) target = $region9
    $region8: #{rnn_decoder_decode.1} parent=1 // pred_region
      _
    $region9: #{rnn_decoder_decode.1} parent=1 // pred_fallthru
      _
    // Predicated region
    $region10: #{rnn_decoder_decode.1} parent=1 // pred_check
      _
    $region11: #{rnn_decoder_decode.1} parent=1 // pred_check_branch
      %25 = sbr.rel (0) target = $region13
    $region12: #{rnn_decoder_decode.1} parent=1 // pred_region
      %27 = vsyncadd [#allocation5], 0
      %s28 = sshll.u32 %s2, 4
      %s29 = int_to_ptr.hbm [resolvable:$true] %s28
      %s30 = sshll.u32 [#allocation4], 4
      %s31 = int_to_ptr.vmem [resolvable:$true] %s30
      %36 = dma.hbm_to_vmem [thread:$0]  %s29, 6144, %s31, [#allocation5], 384, 384, 24
    $region13: #{rnn_decoder_decode.1} parent=1 // pred_fallthru
      _
    // Predicated region
    $region14: #{rnn_decoder_decode.1} parent=1 // pred_check
      _
    $region15: #{rnn_decoder_decode.1} parent=1 // pred_check_branch
      %38 = sbr.rel (0) target = $region17
    $region16: #{rnn_decoder_decode.1} parent=1 // pred_region
      _
    $region17: #{rnn_decoder_decode.1} parent=1 // pred_fallthru
      _
    // Predicated region
    $region18: #{rnn_decoder_decode.1} parent=1 // pred_check
      _
    $region19: #{rnn_decoder_decode.1} parent=1 // pred_check_branch
      %40 = sbr.rel (0) target = $region21
    $region20: #{rnn_decoder_decode.1} parent=1 // pred_region
      %42 = vsyncadd [#allocation8], 0
      %s43 = sshll.u32 %s4, 4
      %s44 = int_to_ptr.hbm [resolvable:$true] %s43
      %s45 = sshll.u32 [#allocation7], 4
      %s46 = int_to_ptr.vmem [resolvable:$true] %s45
      %51 = dma.hbm_to_vmem [thread:$0]  %s44, 6144, %s46, [#allocation8], 384, 384, 24
    $region21: #{rnn_decoder_decode.1} parent=1 // pred_fallthru
      _
    // Predicated region
    $region22: #{rnn_decoder_decode.1} parent=1 // pred_check
      _
    $region23: #{rnn_decoder_decode.1} parent=1 // pred_check_branch
      %53 = sbr.rel (0) target = $region25
    $region24: #{rnn_decoder_decode.1} parent=1 // pred_region
      _
    $region25: #{rnn_decoder_decode.1} parent=1 // pred_fallthru
      _
    // Predicated region
    $region26: #{rnn_decoder_decode.1} parent=1 // pred_check
      _
    $region27: #{rnn_decoder_decode.1} parent=1 // pred_check_branch
      %55 = sbr.rel (0) target = $region29
    $region28: #{rnn_decoder_decode.1} parent=1 // pred_region
      _
    $region29: #{rnn_decoder_decode.1} parent=1 // pred_fallthru
      _
    // Predicated region
    $region30: #{rnn_decoder_decode.1} parent=1 // pred_check
      _
    $region31: #{rnn_decoder_decode.1} parent=1 // pred_check_branch
      %57 = sbr.rel (0) target = $region33
    $region32: #{rnn_decoder_decode.1} parent=1 // pred_region
      _
    $region33: #{rnn_decoder_decode.1} parent=1 // pred_fallthru
      _
    // Predicated region
    $region34: #{rnn_decoder_decode.1} parent=1 // pred_check
      _
    $region35: #{rnn_decoder_decode.1} parent=1 // pred_check_branch
      %59 = sbr.rel (0) target = $region37
    $region36: #{rnn_decoder_decode.1} parent=1 // pred_region
      _
    $region37: #{rnn_decoder_decode.1} parent=1 // pred_fallthru
      _
    // Predicated region
    $region38: #{rnn_decoder_decode.1} parent=1 // pred_check
      _
    $region39: #{rnn_decoder_decode.1} parent=1 // pred_check_branch
      %61 = sbr.rel (0) target = $region41
    $region40: #{rnn_decoder_decode.1} parent=1 // pred_region
      _
    $region41: #{rnn_decoder_decode.1} parent=1 // pred_fallthru
      _
    // Predicated region
    $region42: #{rnn_decoder_decode.1} parent=1 // pred_check
      _
    $region43: #{rnn_decoder_decode.1} parent=1 // pred_check_branch
      %63 = sbr.rel (0) target = $region45
    $region44: #{rnn_decoder_decode.1} parent=1 // pred_region
      %65 = dma.done [#allocation5], 6144
    $region45: #{rnn_decoder_decode.1} parent=1 // pred_fallthru
      _
    // Predicated region
    $region46: #{rnn_decoder_decode.1} parent=1 // pred_check
      _
    $region47: #{rnn_decoder_decode.1} parent=1 // pred_check_branch
      %67 = sbr.rel (0) target = $region49
    $region48: #{rnn_decoder_decode.1} parent=1 // pred_region
      %69 = dma.done [#allocation8], 6144
    $region49: #{rnn_decoder_decode.1} parent=1 // pred_fallthru
      _
    %v70 = vld [vmem:[%s0] sm:$0xff]
    %v71 = vld [vmem:[%s0 + $0x8] sm:$0xff]
    %v72 = vld [vmem:[%s0 + $0x10] sm:$0xff]
    %v73 = vld [vmem:[%s0 + $0x18] sm:$0xff]
    %v74 = vld [vmem:[%s0 + $0x20] sm:$0xff]
    %v75 = vld [vmem:[%s0 + $0x28] sm:$0xff]
    %v76 = vld [vmem:[%s0 + $0x30] sm:$0xff]
    %v77 = vld [vmem:[%s0 + $0x38] sm:$0xff]
    %v78 = vld [vmem:[#allocation4] sm:$0xff]
    %v79 = vld [vmem:[#allocation4 + $0x8] sm:$0xff]
    %v80 = vld [vmem:[#allocation4 + $0x10] sm:$0xff]
    %v81 = vld [vmem:[#allocation4 + $0x18] sm:$0xff]
    %v82 = vld [vmem:[#allocation4 + $0x20] sm:$0xff]
    %v83 = vld [vmem:[#allocation4 + $0x28] sm:$0xff]
    %v84 = vld [vmem:[#allocation4 + $0x30] sm:$0xff]
    %v85 = vld [vmem:[#allocation4 + $0x38] sm:$0xff]
    %v86 = vld [vmem:[#allocation4 + $0x40] sm:$0xff]
    %v87 = vld [vmem:[#allocation4 + $0x48] sm:$0xff]
    %v88 = vld [vmem:[#allocation4 + $0x50] sm:$0xff]
    %v89 = vld [vmem:[#allocation4 + $0x58] sm:$0xff]
    %v90 = vld [vmem:[#allocation4 + $0x60] sm:$0xff]
    %v91 = vld [vmem:[#allocation4 + $0x68] sm:$0xff]
    %v92 = vld [vmem:[#allocation4 + $0x70] sm:$0xff]
    %v93 = vld [vmem:[#allocation4 + $0x78] sm:$0xff]
    %v94 = vld [vmem:[#allocation4 + $0x80] sm:$0xff]
    %v95 = vld [vmem:[#allocation4 + $0x88] sm:$0xff]
    %v96 = vld [vmem:[#allocation4 + $0x90] sm:$0xff]
    %v97 = vld [vmem:[#allocation4 + $0x98] sm:$0xff]
    %v98 = vld [vmem:[#allocation4 + $0xa0] sm:$0xff]
    %v99 = vld [vmem:[#allocation4 + $0xa8] sm:$0xff]
    %v100 = vld [vmem:[#allocation4 + $0xb0] sm:$0xff]
    %v101 = vld [vmem:[#allocation4 + $0xb8] sm:$0xff]
    %v102 = vld [vmem:[#allocation4 + $0xc0] sm:$0xff]
    %v103 = vld [vmem:[#allocation4 + $0xc8] sm:$0xff]
    %v104 = vld [vmem:[#allocation4 + $0xd0] sm:$0xff]
    %v105 = vld [vmem:[#allocation4 + $0xd8] sm:$0xff]
    %v106 = vld [vmem:[#allocation4 + $0xe0] sm:$0xff]
    %v107 = vld [vmem:[#allocation4 + $0xe8] sm:$0xff]
    %v108 = vld [vmem:[#allocation4 + $0xf0] sm:$0xff]
    %v109 = vld [vmem:[#allocation4 + $0xf8] sm:$0xff]
    %v110 = vld [vmem:[#allocation4 + $0x100] sm:$0xff]
    %v111 = vld [vmem:[#allocation4 + $0x108] sm:$0xff]
    %v112 = vld [vmem:[#allocation4 + $0x110] sm:$0xff]
    %v113 = vld [vmem:[#allocation4 + $0x118] sm:$0xff]
    %v114 = vld [vmem:[#allocation4 + $0x120] sm:$0xff]
    %v115 = vld [vmem:[#allocation4 + $0x128] sm:$0xff]
    %v116 = vld [vmem:[#allocation4 + $0x130] sm:$0xff]
    %v117 = vld [vmem:[#allocation4 + $0x138] sm:$0xff]
    %v118 = vld [vmem:[#allocation4 + $0x140] sm:$0xff]
    %v119 = vld [vmem:[#allocation4 + $0x148] sm:$0xff]
    %v120 = vld [vmem:[#allocation4 + $0x150] sm:$0xff]
    %v121 = vld [vmem:[#allocation4 + $0x158] sm:$0xff]
    %v122 = vld [vmem:[#allocation4 + $0x160] sm:$0xff]
    %v123 = vld [vmem:[#allocation4 + $0x168] sm:$0xff]
    %v124 = vld [vmem:[#allocation4 + $0x170] sm:$0xff]
    %v125 = vld [vmem:[#allocation4 + $0x178] sm:$0xff]
    %v126 = vld [vmem:[%s3] sm:$0x7]
    %v128 = vperm.slane %v126, 0
    %v129 = vperm.slane %v126, 1
    %v130 = vperm.slane %v126, 2
    %134 = vmatpush.msra.mxu0 %v123
    %135 = vmatpush.msra.mxu0 %v120
    %136 = vmatpush.msra.mxu0 %v117
    %137 = vmatpush.msra.mxu0 %v114
    %138 = vmatpush.msra.mxu0 %v111
    %139 = vmatpush.msra.mxu0 %v108
    %140 = vmatpush.msra.mxu0 %v105
    %141 = vmatpush.msra.mxu0 %v102
    %142 = vmatpush.msra.mxu0 %v99
    %143 = vmatpush.msra.mxu0 %v96
    %144 = vmatpush.msra.mxu0 %v93
    %145 = vmatpush.msra.mxu0 %v90
    %146 = vmatpush.msra.mxu0 %v87
    %147 = vmatpush.msra.mxu0 %v84
    %148 = vmatpush.msra.mxu0 %v81
    %149 = vmatpush.msra.mxu0 %v78
    %150 = vmatmul.f32.gmra.mxu0 %v70
    %v151 = vpop.f32.mrf.mxu0
    %v152 = vadd.f32 %v128, %v151
    %153 = vmatmul.f32.gmra.mxu0 %v71
    %v154 = vpop.f32.mrf.mxu0
    %v155 = vadd.f32 %v128, %v154
    %156 = vmatmul.f32.gmra.mxu0 %v72
    %v157 = vpop.f32.mrf.mxu0
    %v158 = vadd.f32 %v128, %v157
    %159 = vmatmul.f32.gmra.mxu0 %v73
    %v160 = vpop.f32.mrf.mxu0
    %v161 = vadd.f32 %v128, %v160
    %162 = vmatmul.f32.gmra.mxu0 %v74
    %v163 = vpop.f32.mrf.mxu0
    %v164 = vadd.f32 %v128, %v163
    %165 = vmatmul.f32.gmra.mxu0 %v75
    %v166 = vpop.f32.mrf.mxu0
    %v167 = vadd.f32 %v128, %v166
    %168 = vmatmul.f32.gmra.mxu0 %v76
    %v169 = vpop.f32.mrf.mxu0
    %v170 = vadd.f32 %v128, %v169
    %171 = vmatmul.f32.gmra.mxu0 %v77
    %v172 = vpop.f32.mrf.mxu0
    %v173 = vadd.f32 %v128, %v172
    %174 = vdwg.mxu0
    %175 = vmatpush.msra.mxu0 %v124
    %176 = vmatpush.msra.mxu0 %v121
    %177 = vmatpush.msra.mxu0 %v118
    %178 = vmatpush.msra.mxu0 %v115
    %179 = vmatpush.msra.mxu0 %v112
    %180 = vmatpush.msra.mxu0 %v109
    %181 = vmatpush.msra.mxu0 %v106
    %182 = vmatpush.msra.mxu0 %v103
    %183 = vmatpush.msra.mxu0 %v100
    %184 = vmatpush.msra.mxu0 %v97
    %185 = vmatpush.msra.mxu0 %v94
    %186 = vmatpush.msra.mxu0 %v91
    %187 = vmatpush.msra.mxu0 %v88
    %188 = vmatpush.msra.mxu0 %v85
    %189 = vmatpush.msra.mxu0 %v82
    %190 = vmatpush.msra.mxu0 %v79
    %191 = vmatmul.f32.gmra.mxu0 %v70
    %v192 = vpop.f32.mrf.mxu0
    %v193 = vadd.f32 %v129, %v192
    %194 = vmatmul.f32.gmra.mxu0 %v71
    %v195 = vpop.f32.mrf.mxu0
    %v196 = vadd.f32 %v129, %v195
    %197 = vmatmul.f32.gmra.mxu0 %v72
    %v198 = vpop.f32.mrf.mxu0
    %v199 = vadd.f32 %v129, %v198
    %200 = vmatmul.f32.gmra.mxu0 %v73
    %v201 = vpop.f32.mrf.mxu0
    %v202 = vadd.f32 %v129, %v201
    %203 = vmatmul.f32.gmra.mxu0 %v74
    %v204 = vpop.f32.mrf.mxu0
    %v205 = vadd.f32 %v129, %v204
    %206 = vmatmul.f32.gmra.mxu0 %v75
    %v207 = vpop.f32.mrf.mxu0
    %v208 = vadd.f32 %v129, %v207
    %209 = vmatmul.f32.gmra.mxu0 %v76
    %v210 = vpop.f32.mrf.mxu0
    %v211 = vadd.f32 %v129, %v210
    %212 = vmatmul.f32.gmra.mxu0 %v77
    %v213 = vpop.f32.mrf.mxu0
    %v214 = vadd.f32 %v129, %v213
    %215 = vdwg.mxu0
    %216 = vmatpush.msra.mxu0 %v125
    %217 = vmatpush.msra.mxu0 %v122
    %218 = vmatpush.msra.mxu0 %v119
    %219 = vmatpush.msra.mxu0 %v116
    %220 = vmatpush.msra.mxu0 %v113
    %221 = vmatpush.msra.mxu0 %v110
    %222 = vmatpush.msra.mxu0 %v107
    %223 = vmatpush.msra.mxu0 %v104
    %224 = vmatpush.msra.mxu0 %v101
    %225 = vmatpush.msra.mxu0 %v98
    %226 = vmatpush.msra.mxu0 %v95
    %227 = vmatpush.msra.mxu0 %v92
    %228 = vmatpush.msra.mxu0 %v89
    %229 = vmatpush.msra.mxu0 %v86
    %230 = vmatpush.msra.mxu0 %v83
    %231 = vmatpush.msra.mxu0 %v80
    %232 = vmatmul.f32.gmra.mxu0 %v70
    %v233 = vpop.f32.mrf.mxu0
    %v234 = vadd.f32 %v130, %v233
    %235 = vmatmul.f32.gmra.mxu0 %v71
    %v236 = vpop.f32.mrf.mxu0
    %v237 = vadd.f32 %v130, %v236
    %238 = vmatmul.f32.gmra.mxu0 %v72
    %v239 = vpop.f32.mrf.mxu0
    %v240 = vadd.f32 %v130, %v239
    %241 = vmatmul.f32.gmra.mxu0 %v73
    %v242 = vpop.f32.mrf.mxu0
    %v243 = vadd.f32 %v130, %v242
    %244 = vmatmul.f32.gmra.mxu0 %v74
    %v245 = vpop.f32.mrf.mxu0
    %v246 = vadd.f32 %v130, %v245
    %247 = vmatmul.f32.gmra.mxu0 %v75
    %v248 = vpop.f32.mrf.mxu0
    %v249 = vadd.f32 %v130, %v248
    %250 = vmatmul.f32.gmra.mxu0 %v76
    %v251 = vpop.f32.mrf.mxu0
    %v252 = vadd.f32 %v130, %v251
    %253 = vmatmul.f32.gmra.mxu0 %v77
    %v254 = vpop.f32.mrf.mxu0
    %v255 = vadd.f32 %v130, %v254
    %256 = vdwg.mxu0
    %257 = vst [vmem:[#allocation2] sm:$0xff] %v152
    %258 = vst [vmem:[#allocation2 + $0x8] sm:$0xff] %v193
    %259 = vst [vmem:[#allocation2 + $0x10] sm:$0xff] %v234
    %260 = vst [vmem:[#allocation2 + $0x18] sm:$0xff] %v155
    %261 = vst [vmem:[#allocation2 + $0x20] sm:$0xff] %v196
    %262 = vst [vmem:[#allocation2 + $0x28] sm:$0xff] %v237
    %263 = vst [vmem:[#allocation2 + $0x30] sm:$0xff] %v158
    %264 = vst [vmem:[#allocation2 + $0x38] sm:$0xff] %v199
    %265 = vst [vmem:[#allocation2 + $0x40] sm:$0xff] %v240
    %266 = vst [vmem:[#allocation2 + $0x48] sm:$0xff] %v161
    %267 = vst [vmem:[#allocation2 + $0x50] sm:$0xff] %v202
    %268 = vst [vmem:[#allocation2 + $0x58] sm:$0xff] %v243
    %269 = vst [vmem:[#allocation2 + $0x60] sm:$0xff] %v164
    %270 = vst [vmem:[#allocation2 + $0x68] sm:$0xff] %v205
    %271 = vst [vmem:[#allocation2 + $0x70] sm:$0xff] %v246
    %272 = vst [vmem:[#allocation2 + $0x78] sm:$0xff] %v167
    %273 = vst [vmem:[#allocation2 + $0x80] sm:$0xff] %v208
    %274 = vst [vmem:[#allocation2 + $0x88] sm:$0xff] %v249
    %275 = vst [vmem:[#allocation2 + $0x90] sm:$0xff] %v170
    %276 = vst [vmem:[#allocation2 + $0x98] sm:$0xff] %v211
    %277 = vst [vmem:[#allocation2 + $0xa0] sm:$0xff] %v252
    %278 = vst [vmem:[#allocation2 + $0xa8] sm:$0xff] %v173
    %279 = vst [vmem:[#allocation2 + $0xb0] sm:$0xff] %v214
    %280 = vst [vmem:[#allocation2 + $0xb8] sm:$0xff] %v255
    %v281 = vld [vmem:[%s1] sm:$0xff]
    %s282 = scalar_lea.vmem %s1, 8
    %v283 = vld [vmem:[%s282] sm:$0xff]
    %v284 = vld [vmem:[#allocation7] sm:$0xff]
    %v285 = vld [vmem:[#allocation7 + $0x8] sm:$0xff]
    %v286 = vld [vmem:[#allocation7 + $0x10] sm:$0xff]
    %v287 = vld [vmem:[#allocation7 + $0x18] sm:$0xff]
    %v288 = vld [vmem:[#allocation7 + $0x20] sm:$0xff]
    %v289 = vld [vmem:[#allocation7 + $0x28] sm:$0xff]
    %v290 = vld [vmem:[#allocation7 + $0x30] sm:$0xff]
    %v291 = vld [vmem:[#allocation7 + $0x38] sm:$0xff]
    %v292 = vld [vmem:[#allocation7 + $0x40] sm:$0xff]
    %v293 = vld [vmem:[#allocation7 + $0x48] sm:$0xff]
    %v294 = vld [vmem:[#allocation7 + $0x50] sm:$0xff]
    %v295 = vld [vmem:[#allocation7 + $0x58] sm:$0xff]
    %v296 = vld [vmem:[#allocation7 + $0x60] sm:$0xff]
    %v297 = vld [vmem:[#allocation7 + $0x68] sm:$0xff]
    %v298 = vld [vmem:[#allocation7 + $0x70] sm:$0xff]
    %v299 = vld [vmem:[#allocation7 + $0x78] sm:$0xff]
    %v300 = vld [vmem:[#allocation7 + $0x80] sm:$0xff]
    %v301 = vld [vmem:[#allocation7 + $0x88] sm:$0xff]
    %v302 = vld [vmem:[#allocation7 + $0x90] sm:$0xff]
    %v303 = vld [vmem:[#allocation7 + $0x98] sm:$0xff]
    %v304 = vld [vmem:[#allocation7 + $0xa0] sm:$0xff]
    %v305 = vld [vmem:[#allocation7 + $0xa8] sm:$0xff]
    %v306 = vld [vmem:[#allocation7 + $0xb0] sm:$0xff]
    %v307 = vld [vmem:[#allocation7 + $0xb8] sm:$0xff]
    %v308 = vld [vmem:[#allocation7 + $0xc0] sm:$0xff]
    %v309 = vld [vmem:[#allocation7 + $0xc8] sm:$0xff]
    %v310 = vld [vmem:[#allocation7 + $0xd0] sm:$0xff]
    %v311 = vld [vmem:[#allocation7 + $0xd8] sm:$0xff]
    %v312 = vld [vmem:[#allocation7 + $0xe0] sm:$0xff]
    %v313 = vld [vmem:[#allocation7 + $0xe8] sm:$0xff]
    %v314 = vld [vmem:[#allocation7 + $0xf0] sm:$0xff]
    %v315 = vld [vmem:[#allocation7 + $0xf8] sm:$0xff]
    %v316 = vld [vmem:[#allocation7 + $0x100] sm:$0xff]
    %v317 = vld [vmem:[#allocation7 + $0x108] sm:$0xff]
    %v318 = vld [vmem:[#allocation7 + $0x110] sm:$0xff]
    %v319 = vld [vmem:[#allocation7 + $0x118] sm:$0xff]
    %v320 = vld [vmem:[#allocation7 + $0x120] sm:$0xff]
    %v321 = vld [vmem:[#allocation7 + $0x128] sm:$0xff]
    %v322 = vld [vmem:[#allocation7 + $0x130] sm:$0xff]
    %v323 = vld [vmem:[#allocation7 + $0x138] sm:$0xff]
    %v324 = vld [vmem:[#allocation7 + $0x140] sm:$0xff]
    %v325 = vld [vmem:[#allocation7 + $0x148] sm:$0xff]
    %v326 = vld [vmem:[#allocation7 + $0x150] sm:$0xff]
    %v327 = vld [vmem:[#allocation7 + $0x158] sm:$0xff]
    %v328 = vld [vmem:[#allocation7 + $0x160] sm:$0xff]
    %v329 = vld [vmem:[#allocation7 + $0x168] sm:$0xff]
    %v330 = vld [vmem:[#allocation7 + $0x170] sm:$0xff]
    %v331 = vld [vmem:[#allocation7 + $0x178] sm:$0xff]
    %v332 = vld [vmem:[%s5] sm:$0x7]
    %v334 = vperm.slane %v332, 0
    %v335 = vperm.slane %v332, 1
    %v336 = vperm.slane %v332, 2
    %340 = vmatpush.msra.mxu0 %v329
    %341 = vmatpush.msra.mxu0 %v326
    %342 = vmatpush.msra.mxu0 %v323
    %343 = vmatpush.msra.mxu0 %v320
    %344 = vmatpush.msra.mxu0 %v317
    %345 = vmatpush.msra.mxu0 %v314
    %346 = vmatpush.msra.mxu0 %v311
    %347 = vmatpush.msra.mxu0 %v308
    %348 = vmatpush.msra.mxu0 %v305
    %349 = vmatpush.msra.mxu0 %v302
    %350 = vmatpush.msra.mxu0 %v299
    %351 = vmatpush.msra.mxu0 %v296
    %352 = vmatpush.msra.mxu0 %v293
    %353 = vmatpush.msra.mxu0 %v290
    %354 = vmatpush.msra.mxu0 %v287
    %355 = vmatpush.msra.mxu0 %v284
    %356 = vmatmul.f32.gmra.mxu0 %v281
    %v357 = vpop.f32.mrf.mxu0
    %v358 = vadd.f32 %v334, %v357
    %359 = vdwg.mxu0
    %360 = vmatpush.msra.mxu0 %v330
    %361 = vmatpush.msra.mxu0 %v327
    %362 = vmatpush.msra.mxu0 %v324
    %363 = vmatpush.msra.mxu0 %v321
    %364 = vmatpush.msra.mxu0 %v318
    %365 = vmatpush.msra.mxu0 %v315
    %366 = vmatpush.msra.mxu0 %v312
    %367 = vmatpush.msra.mxu0 %v309
    %368 = vmatpush.msra.mxu0 %v306
    %369 = vmatpush.msra.mxu0 %v303
    %370 = vmatpush.msra.mxu0 %v300
    %371 = vmatpush.msra.mxu0 %v297
    %372 = vmatpush.msra.mxu0 %v294
    %373 = vmatpush.msra.mxu0 %v291
    %374 = vmatpush.msra.mxu0 %v288
    %375 = vmatpush.msra.mxu0 %v285
    %376 = vmatmul.f32.gmra.mxu0 %v281
    %v377 = vpop.f32.mrf.mxu0
    %v378 = vadd.f32 %v335, %v377
    %379 = vdwg.mxu0
    %380 = vmatpush.msra.mxu0 %v331
    %381 = vmatpush.msra.mxu0 %v328
    %382 = vmatpush.msra.mxu0 %v325
    %383 = vmatpush.msra.mxu0 %v322
    %384 = vmatpush.msra.mxu0 %v319
    %385 = vmatpush.msra.mxu0 %v316
    %386 = vmatpush.msra.mxu0 %v313
    %387 = vmatpush.msra.mxu0 %v310
    %388 = vmatpush.msra.mxu0 %v307
    %389 = vmatpush.msra.mxu0 %v304
    %390 = vmatpush.msra.mxu0 %v301
    %391 = vmatpush.msra.mxu0 %v298
    %392 = vmatpush.msra.mxu0 %v295
    %393 = vmatpush.msra.mxu0 %v292
    %394 = vmatpush.msra.mxu0 %v289
    %395 = vmatpush.msra.mxu0 %v286
    %396 = vmatmul.f32.gmra.mxu0 %v281
    %v397 = vpop.f32.mrf.mxu0
    %v398 = vadd.f32 %v336, %v397
    %399 = vdwg.mxu0
    %s400 = smul.u32 0, 3
    %s401 = smul.addr %s400, 8
    %s402 = scalar_lea.vmem [#allocation2], %s401
    %v403 = vld [vmem:[%s402] sm:$0xff]
    %v404 = vld [vmem:[%s402 + $0x8] sm:$0xff]
    %v405 = vld [vmem:[%s402 + $0x10] sm:$0xff]
    %v406 = vadd.f32 %v403, %v358
    %v407 = vxor.u32 %v406, 2147483648
    %v408 = vmul.f32 %v407, 1.442695
    %v409 = vpow.pop %v408
    %v410 = vadd.f32 %v409, 1.0
    %v411 = vrcp.pop %v410
    %v412 = vmul.f32 %v410, %v411
    %v413 = vsub.f32 1.0, %v412
    %v414 = vmul.f32 %v411, %v413
    %v415 = vadd.f32 %v411, %v414
    %vm416 = vweird.f32 %v410
    %vm417 = vweird.f32 %v411
    %vm418 = vmor %vm416, %vm417
    %v419 = vsel %vm418, %v411, %v415
    %v420 = vand.u32 2147483647, %v410
    %vm421 = vcmp.eq.f32.partialorder %v420, 8.507059e+37
    %v422 = vand.u32 %v410, 2147483648
    %v423 = vor.u32 1.1754944e-38, %v422
    %v424 = vsel %vm421, %v423, %v419
    %v425 = vmul.f32 1.0, %v424
    %v426 = vadd.f32 %v404, %v378
    %v427 = vxor.u32 %v426, 2147483648
    %v428 = vmul.f32 %v427, 1.442695
    %v429 = vpow.pop %v428
    %v430 = vadd.f32 %v429, 1.0
    %v431 = vrcp.pop %v430
    %v432 = vmul.f32 %v430, %v431
    %v433 = vsub.f32 1.0, %v432
    %v434 = vmul.f32 %v431, %v433
    %v435 = vadd.f32 %v431, %v434
    %vm436 = vweird.f32 %v430
    %vm437 = vweird.f32 %v431
    %vm438 = vmor %vm436, %vm437
    %v439 = vsel %vm438, %v431, %v435
    %v440 = vand.u32 2147483647, %v430
    %vm441 = vcmp.eq.f32.partialorder %v440, 8.507059e+37
    %v442 = vand.u32 %v430, 2147483648
    %v443 = vor.u32 1.1754944e-38, %v442
    %v444 = vsel %vm441, %v443, %v439
    %v445 = vmul.f32 1.0, %v444
    %v446 = vmul.f32 %v425, %v398
    %v447 = vadd.f32 %v405, %v446
    %v448 = vtanh.pop %v447
    %v449 = vsub.f32 %v281, %v448
    %v450 = vmul.f32 %v445, %v449
    %v451 = vadd.f32 %v448, %v450
    %v452 = vadd.f32 %v451, %v283
    %v453 = vld [vmem:[%s6] sm:$0xff]
    %v454 = vld [vmem:[%s6 + $0x8] sm:$0xff]
    %v455 = vld [vmem:[%s6 + $0x10] sm:$0xff]
    %v456 = vld [vmem:[%s6 + $0x18] sm:$0xff]
    %v457 = vld [vmem:[%s6 + $0x20] sm:$0xff]
    %v458 = vld [vmem:[%s6 + $0x28] sm:$0xff]
    %v459 = vld [vmem:[%s6 + $0x30] sm:$0xff]
    %v460 = vld [vmem:[%s6 + $0x38] sm:$0xff]
    %v461 = vld [vmem:[%s6 + $0x40] sm:$0xff]
    %v462 = vld [vmem:[%s6 + $0x48] sm:$0xff]
    %v463 = vld [vmem:[%s6 + $0x50] sm:$0xff]
    %v464 = vld [vmem:[%s6 + $0x58] sm:$0xff]
    %v465 = vld [vmem:[%s6 + $0x60] sm:$0xff]
    %v466 = vld [vmem:[%s6 + $0x68] sm:$0xff]
    %v467 = vld [vmem:[%s6 + $0x70] sm:$0xff]
    %v468 = vld [vmem:[%s6 + $0x78] sm:$0xff]
    %v469 = vld [vmem:[%s6 + $0x80] sm:$0xff]
    %v470 = vld [vmem:[%s6 + $0x88] sm:$0xff]
    %v471 = vld [vmem:[%s6 + $0x90] sm:$0xff]
    %v472 = vld [vmem:[%s6 + $0x98] sm:$0xff]
    %v473 = vld [vmem:[%s6 + $0xa0] sm:$0xff]
    %v474 = vld [vmem:[%s6 + $0xa8] sm:$0xff]
    %v475 = vld [vmem:[%s6 + $0xb0] sm:$0xff]
    %v476 = vld [vmem:[%s6 + $0xb8] sm:$0xff]
    %v477 = vld [vmem:[%s6 + $0xc0] sm:$0xff]
    %v478 = vld [vmem:[%s6 + $0xc8] sm:$0xff]
    %v479 = vld [vmem:[%s6 + $0xd0] sm:$0xff]
    %v480 = vld [vmem:[%s6 + $0xd8] sm:$0xff]
    %v481 = vld [vmem:[%s6 + $0xe0] sm:$0xff]
    %v482 = vld [vmem:[%s6 + $0xe8] sm:$0xff]
    %v483 = vld [vmem:[%s6 + $0xf0] sm:$0xff]
    %v484 = vld [vmem:[%s6 + $0xf8] sm:$0xff]
    %v485 = vld [vmem:[%s6 + $0x100] sm:$0xff]
    %v486 = vld [vmem:[%s6 + $0x108] sm:$0xff]
    %v487 = vld [vmem:[%s6 + $0x110] sm:$0xff]
    %v488 = vld [vmem:[%s6 + $0x118] sm:$0xff]
    %v489 = vld [vmem:[%s6 + $0x120] sm:$0xff]
    %v490 = vld [vmem:[%s6 + $0x128] sm:$0xff]
    %v491 = vld [vmem:[%s6 + $0x130] sm:$0xff]
    %v492 = vld [vmem:[%s6 + $0x138] sm:$0xff]
    %v493 = vld [vmem:[%s6 + $0x140] sm:$0xff]
    %v494 = vld [vmem:[%s6 + $0x148] sm:$0xff]
    %v495 = vld [vmem:[%s6 + $0x150] sm:$0xff]
    %v496 = vld [vmem:[%s6 + $0x158] sm:$0xff]
    %v497 = vld [vmem:[%s6 + $0x160] sm:$0xff]
    %v498 = vld [vmem:[%s6 + $0x168] sm:$0xff]
    %v499 = vld [vmem:[%s6 + $0x170] sm:$0xff]
    %v500 = vld [vmem:[%s6 + $0x178] sm:$0xff]
    %v501 = vld [vmem:[%s6 + $0x180] sm:$0xff]
    %v502 = vld [vmem:[%s6 + $0x188] sm:$0xff]
    %v503 = vld [vmem:[%s6 + $0x190] sm:$0xff]
    %v504 = vld [vmem:[%s6 + $0x198] sm:$0xff]
    %v505 = vld [vmem:[%s6 + $0x1a0] sm:$0xff]
    %v506 = vld [vmem:[%s6 + $0x1a8] sm:$0xff]
    %v507 = vld [vmem:[%s6 + $0x1b0] sm:$0xff]
    %v508 = vld [vmem:[%s6 + $0x1b8] sm:$0xff]
    %v509 = vld [vmem:[%s6 + $0x1c0] sm:$0xff]
    %v510 = vld [vmem:[%s6 + $0x1c8] sm:$0xff]
    %v511 = vld [vmem:[%s6 + $0x1d0] sm:$0xff]
    %v512 = vld [vmem:[%s6 + $0x1d8] sm:$0xff]
    %v513 = vld [vmem:[%s6 + $0x1e0] sm:$0xff]
    %v514 = vld [vmem:[%s6 + $0x1e8] sm:$0xff]
    %v515 = vld [vmem:[%s6 + $0x1f0] sm:$0xff]
    %v516 = vld [vmem:[%s6 + $0x1f8] sm:$0xff]
    %v517 = vld [vmem:[%s7] sm:$0xf]
    %v519 = vperm.slane %v517, 0
    %v520 = vperm.slane %v517, 1
    %v521 = vperm.slane %v517, 2
    %v522 = vperm.slane %v517, 3
    %527 = vmatpush.msra.mxu0 %v513
    %528 = vmatpush.msra.mxu0 %v509
    %529 = vmatpush.msra.mxu0 %v505
    %530 = vmatpush.msra.mxu0 %v501
    %531 = vmatpush.msra.mxu0 %v497
    %532 = vmatpush.msra.mxu0 %v493
    %533 = vmatpush.msra.mxu0 %v489
    %534 = vmatpush.msra.mxu0 %v485
    %535 = vmatpush.msra.mxu0 %v481
    %536 = vmatpush.msra.mxu0 %v477
    %537 = vmatpush.msra.mxu0 %v473
    %538 = vmatpush.msra.mxu0 %v469
    %539 = vmatpush.msra.mxu0 %v465
    %540 = vmatpush.msra.mxu0 %v461
    %541 = vmatpush.msra.mxu0 %v457
    %542 = vmatpush.msra.mxu0 %v453
    %543 = vmatmul.f32.gmra.mxu0 %v452
    %v544 = vpop.f32.mrf.mxu0
    %v545 = vadd.f32 %v519, %v544
    %546 = vdwg.mxu0
    %547 = vmatpush.msra.mxu0 %v514
    %548 = vmatpush.msra.mxu0 %v510
    %549 = vmatpush.msra.mxu0 %v506
    %550 = vmatpush.msra.mxu0 %v502
    %551 = vmatpush.msra.mxu0 %v498
    %552 = vmatpush.msra.mxu0 %v494
    %553 = vmatpush.msra.mxu0 %v490
    %554 = vmatpush.msra.mxu0 %v486
    %555 = vmatpush.msra.mxu0 %v482
    %556 = vmatpush.msra.mxu0 %v478
    %557 = vmatpush.msra.mxu0 %v474
    %558 = vmatpush.msra.mxu0 %v470
    %559 = vmatpush.msra.mxu0 %v466
    %560 = vmatpush.msra.mxu0 %v462
    %561 = vmatpush.msra.mxu0 %v458
    %562 = vmatpush.msra.mxu0 %v454
    %563 = vmatmul.f32.gmra.mxu0 %v452
    %v564 = vpop.f32.mrf.mxu0
    %v565 = vadd.f32 %v520, %v564
    %566 = vdwg.mxu0
    %567 = vmatpush.msra.mxu0 %v515
    %568 = vmatpush.msra.mxu0 %v511
    %569 = vmatpush.msra.mxu0 %v507
    %570 = vmatpush.msra.mxu0 %v503
    %571 = vmatpush.msra.mxu0 %v499
    %572 = vmatpush.msra.mxu0 %v495
    %573 = vmatpush.msra.mxu0 %v491
    %574 = vmatpush.msra.mxu0 %v487
    %575 = vmatpush.msra.mxu0 %v483
    %576 = vmatpush.msra.mxu0 %v479
    %577 = vmatpush.msra.mxu0 %v475
    %578 = vmatpush.msra.mxu0 %v471
    %579 = vmatpush.msra.mxu0 %v467
    %580 = vmatpush.msra.mxu0 %v463
    %581 = vmatpush.msra.mxu0 %v459
    %582 = vmatpush.msra.mxu0 %v455
    %583 = vmatmul.f32.gmra.mxu0 %v452
    %v584 = vpop.f32.mrf.mxu0
    %v585 = vadd.f32 %v521, %v584
    %586 = vdwg.mxu0
    %587 = vmatpush.msra.mxu0 %v516
    %588 = vmatpush.msra.mxu0 %v512
    %589 = vmatpush.msra.mxu0 %v508
    %590 = vmatpush.msra.mxu0 %v504
    %591 = vmatpush.msra.mxu0 %v500
    %592 = vmatpush.msra.mxu0 %v496
    %593 = vmatpush.msra.mxu0 %v492
    %594 = vmatpush.msra.mxu0 %v488
    %595 = vmatpush.msra.mxu0 %v484
    %596 = vmatpush.msra.mxu0 %v480
    %597 = vmatpush.msra.mxu0 %v476
    %598 = vmatpush.msra.mxu0 %v472
    %599 = vmatpush.msra.mxu0 %v468
    %600 = vmatpush.msra.mxu0 %v464
    %601 = vmatpush.msra.mxu0 %v460
    %602 = vmatpush.msra.mxu0 %v456
    %603 = vmatmul.f32.gmra.mxu0 %v452
    %v604 = vpop.f32.mrf.mxu0
    %v605 = vadd.f32 %v522, %v604
    %606 = vdwg.mxu0
    %v607 = vxor.u32 %v545, 2147483648
    %v608 = vmul.f32 %v607, 1.442695
    %v609 = vpow.pop %v608
    %v610 = vadd.f32 %v609, 1.0
    %v611 = vrcp.pop %v610
    %v612 = vmul.f32 %v610, %v611
    %v613 = vsub.f32 1.0, %v612
    %v614 = vmul.f32 %v611, %v613
    %v615 = vadd.f32 %v611, %v614
    %vm616 = vweird.f32 %v610
    %vm617 = vweird.f32 %v611
    %vm618 = vmor %vm616, %vm617
    %v619 = vsel %vm618, %v611, %v615
    %v620 = vand.u32 2147483647, %v610
    %vm621 = vcmp.eq.f32.partialorder %v620, 8.507059e+37
    %v622 = vand.u32 %v610, 2147483648
    %v623 = vor.u32 1.1754944e-38, %v622
    %v624 = vsel %vm621, %v623, %v619
    %v625 = vmul.f32 1.0, %v624
    %v626 = vxor.u32 %v565, 2147483648
    %v627 = vmul.f32 %v626, 1.442695
    %v628 = vpow.pop %v627
    %v629 = vadd.f32 %v628, 1.0
    %v630 = vrcp.pop %v629
    %v631 = vmul.f32 %v629, %v630
    %v632 = vsub.f32 1.0, %v631
    %v633 = vmul.f32 %v630, %v632
    %v634 = vadd.f32 %v630, %v633
    %vm635 = vweird.f32 %v629
    %vm636 = vweird.f32 %v630
    %vm637 = vmor %vm635, %vm636
    %v638 = vsel %vm637, %v630, %v634
    %v639 = vand.u32 2147483647, %v629
    %vm640 = vcmp.eq.f32.partialorder %v639, 8.507059e+37
    %v641 = vand.u32 %v629, 2147483648
    %v642 = vor.u32 1.1754944e-38, %v641
    %v643 = vsel %vm640, %v642, %v638
    %v644 = vmul.f32 1.0, %v643
    %v645 = vmul.f32 %v625, %v605
    %v646 = vadd.f32 %v585, %v645
    %v647 = vtanh.pop %v646
    %v648 = vsub.f32 %v283, %v647
    %v649 = vmul.f32 %v644, %v648
    %v650 = vadd.f32 %v647, %v649
    %651 = vst [vmem:[#allocation3] sm:$0xff] %v650
    %v652 = vld [vmem:[#allocation7] sm:$0xff]
    %v653 = vld [vmem:[#allocation7 + $0x8] sm:$0xff]
    %v654 = vld [vmem:[#allocation7 + $0x10] sm:$0xff]
    %v655 = vld [vmem:[#allocation7 + $0x18] sm:$0xff]
    %v656 = vld [vmem:[#allocation7 + $0x20] sm:$0xff]
    %v657 = vld [vmem:[#allocation7 + $0x28] sm:$0xff]
    %v658 = vld [vmem:[#allocation7 + $0x30] sm:$0xff]
    %v659 = vld [vmem:[#allocation7 + $0x38] sm:$0xff]
    %v660 = vld [vmem:[#allocation7 + $0x40] sm:$0xff]
    %v661 = vld [vmem:[#allocation7 + $0x48] sm:$0xff]
    %v662 = vld [vmem:[#allocation7 + $0x50] sm:$0xff]
    %v663 = vld [vmem:[#allocation7 + $0x58] sm:$0xff]
    %v664 = vld [vmem:[#allocation7 + $0x60] sm:$0xff]
    %v665 = vld [vmem:[#allocation7 + $0x68] sm:$0xff]
    %v666 = vld [vmem:[#allocation7 + $0x70] sm:$0xff]
    %v667 = vld [vmem:[#allocation7 + $0x78] sm:$0xff]
    %v668 = vld [vmem:[#allocation7 + $0x80] sm:$0xff]
    %v669 = vld [vmem:[#allocation7 + $0x88] sm:$0xff]
    %v670 = vld [vmem:[#allocation7 + $0x90] sm:$0xff]
    %v671 = vld [vmem:[#allocation7 + $0x98] sm:$0xff]
    %v672 = vld [vmem:[#allocation7 + $0xa0] sm:$0xff]
    %v673 = vld [vmem:[#allocation7 + $0xa8] sm:$0xff]
    %v674 = vld [vmem:[#allocation7 + $0xb0] sm:$0xff]
    %v675 = vld [vmem:[#allocation7 + $0xb8] sm:$0xff]
    %v676 = vld [vmem:[#allocation7 + $0xc0] sm:$0xff]
    %v677 = vld [vmem:[#allocation7 + $0xc8] sm:$0xff]
    %v678 = vld [vmem:[#allocation7 + $0xd0] sm:$0xff]
    %v679 = vld [vmem:[#allocation7 + $0xd8] sm:$0xff]
    %v680 = vld [vmem:[#allocation7 + $0xe0] sm:$0xff]
    %v681 = vld [vmem:[#allocation7 + $0xe8] sm:$0xff]
    %v682 = vld [vmem:[#allocation7 + $0xf0] sm:$0xff]
    %v683 = vld [vmem:[#allocation7 + $0xf8] sm:$0xff]
    %v684 = vld [vmem:[#allocation7 + $0x100] sm:$0xff]
    %v685 = vld [vmem:[#allocation7 + $0x108] sm:$0xff]
    %v686 = vld [vmem:[#allocation7 + $0x110] sm:$0xff]
    %v687 = vld [vmem:[#allocation7 + $0x118] sm:$0xff]
    %v688 = vld [vmem:[#allocation7 + $0x120] sm:$0xff]
    %v689 = vld [vmem:[#allocation7 + $0x128] sm:$0xff]
    %v690 = vld [vmem:[#allocation7 + $0x130] sm:$0xff]
    %v691 = vld [vmem:[#allocation7 + $0x138] sm:$0xff]
    %v692 = vld [vmem:[#allocation7 + $0x140] sm:$0xff]
    %v693 = vld [vmem:[#allocation7 + $0x148] sm:$0xff]
    %v694 = vld [vmem:[#allocation7 + $0x150] sm:$0xff]
    %v695 = vld [vmem:[#allocation7 + $0x158] sm:$0xff]
    %v696 = vld [vmem:[#allocation7 + $0x160] sm:$0xff]
    %v697 = vld [vmem:[#allocation7 + $0x168] sm:$0xff]
    %v698 = vld [vmem:[#allocation7 + $0x170] sm:$0xff]
    %v699 = vld [vmem:[#allocation7 + $0x178] sm:$0xff]
    %v700 = vld [vmem:[%s5] sm:$0x7]
    %v702 = vperm.slane %v700, 0
    %v703 = vperm.slane %v700, 1
    %v704 = vperm.slane %v700, 2
    %708 = vmatpush.msra.mxu0 %v697
    %709 = vmatpush.msra.mxu0 %v694
    %710 = vmatpush.msra.mxu0 %v691
    %711 = vmatpush.msra.mxu0 %v688
    %712 = vmatpush.msra.mxu0 %v685
    %713 = vmatpush.msra.mxu0 %v682
    %714 = vmatpush.msra.mxu0 %v679
    %715 = vmatpush.msra.mxu0 %v676
    %716 = vmatpush.msra.mxu0 %v673
    %717 = vmatpush.msra.mxu0 %v670
    %718 = vmatpush.msra.mxu0 %v667
    %719 = vmatpush.msra.mxu0 %v664
    %720 = vmatpush.msra.mxu0 %v661
    %721 = vmatpush.msra.mxu0 %v658
    %722 = vmatpush.msra.mxu0 %v655
    %723 = vmatpush.msra.mxu0 %v652
    %724 = vmatmul.f32.gmra.mxu0 %v451
    %v725 = vpop.f32.mrf.mxu0
    %v726 = vadd.f32 %v702, %v725
    %727 = vdwg.mxu0
    %728 = vmatpush.msra.mxu0 %v698
    %729 = vmatpush.msra.mxu0 %v695
    %730 = vmatpush.msra.mxu0 %v692
    %731 = vmatpush.msra.mxu0 %v689
    %732 = vmatpush.msra.mxu0 %v686
    %733 = vmatpush.msra.mxu0 %v683
    %734 = vmatpush.msra.mxu0 %v680
    %735 = vmatpush.msra.mxu0 %v677
    %736 = vmatpush.msra.mxu0 %v674
    %737 = vmatpush.msra.mxu0 %v671
    %738 = vmatpush.msra.mxu0 %v668
    %739 = vmatpush.msra.mxu0 %v665
    %740 = vmatpush.msra.mxu0 %v662
    %741 = vmatpush.msra.mxu0 %v659
    %742 = vmatpush.msra.mxu0 %v656
    %743 = vmatpush.msra.mxu0 %v653
    %744 = vmatmul.f32.gmra.mxu0 %v451
    %v745 = vpop.f32.mrf.mxu0
    %v746 = vadd.f32 %v703, %v745
    %747 = vdwg.mxu0
    %748 = vmatpush.msra.mxu0 %v699
    %749 = vmatpush.msra.mxu0 %v696
    %750 = vmatpush.msra.mxu0 %v693
    %751 = vmatpush.msra.mxu0 %v690
    %752 = vmatpush.msra.mxu0 %v687
    %753 = vmatpush.msra.mxu0 %v684
    %754 = vmatpush.msra.mxu0 %v681
    %755 = vmatpush.msra.mxu0 %v678
    %756 = vmatpush.msra.mxu0 %v675
    %757 = vmatpush.msra.mxu0 %v672
    %758 = vmatpush.msra.mxu0 %v669
    %759 = vmatpush.msra.mxu0 %v666
    %760 = vmatpush.msra.mxu0 %v663
    %761 = vmatpush.msra.mxu0 %v660
    %762 = vmatpush.msra.mxu0 %v657
    %763 = vmatpush.msra.mxu0 %v654
    %764 = vmatmul.f32.gmra.mxu0 %v451
    %v765 = vpop.f32.mrf.mxu0
    %v766 = vadd.f32 %v704, %v765
    %767 = vdwg.mxu0
    %s768 = smul.u32 1, 3
    %s769 = smul.addr %s768, 8
    %s770 = scalar_lea.vmem [#allocation2], %s769
    %v771 = vld [vmem:[%s770] sm:$0xff]
    %v772 = vld [vmem:[%s770 + $0x8] sm:$0xff]
    %v773 = vld [vmem:[%s770 + $0x10] sm:$0xff]
    %v774 = vadd.f32 %v771, %v726
    %v775 = vxor.u32 %v774, 2147483648
    %v776 = vmul.f32 %v775, 1.442695
    %v777 = vpow.pop %v776
    %v778 = vadd.f32 %v777, 1.0
    %v779 = vrcp.pop %v778
    %v780 = vmul.f32 %v778, %v779
    %v781 = vsub.f32 1.0, %v780
    %v782 = vmul.f32 %v779, %v781
    %v783 = vadd.f32 %v779, %v782
    %vm784 = vweird.f32 %v778
    %vm785 = vweird.f32 %v779
    %vm786 = vmor %vm784, %vm785
    %v787 = vsel %vm786, %v779, %v783
    %v788 = vand.u32 2147483647, %v778
    %vm789 = vcmp.eq.f32.partialorder %v788, 8.507059e+37
    %v790 = vand.u32 %v778, 2147483648
    %v791 = vor.u32 1.1754944e-38, %v790
    %v792 = vsel %vm789, %v791, %v787
    %v793 = vmul.f32 1.0, %v792
    %v794 = vadd.f32 %v772, %v746
    %v795 = vxor.u32 %v794, 2147483648
    %v796 = vmul.f32 %v795, 1.442695
    %v797 = vpow.pop %v796
    %v798 = vadd.f32 %v797, 1.0
    %v799 = vrcp.pop %v798
    %v800 = vmul.f32 %v798, %v799
    %v801 = vsub.f32 1.0, %v800
    %v802 = vmul.f32 %v799, %v801
    %v803 = vadd.f32 %v799, %v802
    %vm804 = vweird.f32 %v798
    %vm805 = vweird.f32 %v799
    %vm806 = vmor %vm804, %vm805
    %v807 = vsel %vm806, %v799, %v803
    %v808 = vand.u32 2147483647, %v798
    %vm809 = vcmp.eq.f32.partialorder %v808, 8.507059e+37
    %v810 = vand.u32 %v798, 2147483648
    %v811 = vor.u32 1.1754944e-38, %v810
    %v812 = vsel %vm809, %v811, %v807
    %v813 = vmul.f32 1.0, %v812
    %v814 = vmul.f32 %v793, %v766
    %v815 = vadd.f32 %v773, %v814
    %v816 = vtanh.pop %v815
    %v817 = vsub.f32 %v451, %v816
    %v818 = vmul.f32 %v813, %v817
    %v819 = vadd.f32 %v816, %v818
    %v820 = vadd.f32 %v819, %v650
    %v821 = vld [vmem:[%s6] sm:$0xff]
    %v822 = vld [vmem:[%s6 + $0x8] sm:$0xff]
    %v823 = vld [vmem:[%s6 + $0x10] sm:$0xff]
    %v824 = vld [vmem:[%s6 + $0x18] sm:$0xff]
    %v825 = vld [vmem:[%s6 + $0x20] sm:$0xff]
    %v826 = vld [vmem:[%s6 + $0x28] sm:$0xff]
    %v827 = vld [vmem:[%s6 + $0x30] sm:$0xff]
    %v828 = vld [vmem:[%s6 + $0x38] sm:$0xff]
    %v829 = vld [vmem:[%s6 + $0x40] sm:$0xff]
    %v830 = vld [vmem:[%s6 + $0x48] sm:$0xff]
    %v831 = vld [vmem:[%s6 + $0x50] sm:$0xff]
    %v832 = vld [vmem:[%s6 + $0x58] sm:$0xff]
    %v833 = vld [vmem:[%s6 + $0x60] sm:$0xff]
    %v834 = vld [vmem:[%s6 + $0x68] sm:$0xff]
    %v835 = vld [vmem:[%s6 + $0x70] sm:$0xff]
    %v836 = vld [vmem:[%s6 + $0x78] sm:$0xff]
    %v837 = vld [vmem:[%s6 + $0x80] sm:$0xff]
    %v838 = vld [vmem:[%s6 + $0x88] sm:$0xff]
    %v839 = vld [vmem:[%s6 + $0x90] sm:$0xff]
    %v840 = vld [vmem:[%s6 + $0x98] sm:$0xff]
    %v841 = vld [vmem:[%s6 + $0xa0] sm:$0xff]
    %v842 = vld [vmem:[%s6 + $0xa8] sm:$0xff]
    %v843 = vld [vmem:[%s6 + $0xb0] sm:$0xff]
    %v844 = vld [vmem:[%s6 + $0xb8] sm:$0xff]
    %v845 = vld [vmem:[%s6 + $0xc0] sm:$0xff]
    %v846 = vld [vmem:[%s6 + $0xc8] sm:$0xff]
    %v847 = vld [vmem:[%s6 + $0xd0] sm:$0xff]
    %v848 = vld [vmem:[%s6 + $0xd8] sm:$0xff]
    %v849 = vld [vmem:[%s6 + $0xe0] sm:$0xff]
    %v850 = vld [vmem:[%s6 + $0xe8] sm:$0xff]
    %v851 = vld [vmem:[%s6 + $0xf0] sm:$0xff]
    %v852 = vld [vmem:[%s6 + $0xf8] sm:$0xff]
    %v853 = vld [vmem:[%s6 + $0x100] sm:$0xff]
    %v854 = vld [vmem:[%s6 + $0x108] sm:$0xff]
    %v855 = vld [vmem:[%s6 + $0x110] sm:$0xff]
    %v856 = vld [vmem:[%s6 + $0x118] sm:$0xff]
    %v857 = vld [vmem:[%s6 + $0x120] sm:$0xff]
    %v858 = vld [vmem:[%s6 + $0x128] sm:$0xff]
    %v859 = vld [vmem:[%s6 + $0x130] sm:$0xff]
    %v860 = vld [vmem:[%s6 + $0x138] sm:$0xff]
    %v861 = vld [vmem:[%s6 + $0x140] sm:$0xff]
    %v862 = vld [vmem:[%s6 + $0x148] sm:$0xff]
    %v863 = vld [vmem:[%s6 + $0x150] sm:$0xff]
    %v864 = vld [vmem:[%s6 + $0x158] sm:$0xff]
    %v865 = vld [vmem:[%s6 + $0x160] sm:$0xff]
    %v866 = vld [vmem:[%s6 + $0x168] sm:$0xff]
    %v867 = vld [vmem:[%s6 + $0x170] sm:$0xff]
    %v868 = vld [vmem:[%s6 + $0x178] sm:$0xff]
    %v869 = vld [vmem:[%s6 + $0x180] sm:$0xff]
    %v870 = vld [vmem:[%s6 + $0x188] sm:$0xff]
    %v871 = vld [vmem:[%s6 + $0x190] sm:$0xff]
    %v872 = vld [vmem:[%s6 + $0x198] sm:$0xff]
    %v873 = vld [vmem:[%s6 + $0x1a0] sm:$0xff]
    %v874 = vld [vmem:[%s6 + $0x1a8] sm:$0xff]
    %v875 = vld [vmem:[%s6 + $0x1b0] sm:$0xff]
    %v876 = vld [vmem:[%s6 + $0x1b8] sm:$0xff]
    %v877 = vld [vmem:[%s6 + $0x1c0] sm:$0xff]
    %v878 = vld [vmem:[%s6 + $0x1c8] sm:$0xff]
    %v879 = vld [vmem:[%s6 + $0x1d0] sm:$0xff]
    %v880 = vld [vmem:[%s6 + $0x1d8] sm:$0xff]
    %v881 = vld [vmem:[%s6 + $0x1e0] sm:$0xff]
    %v882 = vld [vmem:[%s6 + $0x1e8] sm:$0xff]
    %v883 = vld [vmem:[%s6 + $0x1f0] sm:$0xff]
    %v884 = vld [vmem:[%s6 + $0x1f8] sm:$0xff]
    %v885 = vld [vmem:[%s7] sm:$0xf]
    %v887 = vperm.slane %v885, 0
    %v888 = vperm.slane %v885, 1
    %v889 = vperm.slane %v885, 2
    %v890 = vperm.slane %v885, 3
    %895 = vmatpush.msra.mxu0 %v881
    %896 = vmatpush.msra.mxu0 %v877
    %897 = vmatpush.msra.mxu0 %v873
    %898 = vmatpush.msra.mxu0 %v869
    %899 = vmatpush.msra.mxu0 %v865
    %900 = vmatpush.msra.mxu0 %v861
    %901 = vmatpush.msra.mxu0 %v857
    %902 = vmatpush.msra.mxu0 %v853
    %903 = vmatpush.msra.mxu0 %v849
    %904 = vmatpush.msra.mxu0 %v845
    %905 = vmatpush.msra.mxu0 %v841
    %906 = vmatpush.msra.mxu0 %v837
    %907 = vmatpush.msra.mxu0 %v833
    %908 = vmatpush.msra.mxu0 %v829
    %909 = vmatpush.msra.mxu0 %v825
    %910 = vmatpush.msra.mxu0 %v821
    %911 = vmatmul.f32.gmra.mxu0 %v820
    %v912 = vpop.f32.mrf.mxu0
    %v913 = vadd.f32 %v887, %v912
    %914 = vdwg.mxu0
    %915 = vmatpush.msra.mxu0 %v882
    %916 = vmatpush.msra.mxu0 %v878
    %917 = vmatpush.msra.mxu0 %v874
    %918 = vmatpush.msra.mxu0 %v870
    %919 = vmatpush.msra.mxu0 %v866
    %920 = vmatpush.msra.mxu0 %v862
    %921 = vmatpush.msra.mxu0 %v858
    %922 = vmatpush.msra.mxu0 %v854
    %923 = vmatpush.msra.mxu0 %v850
    %924 = vmatpush.msra.mxu0 %v846
    %925 = vmatpush.msra.mxu0 %v842
    %926 = vmatpush.msra.mxu0 %v838
    %927 = vmatpush.msra.mxu0 %v834
    %928 = vmatpush.msra.mxu0 %v830
    %929 = vmatpush.msra.mxu0 %v826
    %930 = vmatpush.msra.mxu0 %v822
    %931 = vmatmul.f32.gmra.mxu0 %v820
    %v932 = vpop.f32.mrf.mxu0
    %v933 = vadd.f32 %v888, %v932
    %934 = vdwg.mxu0
    %935 = vmatpush.msra.mxu0 %v883
    %936 = vmatpush.msra.mxu0 %v879
    %937 = vmatpush.msra.mxu0 %v875
    %938 = vmatpush.msra.mxu0 %v871
    %939 = vmatpush.msra.mxu0 %v867
    %940 = vmatpush.msra.mxu0 %v863
    %941 = vmatpush.msra.mxu0 %v859
    %942 = vmatpush.msra.mxu0 %v855
    %943 = vmatpush.msra.mxu0 %v851
    %944 = vmatpush.msra.mxu0 %v847
    %945 = vmatpush.msra.mxu0 %v843
    %946 = vmatpush.msra.mxu0 %v839
    %947 = vmatpush.msra.mxu0 %v835
    %948 = vmatpush.msra.mxu0 %v831
    %949 = vmatpush.msra.mxu0 %v827
    %950 = vmatpush.msra.mxu0 %v823
    %951 = vmatmul.f32.gmra.mxu0 %v820
    %v952 = vpop.f32.mrf.mxu0
    %v953 = vadd.f32 %v889, %v952
    %954 = vdwg.mxu0
    %955 = vmatpush.msra.mxu0 %v884
    %956 = vmatpush.msra.mxu0 %v880
    %957 = vmatpush.msra.mxu0 %v876
    %958 = vmatpush.msra.mxu0 %v872
    %959 = vmatpush.msra.mxu0 %v868
    %960 = vmatpush.msra.mxu0 %v864
    %961 = vmatpush.msra.mxu0 %v860
    %962 = vmatpush.msra.mxu0 %v856
    %963 = vmatpush.msra.mxu0 %v852
    %964 = vmatpush.msra.mxu0 %v848
    %965 = vmatpush.msra.mxu0 %v844
    %966 = vmatpush.msra.mxu0 %v840
    %967 = vmatpush.msra.mxu0 %v836
    %968 = vmatpush.msra.mxu0 %v832
    %969 = vmatpush.msra.mxu0 %v828
    %970 = vmatpush.msra.mxu0 %v824
    %971 = vmatmul.f32.gmra.mxu0 %v820
    %v972 = vpop.f32.mrf.mxu0
    %v973 = vadd.f32 %v890, %v972
    %974 = vdwg.mxu0
    %v975 = vxor.u32 %v913, 2147483648
    %v976 = vmul.f32 %v975, 1.442695
    %v977 = vpow.pop %v976
    %v978 = vadd.f32 %v977, 1.0
    %v979 = vrcp.pop %v978
    %v980 = vmul.f32 %v978, %v979
    %v981 = vsub.f32 1.0, %v980
    %v982 = vmul.f32 %v979, %v981
    %v983 = vadd.f32 %v979, %v982
    %vm984 = vweird.f32 %v978
    %vm985 = vweird.f32 %v979
    %vm986 = vmor %vm984, %vm985
    %v987 = vsel %vm986, %v979, %v983
    %v988 = vand.u32 2147483647, %v978
    %vm989 = vcmp.eq.f32.partialorder %v988, 8.507059e+37
    %v990 = vand.u32 %v978, 2147483648
    %v991 = vor.u32 1.1754944e-38, %v990
    %v992 = vsel %vm989, %v991, %v987
    %v993 = vmul.f32 1.0, %v992
    %v994 = vxor.u32 %v933, 2147483648
    %v995 = vmul.f32 %v994, 1.442695
    %v996 = vpow.pop %v995
    %v997 = vadd.f32 %v996, 1.0
    %v998 = vrcp.pop %v997
    %v999 = vmul.f32 %v997, %v998
    %v1000 = vsub.f32 1.0, %v999
    %v1001 = vmul.f32 %v998, %v1000
    %v1002 = vadd.f32 %v998, %v1001
    %vm1003 = vweird.f32 %v997
    %vm1004 = vweird.f32 %v998
    %vm1005 = vmor %vm1003, %vm1004
    %v1006 = vsel %vm1005, %v998, %v1002
    %v1007 = vand.u32 2147483647, %v997
    %vm1008 = vcmp.eq.f32.partialorder %v1007, 8.507059e+37
    %v1009 = vand.u32 %v997, 2147483648
    %v1010 = vor.u32 1.1754944e-38, %v1009
    %v1011 = vsel %vm1008, %v1010, %v1006
    %v1012 = vmul.f32 1.0, %v1011
    %v1013 = vmul.f32 %v993, %v973
    %v1014 = vadd.f32 %v953, %v1013
    %v1015 = vtanh.pop %v1014
    %v1016 = vsub.f32 %v650, %v1015
    %v1017 = vmul.f32 %v1012, %v1016
    %v1018 = vadd.f32 %v1015, %v1017
    %s1019 = scalar_lea.vmem [#allocation3], 8
    %1020 = vst [vmem:[%s1019] sm:$0xff] %v1018
    %v1021 = vld [vmem:[#allocation7] sm:$0xff]
    %v1022 = vld [vmem:[#allocation7 + $0x8] sm:$0xff]
    %v1023 = vld [vmem:[#allocation7 + $0x10] sm:$0xff]
    %v1024 = vld [vmem:[#allocation7 + $0x18] sm:$0xff]
    %v1025 = vld [vmem:[#allocation7 + $0x20] sm:$0xff]
    %v1026 = vld [vmem:[#allocation7 + $0x28] sm:$0xff]
    %v1027 = vld [vmem:[#allocation7 + $0x30] sm:$0xff]
    %v1028 = vld [vmem:[#allocation7 + $0x38] sm:$0xff]
    %v1029 = vld [vmem:[#allocation7 + $0x40] sm:$0xff]
    %v1030 = vld [vmem:[#allocation7 + $0x48] sm:$0xff]
    %v1031 = vld [vmem:[#allocation7 + $0x50] sm:$0xff]
    %v1032 = vld [vmem:[#allocation7 + $0x58] sm:$0xff]
    %v1033 = vld [vmem:[#allocation7 + $0x60] sm:$0xff]
    %v1034 = vld [vmem:[#allocation7 + $0x68] sm:$0xff]
    %v1035 = vld [vmem:[#allocation7 + $0x70] sm:$0xff]
    %v1036 = vld [vmem:[#allocation7 + $0x78] sm:$0xff]
    %v1037 = vld [vmem:[#allocation7 + $0x80] sm:$0xff]
    %v1038 = vld [vmem:[#allocation7 + $0x88] sm:$0xff]
    %v1039 = vld [vmem:[#allocation7 + $0x90] sm:$0xff]
    %v1040 = vld [vmem:[#allocation7 + $0x98] sm:$0xff]
    %v1041 = vld [vmem:[#allocation7 + $0xa0] sm:$0xff]
    %v1042 = vld [vmem:[#allocation7 + $0xa8] sm:$0xff]
    %v1043 = vld [vmem:[#allocation7 + $0xb0] sm:$0xff]
    %v1044 = vld [vmem:[#allocation7 + $0xb8] sm:$0xff]
    %v1045 = vld [vmem:[#allocation7 + $0xc0] sm:$0xff]
    %v1046 = vld [vmem:[#allocation7 + $0xc8] sm:$0xff]
    %v1047 = vld [vmem:[#allocation7 + $0xd0] sm:$0xff]
    %v1048 = vld [vmem:[#allocation7 + $0xd8] sm:$0xff]
    %v1049 = vld [vmem:[#allocation7 + $0xe0] sm:$0xff]
    %v1050 = vld [vmem:[#allocation7 + $0xe8] sm:$0xff]
    %v1051 = vld [vmem:[#allocation7 + $0xf0] sm:$0xff]
    %v1052 = vld [vmem:[#allocation7 + $0xf8] sm:$0xff]
    %v1053 = vld [vmem:[#allocation7 + $0x100] sm:$0xff]
    %v1054 = vld [vmem:[#allocation7 + $0x108] sm:$0xff]
    %v1055 = vld [vmem:[#allocation7 + $0x110] sm:$0xff]
    %v1056 = vld [vmem:[#allocation7 + $0x118] sm:$0xff]
    %v1057 = vld [vmem:[#allocation7 + $0x120] sm:$0xff]
    %v1058 = vld [vmem:[#allocation7 + $0x128] sm:$0xff]
    %v1059 = vld [vmem:[#allocation7 + $0x130] sm:$0xff]
    %v1060 = vld [vmem:[#allocation7 + $0x138] sm:$0xff]
    %v1061 = vld [vmem:[#allocation7 + $0x140] sm:$0xff]
    %v1062 = vld [vmem:[#allocation7 + $0x148] sm:$0xff]
    %v1063 = vld [vmem:[#allocation7 + $0x150] sm:$0xff]
    %v1064 = vld [vmem:[#allocation7 + $0x158] sm:$0xff]
    %v1065 = vld [vmem:[#allocation7 + $0x160] sm:$0xff]
    %v1066 = vld [vmem:[#allocation7 + $0x168] sm:$0xff]
    %v1067 = vld [vmem:[#allocation7 + $0x170] sm:$0xff]
    %v1068 = vld [vmem:[#allocation7 + $0x178] sm:$0xff]
    %v1069 = vld [vmem:[%s5] sm:$0x7]
    %v1071 = vperm.slane %v1069, 0
    %v1072 = vperm.slane %v1069, 1
    %v1073 = vperm.slane %v1069, 2
    %1077 = vmatpush.msra.mxu0 %v1066
    %1078 = vmatpush.msra.mxu0 %v1063
    %1079 = vmatpush.msra.mxu0 %v1060
    %1080 = vmatpush.msra.mxu0 %v1057
    %1081 = vmatpush.msra.mxu0 %v1054
    %1082 = vmatpush.msra.mxu0 %v1051
    %1083 = vmatpush.msra.mxu0 %v1048
    %1084 = vmatpush.msra.mxu0 %v1045
    %1085 = vmatpush.msra.mxu0 %v1042
    %1086 = vmatpush.msra.mxu0 %v1039
    %1087 = vmatpush.msra.mxu0 %v1036
    %1088 = vmatpush.msra.mxu0 %v1033
    %1089 = vmatpush.msra.mxu0 %v1030
    %1090 = vmatpush.msra.mxu0 %v1027
    %1091 = vmatpush.msra.mxu0 %v1024
    %1092 = vmatpush.msra.mxu0 %v1021
    %1093 = vmatmul.f32.gmra.mxu0 %v819
    %v1094 = vpop.f32.mrf.mxu0
    %v1095 = vadd.f32 %v1071, %v1094
    %1096 = vdwg.mxu0
    %1097 = vmatpush.msra.mxu0 %v1067
    %1098 = vmatpush.msra.mxu0 %v1064
    %1099 = vmatpush.msra.mxu0 %v1061
    %1100 = vmatpush.msra.mxu0 %v1058
    %1101 = vmatpush.msra.mxu0 %v1055
    %1102 = vmatpush.msra.mxu0 %v1052
    %1103 = vmatpush.msra.mxu0 %v1049
    %1104 = vmatpush.msra.mxu0 %v1046
    %1105 = vmatpush.msra.mxu0 %v1043
    %1106 = vmatpush.msra.mxu0 %v1040
    %1107 = vmatpush.msra.mxu0 %v1037
    %1108 = vmatpush.msra.mxu0 %v1034
    %1109 = vmatpush.msra.mxu0 %v1031
    %1110 = vmatpush.msra.mxu0 %v1028
    %1111 = vmatpush.msra.mxu0 %v1025
    %1112 = vmatpush.msra.mxu0 %v1022
    %1113 = vmatmul.f32.gmra.mxu0 %v819
    %v1114 = vpop.f32.mrf.mxu0
    %v1115 = vadd.f32 %v1072, %v1114
    %1116 = vdwg.mxu0
    %1117 = vmatpush.msra.mxu0 %v1068
    %1118 = vmatpush.msra.mxu0 %v1065
    %1119 = vmatpush.msra.mxu0 %v1062
    %1120 = vmatpush.msra.mxu0 %v1059
    %1121 = vmatpush.msra.mxu0 %v1056
    %1122 = vmatpush.msra.mxu0 %v1053
    %1123 = vmatpush.msra.mxu0 %v1050
    %1124 = vmatpush.msra.mxu0 %v1047
    %1125 = vmatpush.msra.mxu0 %v1044
    %1126 = vmatpush.msra.mxu0 %v1041
    %1127 = vmatpush.msra.mxu0 %v1038
    %1128 = vmatpush.msra.mxu0 %v1035
    %1129 = vmatpush.msra.mxu0 %v1032
    %1130 = vmatpush.msra.mxu0 %v1029
    %1131 = vmatpush.msra.mxu0 %v1026
    %1132 = vmatpush.msra.mxu0 %v1023
    %1133 = vmatmul.f32.gmra.mxu0 %v819
    %v1134 = vpop.f32.mrf.mxu0
    %v1135 = vadd.f32 %v1073, %v1134
    %1136 = vdwg.mxu0
    %s1137 = smul.u32 2, 3
    %s1138 = smul.addr %s1137, 8
    %s1139 = scalar_lea.vmem [#allocation2], %s1138
    %v1140 = vld [vmem:[%s1139] sm:$0xff]
    %v1141 = vld [vmem:[%s1139 + $0x8] sm:$0xff]
    %v1142 = vld [vmem:[%s1139 + $0x10] sm:$0xff]
    %v1143 = vadd.f32 %v1140, %v1095
    %v1144 = vxor.u32 %v1143, 2147483648
    %v1145 = vmul.f32 %v1144, 1.442695
    %v1146 = vpow.pop %v1145
    %v1147 = vadd.f32 %v1146, 1.0
    %v1148 = vrcp.pop %v1147
    %v1149 = vmul.f32 %v1147, %v1148
    %v1150 = vsub.f32 1.0, %v1149
    %v1151 = vmul.f32 %v1148, %v1150
    %v1152 = vadd.f32 %v1148, %v1151
    %vm1153 = vweird.f32 %v1147
    %vm1154 = vweird.f32 %v1148
    %vm1155 = vmor %vm1153, %vm1154
    %v1156 = vsel %vm1155, %v1148, %v1152
    %v1157 = vand.u32 2147483647, %v1147
    %vm1158 = vcmp.eq.f32.partialorder %v1157, 8.507059e+37
    %v1159 = vand.u32 %v1147, 2147483648
    %v1160 = vor.u32 1.1754944e-38, %v1159
    %v1161 = vsel %vm1158, %v1160, %v1156
    %v1162 = vmul.f32 1.0, %v1161
    %v1163 = vadd.f32 %v1141, %v1115
    %v1164 = vxor.u32 %v1163, 2147483648
    %v1165 = vmul.f32 %v1164, 1.442695
    %v1166 = vpow.pop %v1165
    %v1167 = vadd.f32 %v1166, 1.0
    %v1168 = vrcp.pop %v1167
    %v1169 = vmul.f32 %v1167, %v1168
    %v1170 = vsub.f32 1.0, %v1169
    %v1171 = vmul.f32 %v1168, %v1170
    %v1172 = vadd.f32 %v1168, %v1171
    %vm1173 = vweird.f32 %v1167
    %vm1174 = vweird.f32 %v1168
    %vm1175 = vmor %vm1173, %vm1174
    %v1176 = vsel %vm1175, %v1168, %v1172
    %v1177 = vand.u32 2147483647, %v1167
    %vm1178 = vcmp.eq.f32.partialorder %v1177, 8.507059e+37
    %v1179 = vand.u32 %v1167, 2147483648
    %v1180 = vor.u32 1.1754944e-38, %v1179
    %v1181 = vsel %vm1178, %v1180, %v1176
    %v1182 = vmul.f32 1.0, %v1181
    %v1183 = vmul.f32 %v1162, %v1135
    %v1184 = vadd.f32 %v1142, %v1183
    %v1185 = vtanh.pop %v1184
    %v1186 = vsub.f32 %v819, %v1185
    %v1187 = vmul.f32 %v1182, %v1186
    %v1188 = vadd.f32 %v1185, %v1187
    %v1189 = vadd.f32 %v1188, %v1018
    %v1190 = vld [vmem:[%s6] sm:$0xff]
    %v1191 = vld [vmem:[%s6 + $0x8] sm:$0xff]
    %v1192 = vld [vmem:[%s6 + $0x10] sm:$0xff]
    %v1193 = vld [vmem:[%s6 + $0x18] sm:$0xff]
    %v1194 = vld [vmem:[%s6 + $0x20] sm:$0xff]
    %v1195 = vld [vmem:[%s6 + $0x28] sm:$0xff]
    %v1196 = vld [vmem:[%s6 + $0x30] sm:$0xff]
    %v1197 = vld [vmem:[%s6 + $0x38] sm:$0xff]
    %v1198 = vld [vmem:[%s6 + $0x40] sm:$0xff]
    %v1199 = vld [vmem:[%s6 + $0x48] sm:$0xff]
    %v1200 = vld [vmem:[%s6 + $0x50] sm:$0xff]
    %v1201 = vld [vmem:[%s6 + $0x58] sm:$0xff]
    %v1202 = vld [vmem:[%s6 + $0x60] sm:$0xff]
    %v1203 = vld [vmem:[%s6 + $0x68] sm:$0xff]
    %v1204 = vld [vmem:[%s6 + $0x70] sm:$0xff]
    %v1205 = vld [vmem:[%s6 + $0x78] sm:$0xff]
    %v1206 = vld [vmem:[%s6 + $0x80] sm:$0xff]
    %v1207 = vld [vmem:[%s6 + $0x88] sm:$0xff]
    %v1208 = vld [vmem:[%s6 + $0x90] sm:$0xff]
    %v1209 = vld [vmem:[%s6 + $0x98] sm:$0xff]
    %v1210 = vld [vmem:[%s6 + $0xa0] sm:$0xff]
    %v1211 = vld [vmem:[%s6 + $0xa8] sm:$0xff]
    %v1212 = vld [vmem:[%s6 + $0xb0] sm:$0xff]
    %v1213 = vld [vmem:[%s6 + $0xb8] sm:$0xff]
    %v1214 = vld [vmem:[%s6 + $0xc0] sm:$0xff]
    %v1215 = vld [vmem:[%s6 + $0xc8] sm:$0xff]
    %v1216 = vld [vmem:[%s6 + $0xd0] sm:$0xff]
    %v1217 = vld [vmem:[%s6 + $0xd8] sm:$0xff]
    %v1218 = vld [vmem:[%s6 + $0xe0] sm:$0xff]
    %v1219 = vld [vmem:[%s6 + $0xe8] sm:$0xff]
    %v1220 = vld [vmem:[%s6 + $0xf0] sm:$0xff]
    %v1221 = vld [vmem:[%s6 + $0xf8] sm:$0xff]
    %v1222 = vld [vmem:[%s6 + $0x100] sm:$0xff]
    %v1223 = vld [vmem:[%s6 + $0x108] sm:$0xff]
    %v1224 = vld [vmem:[%s6 + $0x110] sm:$0xff]
    %v1225 = vld [vmem:[%s6 + $0x118] sm:$0xff]
    %v1226 = vld [vmem:[%s6 + $0x120] sm:$0xff]
    %v1227 = vld [vmem:[%s6 + $0x128] sm:$0xff]
    %v1228 = vld [vmem:[%s6 + $0x130] sm:$0xff]
    %v1229 = vld [vmem:[%s6 + $0x138] sm:$0xff]
    %v1230 = vld [vmem:[%s6 + $0x140] sm:$0xff]
    %v1231 = vld [vmem:[%s6 + $0x148] sm:$0xff]
    %v1232 = vld [vmem:[%s6 + $0x150] sm:$0xff]
    %v1233 = vld [vmem:[%s6 + $0x158] sm:$0xff]
    %v1234 = vld [vmem:[%s6 + $0x160] sm:$0xff]
    %v1235 = vld [vmem:[%s6 + $0x168] sm:$0xff]
    %v1236 = vld [vmem:[%s6 + $0x170] sm:$0xff]
    %v1237 = vld [vmem:[%s6 + $0x178] sm:$0xff]
    %v1238 = vld [vmem:[%s6 + $0x180] sm:$0xff]
    %v1239 = vld [vmem:[%s6 + $0x188] sm:$0xff]
    %v1240 = vld [vmem:[%s6 + $0x190] sm:$0xff]
    %v1241 = vld [vmem:[%s6 + $0x198] sm:$0xff]
    %v1242 = vld [vmem:[%s6 + $0x1a0] sm:$0xff]
    %v1243 = vld [vmem:[%s6 + $0x1a8] sm:$0xff]
    %v1244 = vld [vmem:[%s6 + $0x1b0] sm:$0xff]
    %v1245 = vld [vmem:[%s6 + $0x1b8] sm:$0xff]
    %v1246 = vld [vmem:[%s6 + $0x1c0] sm:$0xff]
    %v1247 = vld [vmem:[%s6 + $0x1c8] sm:$0xff]
    %v1248 = vld [vmem:[%s6 + $0x1d0] sm:$0xff]
    %v1249 = vld [vmem:[%s6 + $0x1d8] sm:$0xff]
    %v1250 = vld [vmem:[%s6 + $0x1e0] sm:$0xff]
    %v1251 = vld [vmem:[%s6 + $0x1e8] sm:$0xff]
    %v1252 = vld [vmem:[%s6 + $0x1f0] sm:$0xff]
    %v1253 = vld [vmem:[%s6 + $0x1f8] sm:$0xff]
    %v1254 = vld [vmem:[%s7] sm:$0xf]
    %v1256 = vperm.slane %v1254, 0
    %v1257 = vperm.slane %v1254, 1
    %v1258 = vperm.slane %v1254, 2
    %v1259 = vperm.slane %v1254, 3
    %1264 = vmatpush.msra.mxu0 %v1250
    %1265 = vmatpush.msra.mxu0 %v1246
    %1266 = vmatpush.msra.mxu0 %v1242
    %1267 = vmatpush.msra.mxu0 %v1238
    %1268 = vmatpush.msra.mxu0 %v1234
    %1269 = vmatpush.msra.mxu0 %v1230
    %1270 = vmatpush.msra.mxu0 %v1226
    %1271 = vmatpush.msra.mxu0 %v1222
    %1272 = vmatpush.msra.mxu0 %v1218
    %1273 = vmatpush.msra.mxu0 %v1214
    %1274 = vmatpush.msra.mxu0 %v1210
    %1275 = vmatpush.msra.mxu0 %v1206
    %1276 = vmatpush.msra.mxu0 %v1202
    %1277 = vmatpush.msra.mxu0 %v1198
    %1278 = vmatpush.msra.mxu0 %v1194
    %1279 = vmatpush.msra.mxu0 %v1190
    %1280 = vmatmul.f32.gmra.mxu0 %v1189
    %v1281 = vpop.f32.mrf.mxu0
    %v1282 = vadd.f32 %v1256, %v1281
    %1283 = vdwg.mxu0
    %1284 = vmatpush.msra.mxu0 %v1251
    %1285 = vmatpush.msra.mxu0 %v1247
    %1286 = vmatpush.msra.mxu0 %v1243
    %1287 = vmatpush.msra.mxu0 %v1239
    %1288 = vmatpush.msra.mxu0 %v1235
    %1289 = vmatpush.msra.mxu0 %v1231
    %1290 = vmatpush.msra.mxu0 %v1227
    %1291 = vmatpush.msra.mxu0 %v1223
    %1292 = vmatpush.msra.mxu0 %v1219
    %1293 = vmatpush.msra.mxu0 %v1215
    %1294 = vmatpush.msra.mxu0 %v1211
    %1295 = vmatpush.msra.mxu0 %v1207
    %1296 = vmatpush.msra.mxu0 %v1203
    %1297 = vmatpush.msra.mxu0 %v1199
    %1298 = vmatpush.msra.mxu0 %v1195
    %1299 = vmatpush.msra.mxu0 %v1191
    %1300 = vmatmul.f32.gmra.mxu0 %v1189
    %v1301 = vpop.f32.mrf.mxu0
    %v1302 = vadd.f32 %v1257, %v1301
    %1303 = vdwg.mxu0
    %1304 = vmatpush.msra.mxu0 %v1252
    %1305 = vmatpush.msra.mxu0 %v1248
    %1306 = vmatpush.msra.mxu0 %v1244
    %1307 = vmatpush.msra.mxu0 %v1240
    %1308 = vmatpush.msra.mxu0 %v1236
    %1309 = vmatpush.msra.mxu0 %v1232
    %1310 = vmatpush.msra.mxu0 %v1228
    %1311 = vmatpush.msra.mxu0 %v1224
    %1312 = vmatpush.msra.mxu0 %v1220
    %1313 = vmatpush.msra.mxu0 %v1216
    %1314 = vmatpush.msra.mxu0 %v1212
    %1315 = vmatpush.msra.mxu0 %v1208
    %1316 = vmatpush.msra.mxu0 %v1204
    %1317 = vmatpush.msra.mxu0 %v1200
    %1318 = vmatpush.msra.mxu0 %v1196
    %1319 = vmatpush.msra.mxu0 %v1192
    %1320 = vmatmul.f32.gmra.mxu0 %v1189
    %v1321 = vpop.f32.mrf.mxu0
    %v1322 = vadd.f32 %v1258, %v1321
    %1323 = vdwg.mxu0
    %1324 = vmatpush.msra.mxu0 %v1253
    %1325 = vmatpush.msra.mxu0 %v1249
    %1326 = vmatpush.msra.mxu0 %v1245
    %1327 = vmatpush.msra.mxu0 %v1241
    %1328 = vmatpush.msra.mxu0 %v1237
    %1329 = vmatpush.msra.mxu0 %v1233
    %1330 = vmatpush.msra.mxu0 %v1229
    %1331 = vmatpush.msra.mxu0 %v1225
    %1332 = vmatpush.msra.mxu0 %v1221
    %1333 = vmatpush.msra.mxu0 %v1217
    %1334 = vmatpush.msra.mxu0 %v1213
    %1335 = vmatpush.msra.mxu0 %v1209
    %1336 = vmatpush.msra.mxu0 %v1205
    %1337 = vmatpush.msra.mxu0 %v1201
    %1338 = vmatpush.msra.mxu0 %v1197
    %1339 = vmatpush.msra.mxu0 %v1193
    %1340 = vmatmul.f32.gmra.mxu0 %v1189
    %v1341 = vpop.f32.mrf.mxu0
    %v1342 = vadd.f32 %v1259, %v1341
    %1343 = vdwg.mxu0
    %v1344 = vxor.u32 %v1282, 2147483648
    %v1345 = vmul.f32 %v1344, 1.442695
    %v1346 = vpow.pop %v1345
    %v1347 = vadd.f32 %v1346, 1.0
    %v1348 = vrcp.pop %v1347
    %v1349 = vmul.f32 %v1347, %v1348
    %v1350 = vsub.f32 1.0, %v1349
    %v1351 = vmul.f32 %v1348, %v1350
    %v1352 = vadd.f32 %v1348, %v1351
    %vm1353 = vweird.f32 %v1347
    %vm1354 = vweird.f32 %v1348
    %vm1355 = vmor %vm1353, %vm1354
    %v1356 = vsel %vm1355, %v1348, %v1352
    %v1357 = vand.u32 2147483647, %v1347
    %vm1358 = vcmp.eq.f32.partialorder %v1357, 8.507059e+37
    %v1359 = vand.u32 %v1347, 2147483648
    %v1360 = vor.u32 1.1754944e-38, %v1359
    %v1361 = vsel %vm1358, %v1360, %v1356
    %v1362 = vmul.f32 1.0, %v1361
    %v1363 = vxor.u32 %v1302, 2147483648
    %v1364 = vmul.f32 %v1363, 1.442695
    %v1365 = vpow.pop %v1364
    %v1366 = vadd.f32 %v1365, 1.0
    %v1367 = vrcp.pop %v1366
    %v1368 = vmul.f32 %v1366, %v1367
    %v1369 = vsub.f32 1.0, %v1368
    %v1370 = vmul.f32 %v1367, %v1369
    %v1371 = vadd.f32 %v1367, %v1370
    %vm1372 = vweird.f32 %v1366
    %vm1373 = vweird.f32 %v1367
    %vm1374 = vmor %vm1372, %vm1373
    %v1375 = vsel %vm1374, %v1367, %v1371
    %v1376 = vand.u32 2147483647, %v1366
    %vm1377 = vcmp.eq.f32.partialorder %v1376, 8.507059e+37
    %v1378 = vand.u32 %v1366, 2147483648
    %v1379 = vor.u32 1.1754944e-38, %v1378
    %v1380 = vsel %vm1377, %v1379, %v1375
    %v1381 = vmul.f32 1.0, %v1380
    %v1382 = vmul.f32 %v1362, %v1342
    %v1383 = vadd.f32 %v1322, %v1382
    %v1384 = vtanh.pop %v1383
    %v1385 = vsub.f32 %v1018, %v1384
    %v1386 = vmul.f32 %v1381, %v1385
    %v1387 = vadd.f32 %v1384, %v1386
    %s1388 = scalar_lea.vmem [#allocation3], 16
    %1389 = vst [vmem:[%s1388] sm:$0xff] %v1387
    %v1390 = vld [vmem:[#allocation7] sm:$0xff]
    %v1391 = vld [vmem:[#allocation7 + $0x8] sm:$0xff]
    %v1392 = vld [vmem:[#allocation7 + $0x10] sm:$0xff]
    %v1393 = vld [vmem:[#allocation7 + $0x18] sm:$0xff]
    %v1394 = vld [vmem:[#allocation7 + $0x20] sm:$0xff]
    %v1395 = vld [vmem:[#allocation7 + $0x28] sm:$0xff]
    %v1396 = vld [vmem:[#allocation7 + $0x30] sm:$0xff]
    %v1397 = vld [vmem:[#allocation7 + $0x38] sm:$0xff]
    %v1398 = vld [vmem:[#allocation7 + $0x40] sm:$0xff]
    %v1399 = vld [vmem:[#allocation7 + $0x48] sm:$0xff]
    %v1400 = vld [vmem:[#allocation7 + $0x50] sm:$0xff]
    %v1401 = vld [vmem:[#allocation7 + $0x58] sm:$0xff]
    %v1402 = vld [vmem:[#allocation7 + $0x60] sm:$0xff]
    %v1403 = vld [vmem:[#allocation7 + $0x68] sm:$0xff]
    %v1404 = vld [vmem:[#allocation7 + $0x70] sm:$0xff]
    %v1405 = vld [vmem:[#allocation7 + $0x78] sm:$0xff]
    %v1406 = vld [vmem:[#allocation7 + $0x80] sm:$0xff]
    %v1407 = vld [vmem:[#allocation7 + $0x88] sm:$0xff]
    %v1408 = vld [vmem:[#allocation7 + $0x90] sm:$0xff]
    %v1409 = vld [vmem:[#allocation7 + $0x98] sm:$0xff]
    %v1410 = vld [vmem:[#allocation7 + $0xa0] sm:$0xff]
    %v1411 = vld [vmem:[#allocation7 + $0xa8] sm:$0xff]
    %v1412 = vld [vmem:[#allocation7 + $0xb0] sm:$0xff]
    %v1413 = vld [vmem:[#allocation7 + $0xb8] sm:$0xff]
    %v1414 = vld [vmem:[#allocation7 + $0xc0] sm:$0xff]
    %v1415 = vld [vmem:[#allocation7 + $0xc8] sm:$0xff]
    %v1416 = vld [vmem:[#allocation7 + $0xd0] sm:$0xff]
    %v1417 = vld [vmem:[#allocation7 + $0xd8] sm:$0xff]
    %v1418 = vld [vmem:[#allocation7 + $0xe0] sm:$0xff]
    %v1419 = vld [vmem:[#allocation7 + $0xe8] sm:$0xff]
    %v1420 = vld [vmem:[#allocation7 + $0xf0] sm:$0xff]
    %v1421 = vld [vmem:[#allocation7 + $0xf8] sm:$0xff]
    %v1422 = vld [vmem:[#allocation7 + $0x100] sm:$0xff]
    %v1423 = vld [vmem:[#allocation7 + $0x108] sm:$0xff]
    %v1424 = vld [vmem:[#allocation7 + $0x110] sm:$0xff]
    %v1425 = vld [vmem:[#allocation7 + $0x118] sm:$0xff]
    %v1426 = vld [vmem:[#allocation7 + $0x120] sm:$0xff]
    %v1427 = vld [vmem:[#allocation7 + $0x128] sm:$0xff]
    %v1428 = vld [vmem:[#allocation7 + $0x130] sm:$0xff]
    %v1429 = vld [vmem:[#allocation7 + $0x138] sm:$0xff]
    %v1430 = vld [vmem:[#allocation7 + $0x140] sm:$0xff]
    %v1431 = vld [vmem:[#allocation7 + $0x148] sm:$0xff]
    %v1432 = vld [vmem:[#allocation7 + $0x150] sm:$0xff]
    %v1433 = vld [vmem:[#allocation7 + $0x158] sm:$0xff]
    %v1434 = vld [vmem:[#allocation7 + $0x160] sm:$0xff]
    %v1435 = vld [vmem:[#allocation7 + $0x168] sm:$0xff]
    %v1436 = vld [vmem:[#allocation7 + $0x170] sm:$0xff]
    %v1437 = vld [vmem:[#allocation7 + $0x178] sm:$0xff]
    %v1438 = vld [vmem:[%s5] sm:$0x7]
    %v1440 = vperm.slane %v1438, 0
    %v1441 = vperm.slane %v1438, 1
    %v1442 = vperm.slane %v1438, 2
    %1446 = vmatpush.msra.mxu0 %v1435
    %1447 = vmatpush.msra.mxu0 %v1432
    %1448 = vmatpush.msra.mxu0 %v1429
    %1449 = vmatpush.msra.mxu0 %v1426
    %1450 = vmatpush.msra.mxu0 %v1423
    %1451 = vmatpush.msra.mxu0 %v1420
    %1452 = vmatpush.msra.mxu0 %v1417
    %1453 = vmatpush.msra.mxu0 %v1414
    %1454 = vmatpush.msra.mxu0 %v1411
    %1455 = vmatpush.msra.mxu0 %v1408
    %1456 = vmatpush.msra.mxu0 %v1405
    %1457 = vmatpush.msra.mxu0 %v1402
    %1458 = vmatpush.msra.mxu0 %v1399
    %1459 = vmatpush.msra.mxu0 %v1396
    %1460 = vmatpush.msra.mxu0 %v1393
    %1461 = vmatpush.msra.mxu0 %v1390
    %1462 = vmatmul.f32.gmra.mxu0 %v1188
    %v1463 = vpop.f32.mrf.mxu0
    %v1464 = vadd.f32 %v1440, %v1463
    %1465 = vdwg.mxu0
    %1466 = vmatpush.msra.mxu0 %v1436
    %1467 = vmatpush.msra.mxu0 %v1433
    %1468 = vmatpush.msra.mxu0 %v1430
    %1469 = vmatpush.msra.mxu0 %v1427
    %1470 = vmatpush.msra.mxu0 %v1424
    %1471 = vmatpush.msra.mxu0 %v1421
    %1472 = vmatpush.msra.mxu0 %v1418
    %1473 = vmatpush.msra.mxu0 %v1415
    %1474 = vmatpush.msra.mxu0 %v1412
    %1475 = vmatpush.msra.mxu0 %v1409
    %1476 = vmatpush.msra.mxu0 %v1406
    %1477 = vmatpush.msra.mxu0 %v1403
    %1478 = vmatpush.msra.mxu0 %v1400
    %1479 = vmatpush.msra.mxu0 %v1397
    %1480 = vmatpush.msra.mxu0 %v1394
    %1481 = vmatpush.msra.mxu0 %v1391
    %1482 = vmatmul.f32.gmra.mxu0 %v1188
    %v1483 = vpop.f32.mrf.mxu0
    %v1484 = vadd.f32 %v1441, %v1483
    %1485 = vdwg.mxu0
    %1486 = vmatpush.msra.mxu0 %v1437
    %1487 = vmatpush.msra.mxu0 %v1434
    %1488 = vmatpush.msra.mxu0 %v1431
    %1489 = vmatpush.msra.mxu0 %v1428
    %1490 = vmatpush.msra.mxu0 %v1425
    %1491 = vmatpush.msra.mxu0 %v1422
    %1492 = vmatpush.msra.mxu0 %v1419
    %1493 = vmatpush.msra.mxu0 %v1416
    %1494 = vmatpush.msra.mxu0 %v1413
    %1495 = vmatpush.msra.mxu0 %v1410
    %1496 = vmatpush.msra.mxu0 %v1407
    %1497 = vmatpush.msra.mxu0 %v1404
    %1498 = vmatpush.msra.mxu0 %v1401
    %1499 = vmatpush.msra.mxu0 %v1398
    %1500 = vmatpush.msra.mxu0 %v1395
    %1501 = vmatpush.msra.mxu0 %v1392
    %1502 = vmatmul.f32.gmra.mxu0 %v1188
    %v1503 = vpop.f32.mrf.mxu0
    %v1504 = vadd.f32 %v1442, %v1503
    %1505 = vdwg.mxu0
    %s1506 = smul.u32 3, 3
    %s1507 = smul.addr %s1506, 8
    %s1508 = scalar_lea.vmem [#allocation2], %s1507
    %v1509 = vld [vmem:[%s1508] sm:$0xff]
    %v1510 = vld [vmem:[%s1508 + $0x8] sm:$0xff]
    %v1511 = vld [vmem:[%s1508 + $0x10] sm:$0xff]
    %v1512 = vadd.f32 %v1509, %v1464
    %v1513 = vxor.u32 %v1512, 2147483648
    %v1514 = vmul.f32 %v1513, 1.442695
    %v1515 = vpow.pop %v1514
    %v1516 = vadd.f32 %v1515, 1.0
    %v1517 = vrcp.pop %v1516
    %v1518 = vmul.f32 %v1516, %v1517
    %v1519 = vsub.f32 1.0, %v1518
    %v1520 = vmul.f32 %v1517, %v1519
    %v1521 = vadd.f32 %v1517, %v1520
    %vm1522 = vweird.f32 %v1516
    %vm1523 = vweird.f32 %v1517
    %vm1524 = vmor %vm1522, %vm1523
    %v1525 = vsel %vm1524, %v1517, %v1521
    %v1526 = vand.u32 2147483647, %v1516
    %vm1527 = vcmp.eq.f32.partialorder %v1526, 8.507059e+37
    %v1528 = vand.u32 %v1516, 2147483648
    %v1529 = vor.u32 1.1754944e-38, %v1528
    %v1530 = vsel %vm1527, %v1529, %v1525
    %v1531 = vmul.f32 1.0, %v1530
    %v1532 = vadd.f32 %v1510, %v1484
    %v1533 = vxor.u32 %v1532, 2147483648
    %v1534 = vmul.f32 %v1533, 1.442695
    %v1535 = vpow.pop %v1534
    %v1536 = vadd.f32 %v1535, 1.0
    %v1537 = vrcp.pop %v1536
    %v1538 = vmul.f32 %v1536, %v1537
    %v1539 = vsub.f32 1.0, %v1538
    %v1540 = vmul.f32 %v1537, %v1539
    %v1541 = vadd.f32 %v1537, %v1540
    %vm1542 = vweird.f32 %v1536
    %vm1543 = vweird.f32 %v1537
    %vm1544 = vmor %vm1542, %vm1543
    %v1545 = vsel %vm1544, %v1537, %v1541
    %v1546 = vand.u32 2147483647, %v1536
    %vm1547 = vcmp.eq.f32.partialorder %v1546, 8.507059e+37
    %v1548 = vand.u32 %v1536, 2147483648
    %v1549 = vor.u32 1.1754944e-38, %v1548
    %v1550 = vsel %vm1547, %v1549, %v1545
    %v1551 = vmul.f32 1.0, %v1550
    %v1552 = vmul.f32 %v1531, %v1504
    %v1553 = vadd.f32 %v1511, %v1552
    %v1554 = vtanh.pop %v1553
    %v1555 = vsub.f32 %v1188, %v1554
    %v1556 = vmul.f32 %v1551, %v1555
    %v1557 = vadd.f32 %v1554, %v1556
    %v1558 = vadd.f32 %v1557, %v1387
    %v1559 = vld [vmem:[%s6] sm:$0xff]
    %v1560 = vld [vmem:[%s6 + $0x8] sm:$0xff]
    %v1561 = vld [vmem:[%s6 + $0x10] sm:$0xff]
    %v1562 = vld [vmem:[%s6 + $0x18] sm:$0xff]
    %v1563 = vld [vmem:[%s6 + $0x20] sm:$0xff]
    %v1564 = vld [vmem:[%s6 + $0x28] sm:$0xff]
    %v1565 = vld [vmem:[%s6 + $0x30] sm:$0xff]
    %v1566 = vld [vmem:[%s6 + $0x38] sm:$0xff]
    %v1567 = vld [vmem:[%s6 + $0x40] sm:$0xff]
    %v1568 = vld [vmem:[%s6 + $0x48] sm:$0xff]
    %v1569 = vld [vmem:[%s6 + $0x50] sm:$0xff]
    %v1570 = vld [vmem:[%s6 + $0x58] sm:$0xff]
    %v1571 = vld [vmem:[%s6 + $0x60] sm:$0xff]
    %v1572 = vld [vmem:[%s6 + $0x68] sm:$0xff]
    %v1573 = vld [vmem:[%s6 + $0x70] sm:$0xff]
    %v1574 = vld [vmem:[%s6 + $0x78] sm:$0xff]
    %v1575 = vld [vmem:[%s6 + $0x80] sm:$0xff]
    %v1576 = vld [vmem:[%s6 + $0x88] sm:$0xff]
    %v1577 = vld [vmem:[%s6 + $0x90] sm:$0xff]
    %v1578 = vld [vmem:[%s6 + $0x98] sm:$0xff]
    %v1579 = vld [vmem:[%s6 + $0xa0] sm:$0xff]
    %v1580 = vld [vmem:[%s6 + $0xa8] sm:$0xff]
    %v1581 = vld [vmem:[%s6 + $0xb0] sm:$0xff]
    %v1582 = vld [vmem:[%s6 + $0xb8] sm:$0xff]
    %v1583 = vld [vmem:[%s6 + $0xc0] sm:$0xff]
    %v1584 = vld [vmem:[%s6 + $0xc8] sm:$0xff]
    %v1585 = vld [vmem:[%s6 + $0xd0] sm:$0xff]
    %v1586 = vld [vmem:[%s6 + $0xd8] sm:$0xff]
    %v1587 = vld [vmem:[%s6 + $0xe0] sm:$0xff]
    %v1588 = vld [vmem:[%s6 + $0xe8] sm:$0xff]
    %v1589 = vld [vmem:[%s6 + $0xf0] sm:$0xff]
    %v1590 = vld [vmem:[%s6 + $0xf8] sm:$0xff]
    %v1591 = vld [vmem:[%s6 + $0x100] sm:$0xff]
    %v1592 = vld [vmem:[%s6 + $0x108] sm:$0xff]
    %v1593 = vld [vmem:[%s6 + $0x110] sm:$0xff]
    %v1594 = vld [vmem:[%s6 + $0x118] sm:$0xff]
    %v1595 = vld [vmem:[%s6 + $0x120] sm:$0xff]
    %v1596 = vld [vmem:[%s6 + $0x128] sm:$0xff]
    %v1597 = vld [vmem:[%s6 + $0x130] sm:$0xff]
    %v1598 = vld [vmem:[%s6 + $0x138] sm:$0xff]
    %v1599 = vld [vmem:[%s6 + $0x140] sm:$0xff]
    %v1600 = vld [vmem:[%s6 + $0x148] sm:$0xff]
    %v1601 = vld [vmem:[%s6 + $0x150] sm:$0xff]
    %v1602 = vld [vmem:[%s6 + $0x158] sm:$0xff]
    %v1603 = vld [vmem:[%s6 + $0x160] sm:$0xff]
    %v1604 = vld [vmem:[%s6 + $0x168] sm:$0xff]
    %v1605 = vld [vmem:[%s6 + $0x170] sm:$0xff]
    %v1606 = vld [vmem:[%s6 + $0x178] sm:$0xff]
    %v1607 = vld [vmem:[%s6 + $0x180] sm:$0xff]
    %v1608 = vld [vmem:[%s6 + $0x188] sm:$0xff]
    %v1609 = vld [vmem:[%s6 + $0x190] sm:$0xff]
    %v1610 = vld [vmem:[%s6 + $0x198] sm:$0xff]
    %v1611 = vld [vmem:[%s6 + $0x1a0] sm:$0xff]
    %v1612 = vld [vmem:[%s6 + $0x1a8] sm:$0xff]
    %v1613 = vld [vmem:[%s6 + $0x1b0] sm:$0xff]
    %v1614 = vld [vmem:[%s6 + $0x1b8] sm:$0xff]
    %v1615 = vld [vmem:[%s6 + $0x1c0] sm:$0xff]
    %v1616 = vld [vmem:[%s6 + $0x1c8] sm:$0xff]
    %v1617 = vld [vmem:[%s6 + $0x1d0] sm:$0xff]
    %v1618 = vld [vmem:[%s6 + $0x1d8] sm:$0xff]
    %v1619 = vld [vmem:[%s6 + $0x1e0] sm:$0xff]
    %v1620 = vld [vmem:[%s6 + $0x1e8] sm:$0xff]
    %v1621 = vld [vmem:[%s6 + $0x1f0] sm:$0xff]
    %v1622 = vld [vmem:[%s6 + $0x1f8] sm:$0xff]
    %v1623 = vld [vmem:[%s7] sm:$0xf]
    %v1625 = vperm.slane %v1623, 0
    %v1626 = vperm.slane %v1623, 1
    %v1627 = vperm.slane %v1623, 2
    %v1628 = vperm.slane %v1623, 3
    %1633 = vmatpush.msra.mxu0 %v1619
    %1634 = vmatpush.msra.mxu0 %v1615
    %1635 = vmatpush.msra.mxu0 %v1611
    %1636 = vmatpush.msra.mxu0 %v1607
    %1637 = vmatpush.msra.mxu0 %v1603
    %1638 = vmatpush.msra.mxu0 %v1599
    %1639 = vmatpush.msra.mxu0 %v1595
    %1640 = vmatpush.msra.mxu0 %v1591
    %1641 = vmatpush.msra.mxu0 %v1587
    %1642 = vmatpush.msra.mxu0 %v1583
    %1643 = vmatpush.msra.mxu0 %v1579
    %1644 = vmatpush.msra.mxu0 %v1575
    %1645 = vmatpush.msra.mxu0 %v1571
    %1646 = vmatpush.msra.mxu0 %v1567
    %1647 = vmatpush.msra.mxu0 %v1563
    %1648 = vmatpush.msra.mxu0 %v1559
    %1649 = vmatmul.f32.gmra.mxu0 %v1558
    %v1650 = vpop.f32.mrf.mxu0
    %v1651 = vadd.f32 %v1625, %v1650
    %1652 = vdwg.mxu0
    %1653 = vmatpush.msra.mxu0 %v1620
    %1654 = vmatpush.msra.mxu0 %v1616
    %1655 = vmatpush.msra.mxu0 %v1612
    %1656 = vmatpush.msra.mxu0 %v1608
    %1657 = vmatpush.msra.mxu0 %v1604
    %1658 = vmatpush.msra.mxu0 %v1600
    %1659 = vmatpush.msra.mxu0 %v1596
    %1660 = vmatpush.msra.mxu0 %v1592
    %1661 = vmatpush.msra.mxu0 %v1588
    %1662 = vmatpush.msra.mxu0 %v1584
    %1663 = vmatpush.msra.mxu0 %v1580
    %1664 = vmatpush.msra.mxu0 %v1576
    %1665 = vmatpush.msra.mxu0 %v1572
    %1666 = vmatpush.msra.mxu0 %v1568
    %1667 = vmatpush.msra.mxu0 %v1564
    %1668 = vmatpush.msra.mxu0 %v1560
    %1669 = vmatmul.f32.gmra.mxu0 %v1558
    %v1670 = vpop.f32.mrf.mxu0
    %v1671 = vadd.f32 %v1626, %v1670
    %1672 = vdwg.mxu0
    %1673 = vmatpush.msra.mxu0 %v1621
    %1674 = vmatpush.msra.mxu0 %v1617
    %1675 = vmatpush.msra.mxu0 %v1613
    %1676 = vmatpush.msra.mxu0 %v1609
    %1677 = vmatpush.msra.mxu0 %v1605
    %1678 = vmatpush.msra.mxu0 %v1601
    %1679 = vmatpush.msra.mxu0 %v1597
    %1680 = vmatpush.msra.mxu0 %v1593
    %1681 = vmatpush.msra.mxu0 %v1589
    %1682 = vmatpush.msra.mxu0 %v1585
    %1683 = vmatpush.msra.mxu0 %v1581
    %1684 = vmatpush.msra.mxu0 %v1577
    %1685 = vmatpush.msra.mxu0 %v1573
    %1686 = vmatpush.msra.mxu0 %v1569
    %1687 = vmatpush.msra.mxu0 %v1565
    %1688 = vmatpush.msra.mxu0 %v1561
    %1689 = vmatmul.f32.gmra.mxu0 %v1558
    %v1690 = vpop.f32.mrf.mxu0
    %v1691 = vadd.f32 %v1627, %v1690
    %1692 = vdwg.mxu0
    %1693 = vmatpush.msra.mxu0 %v1622
    %1694 = vmatpush.msra.mxu0 %v1618
    %1695 = vmatpush.msra.mxu0 %v1614
    %1696 = vmatpush.msra.mxu0 %v1610
    %1697 = vmatpush.msra.mxu0 %v1606
    %1698 = vmatpush.msra.mxu0 %v1602
    %1699 = vmatpush.msra.mxu0 %v1598
    %1700 = vmatpush.msra.mxu0 %v1594
    %1701 = vmatpush.msra.mxu0 %v1590
    %1702 = vmatpush.msra.mxu0 %v1586
    %1703 = vmatpush.msra.mxu0 %v1582
    %1704 = vmatpush.msra.mxu0 %v1578
    %1705 = vmatpush.msra.mxu0 %v1574
    %1706 = vmatpush.msra.mxu0 %v1570
    %1707 = vmatpush.msra.mxu0 %v1566
    %1708 = vmatpush.msra.mxu0 %v1562
    %1709 = vmatmul.f32.gmra.mxu0 %v1558
    %v1710 = vpop.f32.mrf.mxu0
    %v1711 = vadd.f32 %v1628, %v1710
    %1712 = vdwg.mxu0
    %v1713 = vxor.u32 %v1651, 2147483648
    %v1714 = vmul.f32 %v1713, 1.442695
    %v1715 = vpow.pop %v1714
    %v1716 = vadd.f32 %v1715, 1.0
    %v1717 = vrcp.pop %v1716
    %v1718 = vmul.f32 %v1716, %v1717
    %v1719 = vsub.f32 1.0, %v1718
    %v1720 = vmul.f32 %v1717, %v1719
    %v1721 = vadd.f32 %v1717, %v1720
    %vm1722 = vweird.f32 %v1716
    %vm1723 = vweird.f32 %v1717
    %vm1724 = vmor %vm1722, %vm1723
    %v1725 = vsel %vm1724, %v1717, %v1721
    %v1726 = vand.u32 2147483647, %v1716
    %vm1727 = vcmp.eq.f32.partialorder %v1726, 8.507059e+37
    %v1728 = vand.u32 %v1716, 2147483648
    %v1729 = vor.u32 1.1754944e-38, %v1728
    %v1730 = vsel %vm1727, %v1729, %v1725
    %v1731 = vmul.f32 1.0, %v1730
    %v1732 = vxor.u32 %v1671, 2147483648
    %v1733 = vmul.f32 %v1732, 1.442695
    %v1734 = vpow.pop %v1733
    %v1735 = vadd.f32 %v1734, 1.0
    %v1736 = vrcp.pop %v1735
    %v1737 = vmul.f32 %v1735, %v1736
    %v1738 = vsub.f32 1.0, %v1737
    %v1739 = vmul.f32 %v1736, %v1738
    %v1740 = vadd.f32 %v1736, %v1739
    %vm1741 = vweird.f32 %v1735
    %vm1742 = vweird.f32 %v1736
    %vm1743 = vmor %vm1741, %vm1742
    %v1744 = vsel %vm1743, %v1736, %v1740
    %v1745 = vand.u32 2147483647, %v1735
    %vm1746 = vcmp.eq.f32.partialorder %v1745, 8.507059e+37
    %v1747 = vand.u32 %v1735, 2147483648
    %v1748 = vor.u32 1.1754944e-38, %v1747
    %v1749 = vsel %vm1746, %v1748, %v1744
    %v1750 = vmul.f32 1.0, %v1749
    %v1751 = vmul.f32 %v1731, %v1711
    %v1752 = vadd.f32 %v1691, %v1751
    %v1753 = vtanh.pop %v1752
    %v1754 = vsub.f32 %v1387, %v1753
    %v1755 = vmul.f32 %v1750, %v1754
    %v1756 = vadd.f32 %v1753, %v1755
    %s1757 = scalar_lea.vmem [#allocation3], 24
    %1758 = vst [vmem:[%s1757] sm:$0xff] %v1756
    %v1759 = vld [vmem:[#allocation7] sm:$0xff]
    %v1760 = vld [vmem:[#allocation7 + $0x8] sm:$0xff]
    %v1761 = vld [vmem:[#allocation7 + $0x10] sm:$0xff]
    %v1762 = vld [vmem:[#allocation7 + $0x18] sm:$0xff]
    %v1763 = vld [vmem:[#allocation7 + $0x20] sm:$0xff]
    %v1764 = vld [vmem:[#allocation7 + $0x28] sm:$0xff]
    %v1765 = vld [vmem:[#allocation7 + $0x30] sm:$0xff]
    %v1766 = vld [vmem:[#allocation7 + $0x38] sm:$0xff]
    %v1767 = vld [vmem:[#allocation7 + $0x40] sm:$0xff]
    %v1768 = vld [vmem:[#allocation7 + $0x48] sm:$0xff]
    %v1769 = vld [vmem:[#allocation7 + $0x50] sm:$0xff]
    %v1770 = vld [vmem:[#allocation7 + $0x58] sm:$0xff]
    %v1771 = vld [vmem:[#allocation7 + $0x60] sm:$0xff]
    %v1772 = vld [vmem:[#allocation7 + $0x68] sm:$0xff]
    %v1773 = vld [vmem:[#allocation7 + $0x70] sm:$0xff]
    %v1774 = vld [vmem:[#allocation7 + $0x78] sm:$0xff]
    %v1775 = vld [vmem:[#allocation7 + $0x80] sm:$0xff]
    %v1776 = vld [vmem:[#allocation7 + $0x88] sm:$0xff]
    %v1777 = vld [vmem:[#allocation7 + $0x90] sm:$0xff]
    %v1778 = vld [vmem:[#allocation7 + $0x98] sm:$0xff]
    %v1779 = vld [vmem:[#allocation7 + $0xa0] sm:$0xff]
    %v1780 = vld [vmem:[#allocation7 + $0xa8] sm:$0xff]
    %v1781 = vld [vmem:[#allocation7 + $0xb0] sm:$0xff]
    %v1782 = vld [vmem:[#allocation7 + $0xb8] sm:$0xff]
    %v1783 = vld [vmem:[#allocation7 + $0xc0] sm:$0xff]
    %v1784 = vld [vmem:[#allocation7 + $0xc8] sm:$0xff]
    %v1785 = vld [vmem:[#allocation7 + $0xd0] sm:$0xff]
    %v1786 = vld [vmem:[#allocation7 + $0xd8] sm:$0xff]
    %v1787 = vld [vmem:[#allocation7 + $0xe0] sm:$0xff]
    %v1788 = vld [vmem:[#allocation7 + $0xe8] sm:$0xff]
    %v1789 = vld [vmem:[#allocation7 + $0xf0] sm:$0xff]
    %v1790 = vld [vmem:[#allocation7 + $0xf8] sm:$0xff]
    %v1791 = vld [vmem:[#allocation7 + $0x100] sm:$0xff]
    %v1792 = vld [vmem:[#allocation7 + $0x108] sm:$0xff]
    %v1793 = vld [vmem:[#allocation7 + $0x110] sm:$0xff]
    %v1794 = vld [vmem:[#allocation7 + $0x118] sm:$0xff]
    %v1795 = vld [vmem:[#allocation7 + $0x120] sm:$0xff]
    %v1796 = vld [vmem:[#allocation7 + $0x128] sm:$0xff]
    %v1797 = vld [vmem:[#allocation7 + $0x130] sm:$0xff]
    %v1798 = vld [vmem:[#allocation7 + $0x138] sm:$0xff]
    %v1799 = vld [vmem:[#allocation7 + $0x140] sm:$0xff]
    %v1800 = vld [vmem:[#allocation7 + $0x148] sm:$0xff]
    %v1801 = vld [vmem:[#allocation7 + $0x150] sm:$0xff]
    %v1802 = vld [vmem:[#allocation7 + $0x158] sm:$0xff]
    %v1803 = vld [vmem:[#allocation7 + $0x160] sm:$0xff]
    %v1804 = vld [vmem:[#allocation7 + $0x168] sm:$0xff]
    %v1805 = vld [vmem:[#allocation7 + $0x170] sm:$0xff]
    %v1806 = vld [vmem:[#allocation7 + $0x178] sm:$0xff]
    %v1807 = vld [vmem:[%s5] sm:$0x7]
    %v1809 = vperm.slane %v1807, 0
    %v1810 = vperm.slane %v1807, 1
    %v1811 = vperm.slane %v1807, 2
    %1815 = vmatpush.msra.mxu0 %v1804
    %1816 = vmatpush.msra.mxu0 %v1801
    %1817 = vmatpush.msra.mxu0 %v1798
    %1818 = vmatpush.msra.mxu0 %v1795
    %1819 = vmatpush.msra.mxu0 %v1792
    %1820 = vmatpush.msra.mxu0 %v1789
    %1821 = vmatpush.msra.mxu0 %v1786
    %1822 = vmatpush.msra.mxu0 %v1783
    %1823 = vmatpush.msra.mxu0 %v1780
    %1824 = vmatpush.msra.mxu0 %v1777
    %1825 = vmatpush.msra.mxu0 %v1774
    %1826 = vmatpush.msra.mxu0 %v1771
    %1827 = vmatpush.msra.mxu0 %v1768
    %1828 = vmatpush.msra.mxu0 %v1765
    %1829 = vmatpush.msra.mxu0 %v1762
    %1830 = vmatpush.msra.mxu0 %v1759
    %1831 = vmatmul.f32.gmra.mxu0 %v1557
    %v1832 = vpop.f32.mrf.mxu0
    %v1833 = vadd.f32 %v1809, %v1832
    %1834 = vdwg.mxu0
    %1835 = vmatpush.msra.mxu0 %v1805
    %1836 = vmatpush.msra.mxu0 %v1802
    %1837 = vmatpush.msra.mxu0 %v1799
    %1838 = vmatpush.msra.mxu0 %v1796
    %1839 = vmatpush.msra.mxu0 %v1793
    %1840 = vmatpush.msra.mxu0 %v1790
    %1841 = vmatpush.msra.mxu0 %v1787
    %1842 = vmatpush.msra.mxu0 %v1784
    %1843 = vmatpush.msra.mxu0 %v1781
    %1844 = vmatpush.msra.mxu0 %v1778
    %1845 = vmatpush.msra.mxu0 %v1775
    %1846 = vmatpush.msra.mxu0 %v1772
    %1847 = vmatpush.msra.mxu0 %v1769
    %1848 = vmatpush.msra.mxu0 %v1766
    %1849 = vmatpush.msra.mxu0 %v1763
    %1850 = vmatpush.msra.mxu0 %v1760
    %1851 = vmatmul.f32.gmra.mxu0 %v1557
    %v1852 = vpop.f32.mrf.mxu0
    %v1853 = vadd.f32 %v1810, %v1852
    %1854 = vdwg.mxu0
    %1855 = vmatpush.msra.mxu0 %v1806
    %1856 = vmatpush.msra.mxu0 %v1803
    %1857 = vmatpush.msra.mxu0 %v1800
    %1858 = vmatpush.msra.mxu0 %v1797
    %1859 = vmatpush.msra.mxu0 %v1794
    %1860 = vmatpush.msra.mxu0 %v1791
    %1861 = vmatpush.msra.mxu0 %v1788
    %1862 = vmatpush.msra.mxu0 %v1785
    %1863 = vmatpush.msra.mxu0 %v1782
    %1864 = vmatpush.msra.mxu0 %v1779
    %1865 = vmatpush.msra.mxu0 %v1776
    %1866 = vmatpush.msra.mxu0 %v1773
    %1867 = vmatpush.msra.mxu0 %v1770
    %1868 = vmatpush.msra.mxu0 %v1767
    %1869 = vmatpush.msra.mxu0 %v1764
    %1870 = vmatpush.msra.mxu0 %v1761
    %1871 = vmatmul.f32.gmra.mxu0 %v1557
    %v1872 = vpop.f32.mrf.mxu0
    %v1873 = vadd.f32 %v1811, %v1872
    %1874 = vdwg.mxu0
    %s1875 = smul.u32 4, 3
    %s1876 = smul.addr %s1875, 8
    %s1877 = scalar_lea.vmem [#allocation2], %s1876
    %v1878 = vld [vmem:[%s1877] sm:$0xff]
    %v1879 = vld [vmem:[%s1877 + $0x8] sm:$0xff]
    %v1880 = vld [vmem:[%s1877 + $0x10] sm:$0xff]
    %v1881 = vadd.f32 %v1878, %v1833
    %v1882 = vxor.u32 %v1881, 2147483648
    %v1883 = vmul.f32 %v1882, 1.442695
    %v1884 = vpow.pop %v1883
    %v1885 = vadd.f32 %v1884, 1.0
    %v1886 = vrcp.pop %v1885
    %v1887 = vmul.f32 %v1885, %v1886
    %v1888 = vsub.f32 1.0, %v1887
    %v1889 = vmul.f32 %v1886, %v1888
    %v1890 = vadd.f32 %v1886, %v1889
    %vm1891 = vweird.f32 %v1885
    %vm1892 = vweird.f32 %v1886
    %vm1893 = vmor %vm1891, %vm1892
    %v1894 = vsel %vm1893, %v1886, %v1890
    %v1895 = vand.u32 2147483647, %v1885
    %vm1896 = vcmp.eq.f32.partialorder %v1895, 8.507059e+37
    %v1897 = vand.u32 %v1885, 2147483648
    %v1898 = vor.u32 1.1754944e-38, %v1897
    %v1899 = vsel %vm1896, %v1898, %v1894
    %v1900 = vmul.f32 1.0, %v1899
    %v1901 = vadd.f32 %v1879, %v1853
    %v1902 = vxor.u32 %v1901, 2147483648
    %v1903 = vmul.f32 %v1902, 1.442695
    %v1904 = vpow.pop %v1903
    %v1905 = vadd.f32 %v1904, 1.0
    %v1906 = vrcp.pop %v1905
    %v1907 = vmul.f32 %v1905, %v1906
    %v1908 = vsub.f32 1.0, %v1907
    %v1909 = vmul.f32 %v1906, %v1908
    %v1910 = vadd.f32 %v1906, %v1909
    %vm1911 = vweird.f32 %v1905
    %vm1912 = vweird.f32 %v1906
    %vm1913 = vmor %vm1911, %vm1912
    %v1914 = vsel %vm1913, %v1906, %v1910
    %v1915 = vand.u32 2147483647, %v1905
    %vm1916 = vcmp.eq.f32.partialorder %v1915, 8.507059e+37
    %v1917 = vand.u32 %v1905, 2147483648
    %v1918 = vor.u32 1.1754944e-38, %v1917
    %v1919 = vsel %vm1916, %v1918, %v1914
    %v1920 = vmul.f32 1.0, %v1919
    %v1921 = vmul.f32 %v1900, %v1873
    %v1922 = vadd.f32 %v1880, %v1921
    %v1923 = vtanh.pop %v1922
    %v1924 = vsub.f32 %v1557, %v1923
    %v1925 = vmul.f32 %v1920, %v1924
    %v1926 = vadd.f32 %v1923, %v1925
    %v1927 = vadd.f32 %v1926, %v1756
    %v1928 = vld [vmem:[%s6] sm:$0xff]
    %v1929 = vld [vmem:[%s6 + $0x8] sm:$0xff]
    %v1930 = vld [vmem:[%s6 + $0x10] sm:$0xff]
    %v1931 = vld [vmem:[%s6 + $0x18] sm:$0xff]
    %v1932 = vld [vmem:[%s6 + $0x20] sm:$0xff]
    %v1933 = vld [vmem:[%s6 + $0x28] sm:$0xff]
    %v1934 = vld [vmem:[%s6 + $0x30] sm:$0xff]
    %v1935 = vld [vmem:[%s6 + $0x38] sm:$0xff]
    %v1936 = vld [vmem:[%s6 + $0x40] sm:$0xff]
    %v1937 = vld [vmem:[%s6 + $0x48] sm:$0xff]
    %v1938 = vld [vmem:[%s6 + $0x50] sm:$0xff]
    %v1939 = vld [vmem:[%s6 + $0x58] sm:$0xff]
    %v1940 = vld [vmem:[%s6 + $0x60] sm:$0xff]
    %v1941 = vld [vmem:[%s6 + $0x68] sm:$0xff]
    %v1942 = vld [vmem:[%s6 + $0x70] sm:$0xff]
    %v1943 = vld [vmem:[%s6 + $0x78] sm:$0xff]
    %v1944 = vld [vmem:[%s6 + $0x80] sm:$0xff]
    %v1945 = vld [vmem:[%s6 + $0x88] sm:$0xff]
    %v1946 = vld [vmem:[%s6 + $0x90] sm:$0xff]
    %v1947 = vld [vmem:[%s6 + $0x98] sm:$0xff]
    %v1948 = vld [vmem:[%s6 + $0xa0] sm:$0xff]
    %v1949 = vld [vmem:[%s6 + $0xa8] sm:$0xff]
    %v1950 = vld [vmem:[%s6 + $0xb0] sm:$0xff]
    %v1951 = vld [vmem:[%s6 + $0xb8] sm:$0xff]
    %v1952 = vld [vmem:[%s6 + $0xc0] sm:$0xff]
    %v1953 = vld [vmem:[%s6 + $0xc8] sm:$0xff]
    %v1954 = vld [vmem:[%s6 + $0xd0] sm:$0xff]
    %v1955 = vld [vmem:[%s6 + $0xd8] sm:$0xff]
    %v1956 = vld [vmem:[%s6 + $0xe0] sm:$0xff]
    %v1957 = vld [vmem:[%s6 + $0xe8] sm:$0xff]
    %v1958 = vld [vmem:[%s6 + $0xf0] sm:$0xff]
    %v1959 = vld [vmem:[%s6 + $0xf8] sm:$0xff]
    %v1960 = vld [vmem:[%s6 + $0x100] sm:$0xff]
    %v1961 = vld [vmem:[%s6 + $0x108] sm:$0xff]
    %v1962 = vld [vmem:[%s6 + $0x110] sm:$0xff]
    %v1963 = vld [vmem:[%s6 + $0x118] sm:$0xff]
    %v1964 = vld [vmem:[%s6 + $0x120] sm:$0xff]
    %v1965 = vld [vmem:[%s6 + $0x128] sm:$0xff]
    %v1966 = vld [vmem:[%s6 + $0x130] sm:$0xff]
    %v1967 = vld [vmem:[%s6 + $0x138] sm:$0xff]
    %v1968 = vld [vmem:[%s6 + $0x140] sm:$0xff]
    %v1969 = vld [vmem:[%s6 + $0x148] sm:$0xff]
    %v1970 = vld [vmem:[%s6 + $0x150] sm:$0xff]
    %v1971 = vld [vmem:[%s6 + $0x158] sm:$0xff]
    %v1972 = vld [vmem:[%s6 + $0x160] sm:$0xff]
    %v1973 = vld [vmem:[%s6 + $0x168] sm:$0xff]
    %v1974 = vld [vmem:[%s6 + $0x170] sm:$0xff]
    %v1975 = vld [vmem:[%s6 + $0x178] sm:$0xff]
    %v1976 = vld [vmem:[%s6 + $0x180] sm:$0xff]
    %v1977 = vld [vmem:[%s6 + $0x188] sm:$0xff]
    %v1978 = vld [vmem:[%s6 + $0x190] sm:$0xff]
    %v1979 = vld [vmem:[%s6 + $0x198] sm:$0xff]
    %v1980 = vld [vmem:[%s6 + $0x1a0] sm:$0xff]
    %v1981 = vld [vmem:[%s6 + $0x1a8] sm:$0xff]
    %v1982 = vld [vmem:[%s6 + $0x1b0] sm:$0xff]
    %v1983 = vld [vmem:[%s6 + $0x1b8] sm:$0xff]
    %v1984 = vld [vmem:[%s6 + $0x1c0] sm:$0xff]
    %v1985 = vld [vmem:[%s6 + $0x1c8] sm:$0xff]
    %v1986 = vld [vmem:[%s6 + $0x1d0] sm:$0xff]
    %v1987 = vld [vmem:[%s6 + $0x1d8] sm:$0xff]
    %v1988 = vld [vmem:[%s6 + $0x1e0] sm:$0xff]
    %v1989 = vld [vmem:[%s6 + $0x1e8] sm:$0xff]
    %v1990 = vld [vmem:[%s6 + $0x1f0] sm:$0xff]
    %v1991 = vld [vmem:[%s6 + $0x1f8] sm:$0xff]
    %v1992 = vld [vmem:[%s7] sm:$0xf]
    %v1994 = vperm.slane %v1992, 0
    %v1995 = vperm.slane %v1992, 1
    %v1996 = vperm.slane %v1992, 2
    %v1997 = vperm.slane %v1992, 3
    %2002 = vmatpush.msra.mxu0 %v1988
    %2003 = vmatpush.msra.mxu0 %v1984
    %2004 = vmatpush.msra.mxu0 %v1980
    %2005 = vmatpush.msra.mxu0 %v1976
    %2006 = vmatpush.msra.mxu0 %v1972
    %2007 = vmatpush.msra.mxu0 %v1968
    %2008 = vmatpush.msra.mxu0 %v1964
    %2009 = vmatpush.msra.mxu0 %v1960
    %2010 = vmatpush.msra.mxu0 %v1956
    %2011 = vmatpush.msra.mxu0 %v1952
    %2012 = vmatpush.msra.mxu0 %v1948
    %2013 = vmatpush.msra.mxu0 %v1944
    %2014 = vmatpush.msra.mxu0 %v1940
    %2015 = vmatpush.msra.mxu0 %v1936
    %2016 = vmatpush.msra.mxu0 %v1932
    %2017 = vmatpush.msra.mxu0 %v1928
    %2018 = vmatmul.f32.gmra.mxu0 %v1927
    %v2019 = vpop.f32.mrf.mxu0
    %v2020 = vadd.f32 %v1994, %v2019
    %2021 = vdwg.mxu0
    %2022 = vmatpush.msra.mxu0 %v1989
    %2023 = vmatpush.msra.mxu0 %v1985
    %2024 = vmatpush.msra.mxu0 %v1981
    %2025 = vmatpush.msra.mxu0 %v1977
    %2026 = vmatpush.msra.mxu0 %v1973
    %2027 = vmatpush.msra.mxu0 %v1969
    %2028 = vmatpush.msra.mxu0 %v1965
    %2029 = vmatpush.msra.mxu0 %v1961
    %2030 = vmatpush.msra.mxu0 %v1957
    %2031 = vmatpush.msra.mxu0 %v1953
    %2032 = vmatpush.msra.mxu0 %v1949
    %2033 = vmatpush.msra.mxu0 %v1945
    %2034 = vmatpush.msra.mxu0 %v1941
    %2035 = vmatpush.msra.mxu0 %v1937
    %2036 = vmatpush.msra.mxu0 %v1933
    %2037 = vmatpush.msra.mxu0 %v1929
    %2038 = vmatmul.f32.gmra.mxu0 %v1927
    %v2039 = vpop.f32.mrf.mxu0
    %v2040 = vadd.f32 %v1995, %v2039
    %2041 = vdwg.mxu0
    %2042 = vmatpush.msra.mxu0 %v1990
    %2043 = vmatpush.msra.mxu0 %v1986
    %2044 = vmatpush.msra.mxu0 %v1982
    %2045 = vmatpush.msra.mxu0 %v1978
    %2046 = vmatpush.msra.mxu0 %v1974
    %2047 = vmatpush.msra.mxu0 %v1970
    %2048 = vmatpush.msra.mxu0 %v1966
    %2049 = vmatpush.msra.mxu0 %v1962
    %2050 = vmatpush.msra.mxu0 %v1958
    %2051 = vmatpush.msra.mxu0 %v1954
    %2052 = vmatpush.msra.mxu0 %v1950
    %2053 = vmatpush.msra.mxu0 %v1946
    %2054 = vmatpush.msra.mxu0 %v1942
    %2055 = vmatpush.msra.mxu0 %v1938
    %2056 = vmatpush.msra.mxu0 %v1934
    %2057 = vmatpush.msra.mxu0 %v1930
    %2058 = vmatmul.f32.gmra.mxu0 %v1927
    %v2059 = vpop.f32.mrf.mxu0
    %v2060 = vadd.f32 %v1996, %v2059
    %2061 = vdwg.mxu0
    %2062 = vmatpush.msra.mxu0 %v1991
    %2063 = vmatpush.msra.mxu0 %v1987
    %2064 = vmatpush.msra.mxu0 %v1983
    %2065 = vmatpush.msra.mxu0 %v1979
    %2066 = vmatpush.msra.mxu0 %v1975
    %2067 = vmatpush.msra.mxu0 %v1971
    %2068 = vmatpush.msra.mxu0 %v1967
    %2069 = vmatpush.msra.mxu0 %v1963
    %2070 = vmatpush.msra.mxu0 %v1959
    %2071 = vmatpush.msra.mxu0 %v1955
    %2072 = vmatpush.msra.mxu0 %v1951
    %2073 = vmatpush.msra.mxu0 %v1947
    %2074 = vmatpush.msra.mxu0 %v1943
    %2075 = vmatpush.msra.mxu0 %v1939
    %2076 = vmatpush.msra.mxu0 %v1935
    %2077 = vmatpush.msra.mxu0 %v1931
    %2078 = vmatmul.f32.gmra.mxu0 %v1927
    %v2079 = vpop.f32.mrf.mxu0
    %v2080 = vadd.f32 %v1997, %v2079
    %2081 = vdwg.mxu0
    %v2082 = vxor.u32 %v2020, 2147483648
    %v2083 = vmul.f32 %v2082, 1.442695
    %v2084 = vpow.pop %v2083
    %v2085 = vadd.f32 %v2084, 1.0
    %v2086 = vrcp.pop %v2085
    %v2087 = vmul.f32 %v2085, %v2086
    %v2088 = vsub.f32 1.0, %v2087
    %v2089 = vmul.f32 %v2086, %v2088
    %v2090 = vadd.f32 %v2086, %v2089
    %vm2091 = vweird.f32 %v2085
    %vm2092 = vweird.f32 %v2086
    %vm2093 = vmor %vm2091, %vm2092
    %v2094 = vsel %vm2093, %v2086, %v2090
    %v2095 = vand.u32 2147483647, %v2085
    %vm2096 = vcmp.eq.f32.partialorder %v2095, 8.507059e+37
    %v2097 = vand.u32 %v2085, 2147483648
    %v2098 = vor.u32 1.1754944e-38, %v2097
    %v2099 = vsel %vm2096, %v2098, %v2094
    %v2100 = vmul.f32 1.0, %v2099
    %v2101 = vxor.u32 %v2040, 2147483648
    %v2102 = vmul.f32 %v2101, 1.442695
    %v2103 = vpow.pop %v2102
    %v2104 = vadd.f32 %v2103, 1.0
    %v2105 = vrcp.pop %v2104
    %v2106 = vmul.f32 %v2104, %v2105
    %v2107 = vsub.f32 1.0, %v2106
    %v2108 = vmul.f32 %v2105, %v2107
    %v2109 = vadd.f32 %v2105, %v2108
    %vm2110 = vweird.f32 %v2104
    %vm2111 = vweird.f32 %v2105
    %vm2112 = vmor %vm2110, %vm2111
    %v2113 = vsel %vm2112, %v2105, %v2109
    %v2114 = vand.u32 2147483647, %v2104
    %vm2115 = vcmp.eq.f32.partialorder %v2114, 8.507059e+37
    %v2116 = vand.u32 %v2104, 2147483648
    %v2117 = vor.u32 1.1754944e-38, %v2116
    %v2118 = vsel %vm2115, %v2117, %v2113
    %v2119 = vmul.f32 1.0, %v2118
    %v2120 = vmul.f32 %v2100, %v2080
    %v2121 = vadd.f32 %v2060, %v2120
    %v2122 = vtanh.pop %v2121
    %v2123 = vsub.f32 %v1756, %v2122
    %v2124 = vmul.f32 %v2119, %v2123
    %v2125 = vadd.f32 %v2122, %v2124
    %s2126 = scalar_lea.vmem [#allocation3], 32
    %2127 = vst [vmem:[%s2126] sm:$0xff] %v2125
    %v2128 = vld [vmem:[#allocation7] sm:$0xff]
    %v2129 = vld [vmem:[#allocation7 + $0x8] sm:$0xff]
    %v2130 = vld [vmem:[#allocation7 + $0x10] sm:$0xff]
    %v2131 = vld [vmem:[#allocation7 + $0x18] sm:$0xff]
    %v2132 = vld [vmem:[#allocation7 + $0x20] sm:$0xff]
    %v2133 = vld [vmem:[#allocation7 + $0x28] sm:$0xff]
    %v2134 = vld [vmem:[#allocation7 + $0x30] sm:$0xff]
    %v2135 = vld [vmem:[#allocation7 + $0x38] sm:$0xff]
    %v2136 = vld [vmem:[#allocation7 + $0x40] sm:$0xff]
    %v2137 = vld [vmem:[#allocation7 + $0x48] sm:$0xff]
    %v2138 = vld [vmem:[#allocation7 + $0x50] sm:$0xff]
    %v2139 = vld [vmem:[#allocation7 + $0x58] sm:$0xff]
    %v2140 = vld [vmem:[#allocation7 + $0x60] sm:$0xff]
    %v2141 = vld [vmem:[#allocation7 + $0x68] sm:$0xff]
    %v2142 = vld [vmem:[#allocation7 + $0x70] sm:$0xff]
    %v2143 = vld [vmem:[#allocation7 + $0x78] sm:$0xff]
    %v2144 = vld [vmem:[#allocation7 + $0x80] sm:$0xff]
    %v2145 = vld [vmem:[#allocation7 + $0x88] sm:$0xff]
    %v2146 = vld [vmem:[#allocation7 + $0x90] sm:$0xff]
    %v2147 = vld [vmem:[#allocation7 + $0x98] sm:$0xff]
    %v2148 = vld [vmem:[#allocation7 + $0xa0] sm:$0xff]
    %v2149 = vld [vmem:[#allocation7 + $0xa8] sm:$0xff]
    %v2150 = vld [vmem:[#allocation7 + $0xb0] sm:$0xff]
    %v2151 = vld [vmem:[#allocation7 + $0xb8] sm:$0xff]
    %v2152 = vld [vmem:[#allocation7 + $0xc0] sm:$0xff]
    %v2153 = vld [vmem:[#allocation7 + $0xc8] sm:$0xff]
    %v2154 = vld [vmem:[#allocation7 + $0xd0] sm:$0xff]
    %v2155 = vld [vmem:[#allocation7 + $0xd8] sm:$0xff]
    %v2156 = vld [vmem:[#allocation7 + $0xe0] sm:$0xff]
    %v2157 = vld [vmem:[#allocation7 + $0xe8] sm:$0xff]
    %v2158 = vld [vmem:[#allocation7 + $0xf0] sm:$0xff]
    %v2159 = vld [vmem:[#allocation7 + $0xf8] sm:$0xff]
    %v2160 = vld [vmem:[#allocation7 + $0x100] sm:$0xff]
    %v2161 = vld [vmem:[#allocation7 + $0x108] sm:$0xff]
    %v2162 = vld [vmem:[#allocation7 + $0x110] sm:$0xff]
    %v2163 = vld [vmem:[#allocation7 + $0x118] sm:$0xff]
    %v2164 = vld [vmem:[#allocation7 + $0x120] sm:$0xff]
    %v2165 = vld [vmem:[#allocation7 + $0x128] sm:$0xff]
    %v2166 = vld [vmem:[#allocation7 + $0x130] sm:$0xff]
    %v2167 = vld [vmem:[#allocation7 + $0x138] sm:$0xff]
    %v2168 = vld [vmem:[#allocation7 + $0x140] sm:$0xff]
    %v2169 = vld [vmem:[#allocation7 + $0x148] sm:$0xff]
    %v2170 = vld [vmem:[#allocation7 + $0x150] sm:$0xff]
    %v2171 = vld [vmem:[#allocation7 + $0x158] sm:$0xff]
    %v2172 = vld [vmem:[#allocation7 + $0x160] sm:$0xff]
    %v2173 = vld [vmem:[#allocation7 + $0x168] sm:$0xff]
    %v2174 = vld [vmem:[#allocation7 + $0x170] sm:$0xff]
    %v2175 = vld [vmem:[#allocation7 + $0x178] sm:$0xff]
    %v2176 = vld [vmem:[%s5] sm:$0x7]
    %v2178 = vperm.slane %v2176, 0
    %v2179 = vperm.slane %v2176, 1
    %v2180 = vperm.slane %v2176, 2
    %2184 = vmatpush.msra.mxu0 %v2173
    %2185 = vmatpush.msra.mxu0 %v2170
    %2186 = vmatpush.msra.mxu0 %v2167
    %2187 = vmatpush.msra.mxu0 %v2164
    %2188 = vmatpush.msra.mxu0 %v2161
    %2189 = vmatpush.msra.mxu0 %v2158
    %2190 = vmatpush.msra.mxu0 %v2155
    %2191 = vmatpush.msra.mxu0 %v2152
    %2192 = vmatpush.msra.mxu0 %v2149
    %2193 = vmatpush.msra.mxu0 %v2146
    %2194 = vmatpush.msra.mxu0 %v2143
    %2195 = vmatpush.msra.mxu0 %v2140
    %2196 = vmatpush.msra.mxu0 %v2137
    %2197 = vmatpush.msra.mxu0 %v2134
    %2198 = vmatpush.msra.mxu0 %v2131
    %2199 = vmatpush.msra.mxu0 %v2128
    %2200 = vmatmul.f32.gmra.mxu0 %v1926
    %v2201 = vpop.f32.mrf.mxu0
    %v2202 = vadd.f32 %v2178, %v2201
    %2203 = vdwg.mxu0
    %2204 = vmatpush.msra.mxu0 %v2174
    %2205 = vmatpush.msra.mxu0 %v2171
    %2206 = vmatpush.msra.mxu0 %v2168
    %2207 = vmatpush.msra.mxu0 %v2165
    %2208 = vmatpush.msra.mxu0 %v2162
    %2209 = vmatpush.msra.mxu0 %v2159
    %2210 = vmatpush.msra.mxu0 %v2156
    %2211 = vmatpush.msra.mxu0 %v2153
    %2212 = vmatpush.msra.mxu0 %v2150
    %2213 = vmatpush.msra.mxu0 %v2147
    %2214 = vmatpush.msra.mxu0 %v2144
    %2215 = vmatpush.msra.mxu0 %v2141
    %2216 = vmatpush.msra.mxu0 %v2138
    %2217 = vmatpush.msra.mxu0 %v2135
    %2218 = vmatpush.msra.mxu0 %v2132
    %2219 = vmatpush.msra.mxu0 %v2129
    %2220 = vmatmul.f32.gmra.mxu0 %v1926
    %v2221 = vpop.f32.mrf.mxu0
    %v2222 = vadd.f32 %v2179, %v2221
    %2223 = vdwg.mxu0
    %2224 = vmatpush.msra.mxu0 %v2175
    %2225 = vmatpush.msra.mxu0 %v2172
    %2226 = vmatpush.msra.mxu0 %v2169
    %2227 = vmatpush.msra.mxu0 %v2166
    %2228 = vmatpush.msra.mxu0 %v2163
    %2229 = vmatpush.msra.mxu0 %v2160
    %2230 = vmatpush.msra.mxu0 %v2157
    %2231 = vmatpush.msra.mxu0 %v2154
    %2232 = vmatpush.msra.mxu0 %v2151
    %2233 = vmatpush.msra.mxu0 %v2148
    %2234 = vmatpush.msra.mxu0 %v2145
    %2235 = vmatpush.msra.mxu0 %v2142
    %2236 = vmatpush.msra.mxu0 %v2139
    %2237 = vmatpush.msra.mxu0 %v2136
    %2238 = vmatpush.msra.mxu0 %v2133
    %2239 = vmatpush.msra.mxu0 %v2130
    %2240 = vmatmul.f32.gmra.mxu0 %v1926
    %v2241 = vpop.f32.mrf.mxu0
    %v2242 = vadd.f32 %v2180, %v2241
    %2243 = vdwg.mxu0
    %s2244 = smul.u32 5, 3
    %s2245 = smul.addr %s2244, 8
    %s2246 = scalar_lea.vmem [#allocation2], %s2245
    %v2247 = vld [vmem:[%s2246] sm:$0xff]
    %v2248 = vld [vmem:[%s2246 + $0x8] sm:$0xff]
    %v2249 = vld [vmem:[%s2246 + $0x10] sm:$0xff]
    %v2250 = vadd.f32 %v2247, %v2202
    %v2251 = vxor.u32 %v2250, 2147483648
    %v2252 = vmul.f32 %v2251, 1.442695
    %v2253 = vpow.pop %v2252
    %v2254 = vadd.f32 %v2253, 1.0
    %v2255 = vrcp.pop %v2254
    %v2256 = vmul.f32 %v2254, %v2255
    %v2257 = vsub.f32 1.0, %v2256
    %v2258 = vmul.f32 %v2255, %v2257
    %v2259 = vadd.f32 %v2255, %v2258
    %vm2260 = vweird.f32 %v2254
    %vm2261 = vweird.f32 %v2255
    %vm2262 = vmor %vm2260, %vm2261
    %v2263 = vsel %vm2262, %v2255, %v2259
    %v2264 = vand.u32 2147483647, %v2254
    %vm2265 = vcmp.eq.f32.partialorder %v2264, 8.507059e+37
    %v2266 = vand.u32 %v2254, 2147483648
    %v2267 = vor.u32 1.1754944e-38, %v2266
    %v2268 = vsel %vm2265, %v2267, %v2263
    %v2269 = vmul.f32 1.0, %v2268
    %v2270 = vadd.f32 %v2248, %v2222
    %v2271 = vxor.u32 %v2270, 2147483648
    %v2272 = vmul.f32 %v2271, 1.442695
    %v2273 = vpow.pop %v2272
    %v2274 = vadd.f32 %v2273, 1.0
    %v2275 = vrcp.pop %v2274
    %v2276 = vmul.f32 %v2274, %v2275
    %v2277 = vsub.f32 1.0, %v2276
    %v2278 = vmul.f32 %v2275, %v2277
    %v2279 = vadd.f32 %v2275, %v2278
    %vm2280 = vweird.f32 %v2274
    %vm2281 = vweird.f32 %v2275
    %vm2282 = vmor %vm2280, %vm2281
    %v2283 = vsel %vm2282, %v2275, %v2279
    %v2284 = vand.u32 2147483647, %v2274
    %vm2285 = vcmp.eq.f32.partialorder %v2284, 8.507059e+37
    %v2286 = vand.u32 %v2274, 2147483648
    %v2287 = vor.u32 1.1754944e-38, %v2286
    %v2288 = vsel %vm2285, %v2287, %v2283
    %v2289 = vmul.f32 1.0, %v2288
    %v2290 = vmul.f32 %v2269, %v2242
    %v2291 = vadd.f32 %v2249, %v2290
    %v2292 = vtanh.pop %v2291
    %v2293 = vsub.f32 %v1926, %v2292
    %v2294 = vmul.f32 %v2289, %v2293
    %v2295 = vadd.f32 %v2292, %v2294
    %v2296 = vadd.f32 %v2295, %v2125
    %v2297 = vld [vmem:[%s6] sm:$0xff]
    %v2298 = vld [vmem:[%s6 + $0x8] sm:$0xff]
    %v2299 = vld [vmem:[%s6 + $0x10] sm:$0xff]
    %v2300 = vld [vmem:[%s6 + $0x18] sm:$0xff]
    %v2301 = vld [vmem:[%s6 + $0x20] sm:$0xff]
    %v2302 = vld [vmem:[%s6 + $0x28] sm:$0xff]
    %v2303 = vld [vmem:[%s6 + $0x30] sm:$0xff]
    %v2304 = vld [vmem:[%s6 + $0x38] sm:$0xff]
    %v2305 = vld [vmem:[%s6 + $0x40] sm:$0xff]
    %v2306 = vld [vmem:[%s6 + $0x48] sm:$0xff]
    %v2307 = vld [vmem:[%s6 + $0x50] sm:$0xff]
    %v2308 = vld [vmem:[%s6 + $0x58] sm:$0xff]
    %v2309 = vld [vmem:[%s6 + $0x60] sm:$0xff]
    %v2310 = vld [vmem:[%s6 + $0x68] sm:$0xff]
    %v2311 = vld [vmem:[%s6 + $0x70] sm:$0xff]
    %v2312 = vld [vmem:[%s6 + $0x78] sm:$0xff]
    %v2313 = vld [vmem:[%s6 + $0x80] sm:$0xff]
    %v2314 = vld [vmem:[%s6 + $0x88] sm:$0xff]
    %v2315 = vld [vmem:[%s6 + $0x90] sm:$0xff]
    %v2316 = vld [vmem:[%s6 + $0x98] sm:$0xff]
    %v2317 = vld [vmem:[%s6 + $0xa0] sm:$0xff]
    %v2318 = vld [vmem:[%s6 + $0xa8] sm:$0xff]
    %v2319 = vld [vmem:[%s6 + $0xb0] sm:$0xff]
    %v2320 = vld [vmem:[%s6 + $0xb8] sm:$0xff]
    %v2321 = vld [vmem:[%s6 + $0xc0] sm:$0xff]
    %v2322 = vld [vmem:[%s6 + $0xc8] sm:$0xff]
    %v2323 = vld [vmem:[%s6 + $0xd0] sm:$0xff]
    %v2324 = vld [vmem:[%s6 + $0xd8] sm:$0xff]
    %v2325 = vld [vmem:[%s6 + $0xe0] sm:$0xff]
    %v2326 = vld [vmem:[%s6 + $0xe8] sm:$0xff]
    %v2327 = vld [vmem:[%s6 + $0xf0] sm:$0xff]
    %v2328 = vld [vmem:[%s6 + $0xf8] sm:$0xff]
    %v2329 = vld [vmem:[%s6 + $0x100] sm:$0xff]
    %v2330 = vld [vmem:[%s6 + $0x108] sm:$0xff]
    %v2331 = vld [vmem:[%s6 + $0x110] sm:$0xff]
    %v2332 = vld [vmem:[%s6 + $0x118] sm:$0xff]
    %v2333 = vld [vmem:[%s6 + $0x120] sm:$0xff]
    %v2334 = vld [vmem:[%s6 + $0x128] sm:$0xff]
    %v2335 = vld [vmem:[%s6 + $0x130] sm:$0xff]
    %v2336 = vld [vmem:[%s6 + $0x138] sm:$0xff]
    %v2337 = vld [vmem:[%s6 + $0x140] sm:$0xff]
    %v2338 = vld [vmem:[%s6 + $0x148] sm:$0xff]
    %v2339 = vld [vmem:[%s6 + $0x150] sm:$0xff]
    %v2340 = vld [vmem:[%s6 + $0x158] sm:$0xff]
    %v2341 = vld [vmem:[%s6 + $0x160] sm:$0xff]
    %v2342 = vld [vmem:[%s6 + $0x168] sm:$0xff]
    %v2343 = vld [vmem:[%s6 + $0x170] sm:$0xff]
    %v2344 = vld [vmem:[%s6 + $0x178] sm:$0xff]
    %v2345 = vld [vmem:[%s6 + $0x180] sm:$0xff]
    %v2346 = vld [vmem:[%s6 + $0x188] sm:$0xff]
    %v2347 = vld [vmem:[%s6 + $0x190] sm:$0xff]
    %v2348 = vld [vmem:[%s6 + $0x198] sm:$0xff]
    %v2349 = vld [vmem:[%s6 + $0x1a0] sm:$0xff]
    %v2350 = vld [vmem:[%s6 + $0x1a8] sm:$0xff]
    %v2351 = vld [vmem:[%s6 + $0x1b0] sm:$0xff]
    %v2352 = vld [vmem:[%s6 + $0x1b8] sm:$0xff]
    %v2353 = vld [vmem:[%s6 + $0x1c0] sm:$0xff]
    %v2354 = vld [vmem:[%s6 + $0x1c8] sm:$0xff]
    %v2355 = vld [vmem:[%s6 + $0x1d0] sm:$0xff]
    %v2356 = vld [vmem:[%s6 + $0x1d8] sm:$0xff]
    %v2357 = vld [vmem:[%s6 + $0x1e0] sm:$0xff]
    %v2358 = vld [vmem:[%s6 + $0x1e8] sm:$0xff]
    %v2359 = vld [vmem:[%s6 + $0x1f0] sm:$0xff]
    %v2360 = vld [vmem:[%s6 + $0x1f8] sm:$0xff]
    %v2361 = vld [vmem:[%s7] sm:$0xf]
    %v2363 = vperm.slane %v2361, 0
    %v2364 = vperm.slane %v2361, 1
    %v2365 = vperm.slane %v2361, 2
    %v2366 = vperm.slane %v2361, 3
    %2371 = vmatpush.msra.mxu0 %v2357
    %2372 = vmatpush.msra.mxu0 %v2353
    %2373 = vmatpush.msra.mxu0 %v2349
    %2374 = vmatpush.msra.mxu0 %v2345
    %2375 = vmatpush.msra.mxu0 %v2341
    %2376 = vmatpush.msra.mxu0 %v2337
    %2377 = vmatpush.msra.mxu0 %v2333
    %2378 = vmatpush.msra.mxu0 %v2329
    %2379 = vmatpush.msra.mxu0 %v2325
    %2380 = vmatpush.msra.mxu0 %v2321
    %2381 = vmatpush.msra.mxu0 %v2317
    %2382 = vmatpush.msra.mxu0 %v2313
    %2383 = vmatpush.msra.mxu0 %v2309
    %2384 = vmatpush.msra.mxu0 %v2305
    %2385 = vmatpush.msra.mxu0 %v2301
    %2386 = vmatpush.msra.mxu0 %v2297
    %2387 = vmatmul.f32.gmra.mxu0 %v2296
    %v2388 = vpop.f32.mrf.mxu0
    %v2389 = vadd.f32 %v2363, %v2388
    %2390 = vdwg.mxu0
    %2391 = vmatpush.msra.mxu0 %v2358
    %2392 = vmatpush.msra.mxu0 %v2354
    %2393 = vmatpush.msra.mxu0 %v2350
    %2394 = vmatpush.msra.mxu0 %v2346
    %2395 = vmatpush.msra.mxu0 %v2342
    %2396 = vmatpush.msra.mxu0 %v2338
    %2397 = vmatpush.msra.mxu0 %v2334
    %2398 = vmatpush.msra.mxu0 %v2330
    %2399 = vmatpush.msra.mxu0 %v2326
    %2400 = vmatpush.msra.mxu0 %v2322
    %2401 = vmatpush.msra.mxu0 %v2318
    %2402 = vmatpush.msra.mxu0 %v2314
    %2403 = vmatpush.msra.mxu0 %v2310
    %2404 = vmatpush.msra.mxu0 %v2306
    %2405 = vmatpush.msra.mxu0 %v2302
    %2406 = vmatpush.msra.mxu0 %v2298
    %2407 = vmatmul.f32.gmra.mxu0 %v2296
    %v2408 = vpop.f32.mrf.mxu0
    %v2409 = vadd.f32 %v2364, %v2408
    %2410 = vdwg.mxu0
    %2411 = vmatpush.msra.mxu0 %v2359
    %2412 = vmatpush.msra.mxu0 %v2355
    %2413 = vmatpush.msra.mxu0 %v2351
    %2414 = vmatpush.msra.mxu0 %v2347
    %2415 = vmatpush.msra.mxu0 %v2343
    %2416 = vmatpush.msra.mxu0 %v2339
    %2417 = vmatpush.msra.mxu0 %v2335
    %2418 = vmatpush.msra.mxu0 %v2331
    %2419 = vmatpush.msra.mxu0 %v2327
    %2420 = vmatpush.msra.mxu0 %v2323
    %2421 = vmatpush.msra.mxu0 %v2319
    %2422 = vmatpush.msra.mxu0 %v2315
    %2423 = vmatpush.msra.mxu0 %v2311
    %2424 = vmatpush.msra.mxu0 %v2307
    %2425 = vmatpush.msra.mxu0 %v2303
    %2426 = vmatpush.msra.mxu0 %v2299
    %2427 = vmatmul.f32.gmra.mxu0 %v2296
    %v2428 = vpop.f32.mrf.mxu0
    %v2429 = vadd.f32 %v2365, %v2428
    %2430 = vdwg.mxu0
    %2431 = vmatpush.msra.mxu0 %v2360
    %2432 = vmatpush.msra.mxu0 %v2356
    %2433 = vmatpush.msra.mxu0 %v2352
    %2434 = vmatpush.msra.mxu0 %v2348
    %2435 = vmatpush.msra.mxu0 %v2344
    %2436 = vmatpush.msra.mxu0 %v2340
    %2437 = vmatpush.msra.mxu0 %v2336
    %2438 = vmatpush.msra.mxu0 %v2332
    %2439 = vmatpush.msra.mxu0 %v2328
    %2440 = vmatpush.msra.mxu0 %v2324
    %2441 = vmatpush.msra.mxu0 %v2320
    %2442 = vmatpush.msra.mxu0 %v2316
    %2443 = vmatpush.msra.mxu0 %v2312
    %2444 = vmatpush.msra.mxu0 %v2308
    %2445 = vmatpush.msra.mxu0 %v2304
    %2446 = vmatpush.msra.mxu0 %v2300
    %2447 = vmatmul.f32.gmra.mxu0 %v2296
    %v2448 = vpop.f32.mrf.mxu0
    %v2449 = vadd.f32 %v2366, %v2448
    %2450 = vdwg.mxu0
    %v2451 = vxor.u32 %v2389, 2147483648
    %v2452 = vmul.f32 %v2451, 1.442695
    %v2453 = vpow.pop %v2452
    %v2454 = vadd.f32 %v2453, 1.0
    %v2455 = vrcp.pop %v2454
    %v2456 = vmul.f32 %v2454, %v2455
    %v2457 = vsub.f32 1.0, %v2456
    %v2458 = vmul.f32 %v2455, %v2457
    %v2459 = vadd.f32 %v2455, %v2458
    %vm2460 = vweird.f32 %v2454
    %vm2461 = vweird.f32 %v2455
    %vm2462 = vmor %vm2460, %vm2461
    %v2463 = vsel %vm2462, %v2455, %v2459
    %v2464 = vand.u32 2147483647, %v2454
    %vm2465 = vcmp.eq.f32.partialorder %v2464, 8.507059e+37
    %v2466 = vand.u32 %v2454, 2147483648
    %v2467 = vor.u32 1.1754944e-38, %v2466
    %v2468 = vsel %vm2465, %v2467, %v2463
    %v2469 = vmul.f32 1.0, %v2468
    %v2470 = vxor.u32 %v2409, 2147483648
    %v2471 = vmul.f32 %v2470, 1.442695
    %v2472 = vpow.pop %v2471
    %v2473 = vadd.f32 %v2472, 1.0
    %v2474 = vrcp.pop %v2473
    %v2475 = vmul.f32 %v2473, %v2474
    %v2476 = vsub.f32 1.0, %v2475
    %v2477 = vmul.f32 %v2474, %v2476
    %v2478 = vadd.f32 %v2474, %v2477
    %vm2479 = vweird.f32 %v2473
    %vm2480 = vweird.f32 %v2474
    %vm2481 = vmor %vm2479, %vm2480
    %v2482 = vsel %vm2481, %v2474, %v2478
    %v2483 = vand.u32 2147483647, %v2473
    %vm2484 = vcmp.eq.f32.partialorder %v2483, 8.507059e+37
    %v2485 = vand.u32 %v2473, 2147483648
    %v2486 = vor.u32 1.1754944e-38, %v2485
    %v2487 = vsel %vm2484, %v2486, %v2482
    %v2488 = vmul.f32 1.0, %v2487
    %v2489 = vmul.f32 %v2469, %v2449
    %v2490 = vadd.f32 %v2429, %v2489
    %v2491 = vtanh.pop %v2490
    %v2492 = vsub.f32 %v2125, %v2491
    %v2493 = vmul.f32 %v2488, %v2492
    %v2494 = vadd.f32 %v2491, %v2493
    %s2495 = scalar_lea.vmem [#allocation3], 40
    %2496 = vst [vmem:[%s2495] sm:$0xff] %v2494
    %v2497 = vld [vmem:[#allocation7] sm:$0xff]
    %v2498 = vld [vmem:[#allocation7 + $0x8] sm:$0xff]
    %v2499 = vld [vmem:[#allocation7 + $0x10] sm:$0xff]
    %v2500 = vld [vmem:[#allocation7 + $0x18] sm:$0xff]
    %v2501 = vld [vmem:[#allocation7 + $0x20] sm:$0xff]
    %v2502 = vld [vmem:[#allocation7 + $0x28] sm:$0xff]
    %v2503 = vld [vmem:[#allocation7 + $0x30] sm:$0xff]
    %v2504 = vld [vmem:[#allocation7 + $0x38] sm:$0xff]
    %v2505 = vld [vmem:[#allocation7 + $0x40] sm:$0xff]
    %v2506 = vld [vmem:[#allocation7 + $0x48] sm:$0xff]
    %v2507 = vld [vmem:[#allocation7 + $0x50] sm:$0xff]
    %v2508 = vld [vmem:[#allocation7 + $0x58] sm:$0xff]
    %v2509 = vld [vmem:[#allocation7 + $0x60] sm:$0xff]
    %v2510 = vld [vmem:[#allocation7 + $0x68] sm:$0xff]
    %v2511 = vld [vmem:[#allocation7 + $0x70] sm:$0xff]
    %v2512 = vld [vmem:[#allocation7 + $0x78] sm:$0xff]
    %v2513 = vld [vmem:[#allocation7 + $0x80] sm:$0xff]
    %v2514 = vld [vmem:[#allocation7 + $0x88] sm:$0xff]
    %v2515 = vld [vmem:[#allocation7 + $0x90] sm:$0xff]
    %v2516 = vld [vmem:[#allocation7 + $0x98] sm:$0xff]
    %v2517 = vld [vmem:[#allocation7 + $0xa0] sm:$0xff]
    %v2518 = vld [vmem:[#allocation7 + $0xa8] sm:$0xff]
    %v2519 = vld [vmem:[#allocation7 + $0xb0] sm:$0xff]
    %v2520 = vld [vmem:[#allocation7 + $0xb8] sm:$0xff]
    %v2521 = vld [vmem:[#allocation7 + $0xc0] sm:$0xff]
    %v2522 = vld [vmem:[#allocation7 + $0xc8] sm:$0xff]
    %v2523 = vld [vmem:[#allocation7 + $0xd0] sm:$0xff]
    %v2524 = vld [vmem:[#allocation7 + $0xd8] sm:$0xff]
    %v2525 = vld [vmem:[#allocation7 + $0xe0] sm:$0xff]
    %v2526 = vld [vmem:[#allocation7 + $0xe8] sm:$0xff]
    %v2527 = vld [vmem:[#allocation7 + $0xf0] sm:$0xff]
    %v2528 = vld [vmem:[#allocation7 + $0xf8] sm:$0xff]
    %v2529 = vld [vmem:[#allocation7 + $0x100] sm:$0xff]
    %v2530 = vld [vmem:[#allocation7 + $0x108] sm:$0xff]
    %v2531 = vld [vmem:[#allocation7 + $0x110] sm:$0xff]
    %v2532 = vld [vmem:[#allocation7 + $0x118] sm:$0xff]
    %v2533 = vld [vmem:[#allocation7 + $0x120] sm:$0xff]
    %v2534 = vld [vmem:[#allocation7 + $0x128] sm:$0xff]
    %v2535 = vld [vmem:[#allocation7 + $0x130] sm:$0xff]
    %v2536 = vld [vmem:[#allocation7 + $0x138] sm:$0xff]
    %v2537 = vld [vmem:[#allocation7 + $0x140] sm:$0xff]
    %v2538 = vld [vmem:[#allocation7 + $0x148] sm:$0xff]
    %v2539 = vld [vmem:[#allocation7 + $0x150] sm:$0xff]
    %v2540 = vld [vmem:[#allocation7 + $0x158] sm:$0xff]
    %v2541 = vld [vmem:[#allocation7 + $0x160] sm:$0xff]
    %v2542 = vld [vmem:[#allocation7 + $0x168] sm:$0xff]
    %v2543 = vld [vmem:[#allocation7 + $0x170] sm:$0xff]
    %v2544 = vld [vmem:[#allocation7 + $0x178] sm:$0xff]
    %v2545 = vld [vmem:[%s5] sm:$0x7]
    %v2547 = vperm.slane %v2545, 0
    %v2548 = vperm.slane %v2545, 1
    %v2549 = vperm.slane %v2545, 2
    %2553 = vmatpush.msra.mxu0 %v2542
    %2554 = vmatpush.msra.mxu0 %v2539
    %2555 = vmatpush.msra.mxu0 %v2536
    %2556 = vmatpush.msra.mxu0 %v2533
    %2557 = vmatpush.msra.mxu0 %v2530
    %2558 = vmatpush.msra.mxu0 %v2527
    %2559 = vmatpush.msra.mxu0 %v2524
    %2560 = vmatpush.msra.mxu0 %v2521
    %2561 = vmatpush.msra.mxu0 %v2518
    %2562 = vmatpush.msra.mxu0 %v2515
    %2563 = vmatpush.msra.mxu0 %v2512
    %2564 = vmatpush.msra.mxu0 %v2509
    %2565 = vmatpush.msra.mxu0 %v2506
    %2566 = vmatpush.msra.mxu0 %v2503
    %2567 = vmatpush.msra.mxu0 %v2500
    %2568 = vmatpush.msra.mxu0 %v2497
    %2569 = vmatmul.f32.gmra.mxu0 %v2295
    %v2570 = vpop.f32.mrf.mxu0
    %v2571 = vadd.f32 %v2547, %v2570
    %2572 = vdwg.mxu0
    %2573 = vmatpush.msra.mxu0 %v2543
    %2574 = vmatpush.msra.mxu0 %v2540
    %2575 = vmatpush.msra.mxu0 %v2537
    %2576 = vmatpush.msra.mxu0 %v2534
    %2577 = vmatpush.msra.mxu0 %v2531
    %2578 = vmatpush.msra.mxu0 %v2528
    %2579 = vmatpush.msra.mxu0 %v2525
    %2580 = vmatpush.msra.mxu0 %v2522
    %2581 = vmatpush.msra.mxu0 %v2519
    %2582 = vmatpush.msra.mxu0 %v2516
    %2583 = vmatpush.msra.mxu0 %v2513
    %2584 = vmatpush.msra.mxu0 %v2510
    %2585 = vmatpush.msra.mxu0 %v2507
    %2586 = vmatpush.msra.mxu0 %v2504
    %2587 = vmatpush.msra.mxu0 %v2501
    %2588 = vmatpush.msra.mxu0 %v2498
    %2589 = vmatmul.f32.gmra.mxu0 %v2295
    %v2590 = vpop.f32.mrf.mxu0
    %v2591 = vadd.f32 %v2548, %v2590
    %2592 = vdwg.mxu0
    %2593 = vmatpush.msra.mxu0 %v2544
    %2594 = vmatpush.msra.mxu0 %v2541
    %2595 = vmatpush.msra.mxu0 %v2538
    %2596 = vmatpush.msra.mxu0 %v2535
    %2597 = vmatpush.msra.mxu0 %v2532
    %2598 = vmatpush.msra.mxu0 %v2529
    %2599 = vmatpush.msra.mxu0 %v2526
    %2600 = vmatpush.msra.mxu0 %v2523
    %2601 = vmatpush.msra.mxu0 %v2520
    %2602 = vmatpush.msra.mxu0 %v2517
    %2603 = vmatpush.msra.mxu0 %v2514
    %2604 = vmatpush.msra.mxu0 %v2511
    %2605 = vmatpush.msra.mxu0 %v2508
    %2606 = vmatpush.msra.mxu0 %v2505
    %2607 = vmatpush.msra.mxu0 %v2502
    %2608 = vmatpush.msra.mxu0 %v2499
    %2609 = vmatmul.f32.gmra.mxu0 %v2295
    %v2610 = vpop.f32.mrf.mxu0
    %v2611 = vadd.f32 %v2549, %v2610
    %2612 = vdwg.mxu0
    %s2613 = smul.u32 6, 3
    %s2614 = smul.addr %s2613, 8
    %s2615 = scalar_lea.vmem [#allocation2], %s2614
    %v2616 = vld [vmem:[%s2615] sm:$0xff]
    %v2617 = vld [vmem:[%s2615 + $0x8] sm:$0xff]
    %v2618 = vld [vmem:[%s2615 + $0x10] sm:$0xff]
    %v2619 = vadd.f32 %v2616, %v2571
    %v2620 = vxor.u32 %v2619, 2147483648
    %v2621 = vmul.f32 %v2620, 1.442695
    %v2622 = vpow.pop %v2621
    %v2623 = vadd.f32 %v2622, 1.0
    %v2624 = vrcp.pop %v2623
    %v2625 = vmul.f32 %v2623, %v2624
    %v2626 = vsub.f32 1.0, %v2625
    %v2627 = vmul.f32 %v2624, %v2626
    %v2628 = vadd.f32 %v2624, %v2627
    %vm2629 = vweird.f32 %v2623
    %vm2630 = vweird.f32 %v2624
    %vm2631 = vmor %vm2629, %vm2630
    %v2632 = vsel %vm2631, %v2624, %v2628
    %v2633 = vand.u32 2147483647, %v2623
    %vm2634 = vcmp.eq.f32.partialorder %v2633, 8.507059e+37
    %v2635 = vand.u32 %v2623, 2147483648
    %v2636 = vor.u32 1.1754944e-38, %v2635
    %v2637 = vsel %vm2634, %v2636, %v2632
    %v2638 = vmul.f32 1.0, %v2637
    %v2639 = vadd.f32 %v2617, %v2591
    %v2640 = vxor.u32 %v2639, 2147483648
    %v2641 = vmul.f32 %v2640, 1.442695
    %v2642 = vpow.pop %v2641
    %v2643 = vadd.f32 %v2642, 1.0
    %v2644 = vrcp.pop %v2643
    %v2645 = vmul.f32 %v2643, %v2644
    %v2646 = vsub.f32 1.0, %v2645
    %v2647 = vmul.f32 %v2644, %v2646
    %v2648 = vadd.f32 %v2644, %v2647
    %vm2649 = vweird.f32 %v2643
    %vm2650 = vweird.f32 %v2644
    %vm2651 = vmor %vm2649, %vm2650
    %v2652 = vsel %vm2651, %v2644, %v2648
    %v2653 = vand.u32 2147483647, %v2643
    %vm2654 = vcmp.eq.f32.partialorder %v2653, 8.507059e+37
    %v2655 = vand.u32 %v2643, 2147483648
    %v2656 = vor.u32 1.1754944e-38, %v2655
    %v2657 = vsel %vm2654, %v2656, %v2652
    %v2658 = vmul.f32 1.0, %v2657
    %v2659 = vmul.f32 %v2638, %v2611
    %v2660 = vadd.f32 %v2618, %v2659
    %v2661 = vtanh.pop %v2660
    %v2662 = vsub.f32 %v2295, %v2661
    %v2663 = vmul.f32 %v2658, %v2662
    %v2664 = vadd.f32 %v2661, %v2663
    %v2665 = vadd.f32 %v2664, %v2494
    %v2666 = vld [vmem:[%s6] sm:$0xff]
    %v2667 = vld [vmem:[%s6 + $0x8] sm:$0xff]
    %v2668 = vld [vmem:[%s6 + $0x10] sm:$0xff]
    %v2669 = vld [vmem:[%s6 + $0x18] sm:$0xff]
    %v2670 = vld [vmem:[%s6 + $0x20] sm:$0xff]
    %v2671 = vld [vmem:[%s6 + $0x28] sm:$0xff]
    %v2672 = vld [vmem:[%s6 + $0x30] sm:$0xff]
    %v2673 = vld [vmem:[%s6 + $0x38] sm:$0xff]
    %v2674 = vld [vmem:[%s6 + $0x40] sm:$0xff]
    %v2675 = vld [vmem:[%s6 + $0x48] sm:$0xff]
    %v2676 = vld [vmem:[%s6 + $0x50] sm:$0xff]
    %v2677 = vld [vmem:[%s6 + $0x58] sm:$0xff]
    %v2678 = vld [vmem:[%s6 + $0x60] sm:$0xff]
    %v2679 = vld [vmem:[%s6 + $0x68] sm:$0xff]
    %v2680 = vld [vmem:[%s6 + $0x70] sm:$0xff]
    %v2681 = vld [vmem:[%s6 + $0x78] sm:$0xff]
    %v2682 = vld [vmem:[%s6 + $0x80] sm:$0xff]
    %v2683 = vld [vmem:[%s6 + $0x88] sm:$0xff]
    %v2684 = vld [vmem:[%s6 + $0x90] sm:$0xff]
    %v2685 = vld [vmem:[%s6 + $0x98] sm:$0xff]
    %v2686 = vld [vmem:[%s6 + $0xa0] sm:$0xff]
    %v2687 = vld [vmem:[%s6 + $0xa8] sm:$0xff]
    %v2688 = vld [vmem:[%s6 + $0xb0] sm:$0xff]
    %v2689 = vld [vmem:[%s6 + $0xb8] sm:$0xff]
    %v2690 = vld [vmem:[%s6 + $0xc0] sm:$0xff]
    %v2691 = vld [vmem:[%s6 + $0xc8] sm:$0xff]
    %v2692 = vld [vmem:[%s6 + $0xd0] sm:$0xff]
    %v2693 = vld [vmem:[%s6 + $0xd8] sm:$0xff]
    %v2694 = vld [vmem:[%s6 + $0xe0] sm:$0xff]
    %v2695 = vld [vmem:[%s6 + $0xe8] sm:$0xff]
    %v2696 = vld [vmem:[%s6 + $0xf0] sm:$0xff]
    %v2697 = vld [vmem:[%s6 + $0xf8] sm:$0xff]
    %v2698 = vld [vmem:[%s6 + $0x100] sm:$0xff]
    %v2699 = vld [vmem:[%s6 + $0x108] sm:$0xff]
    %v2700 = vld [vmem:[%s6 + $0x110] sm:$0xff]
    %v2701 = vld [vmem:[%s6 + $0x118] sm:$0xff]
    %v2702 = vld [vmem:[%s6 + $0x120] sm:$0xff]
    %v2703 = vld [vmem:[%s6 + $0x128] sm:$0xff]
    %v2704 = vld [vmem:[%s6 + $0x130] sm:$0xff]
    %v2705 = vld [vmem:[%s6 + $0x138] sm:$0xff]
    %v2706 = vld [vmem:[%s6 + $0x140] sm:$0xff]
    %v2707 = vld [vmem:[%s6 + $0x148] sm:$0xff]
    %v2708 = vld [vmem:[%s6 + $0x150] sm:$0xff]
    %v2709 = vld [vmem:[%s6 + $0x158] sm:$0xff]
    %v2710 = vld [vmem:[%s6 + $0x160] sm:$0xff]
    %v2711 = vld [vmem:[%s6 + $0x168] sm:$0xff]
    %v2712 = vld [vmem:[%s6 + $0x170] sm:$0xff]
    %v2713 = vld [vmem:[%s6 + $0x178] sm:$0xff]
    %v2714 = vld [vmem:[%s6 + $0x180] sm:$0xff]
    %v2715 = vld [vmem:[%s6 + $0x188] sm:$0xff]
    %v2716 = vld [vmem:[%s6 + $0x190] sm:$0xff]
    %v2717 = vld [vmem:[%s6 + $0x198] sm:$0xff]
    %v2718 = vld [vmem:[%s6 + $0x1a0] sm:$0xff]
    %v2719 = vld [vmem:[%s6 + $0x1a8] sm:$0xff]
    %v2720 = vld [vmem:[%s6 + $0x1b0] sm:$0xff]
    %v2721 = vld [vmem:[%s6 + $0x1b8] sm:$0xff]
    %v2722 = vld [vmem:[%s6 + $0x1c0] sm:$0xff]
    %v2723 = vld [vmem:[%s6 + $0x1c8] sm:$0xff]
    %v2724 = vld [vmem:[%s6 + $0x1d0] sm:$0xff]
    %v2725 = vld [vmem:[%s6 + $0x1d8] sm:$0xff]
    %v2726 = vld [vmem:[%s6 + $0x1e0] sm:$0xff]
    %v2727 = vld [vmem:[%s6 + $0x1e8] sm:$0xff]
    %v2728 = vld [vmem:[%s6 + $0x1f0] sm:$0xff]
    %v2729 = vld [vmem:[%s6 + $0x1f8] sm:$0xff]
    %v2730 = vld [vmem:[%s7] sm:$0xf]
    %v2732 = vperm.slane %v2730, 0
    %v2733 = vperm.slane %v2730, 1
    %v2734 = vperm.slane %v2730, 2
    %v2735 = vperm.slane %v2730, 3
    %2740 = vmatpush.msra.mxu0 %v2726
    %2741 = vmatpush.msra.mxu0 %v2722
    %2742 = vmatpush.msra.mxu0 %v2718
    %2743 = vmatpush.msra.mxu0 %v2714
    %2744 = vmatpush.msra.mxu0 %v2710
    %2745 = vmatpush.msra.mxu0 %v2706
    %2746 = vmatpush.msra.mxu0 %v2702
    %2747 = vmatpush.msra.mxu0 %v2698
    %2748 = vmatpush.msra.mxu0 %v2694
    %2749 = vmatpush.msra.mxu0 %v2690
    %2750 = vmatpush.msra.mxu0 %v2686
    %2751 = vmatpush.msra.mxu0 %v2682
    %2752 = vmatpush.msra.mxu0 %v2678
    %2753 = vmatpush.msra.mxu0 %v2674
    %2754 = vmatpush.msra.mxu0 %v2670
    %2755 = vmatpush.msra.mxu0 %v2666
    %2756 = vmatmul.f32.gmra.mxu0 %v2665
    %v2757 = vpop.f32.mrf.mxu0
    %v2758 = vadd.f32 %v2732, %v2757
    %2759 = vdwg.mxu0
    %2760 = vmatpush.msra.mxu0 %v2727
    %2761 = vmatpush.msra.mxu0 %v2723
    %2762 = vmatpush.msra.mxu0 %v2719
    %2763 = vmatpush.msra.mxu0 %v2715
    %2764 = vmatpush.msra.mxu0 %v2711
    %2765 = vmatpush.msra.mxu0 %v2707
    %2766 = vmatpush.msra.mxu0 %v2703
    %2767 = vmatpush.msra.mxu0 %v2699
    %2768 = vmatpush.msra.mxu0 %v2695
    %2769 = vmatpush.msra.mxu0 %v2691
    %2770 = vmatpush.msra.mxu0 %v2687
    %2771 = vmatpush.msra.mxu0 %v2683
    %2772 = vmatpush.msra.mxu0 %v2679
    %2773 = vmatpush.msra.mxu0 %v2675
    %2774 = vmatpush.msra.mxu0 %v2671
    %2775 = vmatpush.msra.mxu0 %v2667
    %2776 = vmatmul.f32.gmra.mxu0 %v2665
    %v2777 = vpop.f32.mrf.mxu0
    %v2778 = vadd.f32 %v2733, %v2777
    %2779 = vdwg.mxu0
    %2780 = vmatpush.msra.mxu0 %v2728
    %2781 = vmatpush.msra.mxu0 %v2724
    %2782 = vmatpush.msra.mxu0 %v2720
    %2783 = vmatpush.msra.mxu0 %v2716
    %2784 = vmatpush.msra.mxu0 %v2712
    %2785 = vmatpush.msra.mxu0 %v2708
    %2786 = vmatpush.msra.mxu0 %v2704
    %2787 = vmatpush.msra.mxu0 %v2700
    %2788 = vmatpush.msra.mxu0 %v2696
    %2789 = vmatpush.msra.mxu0 %v2692
    %2790 = vmatpush.msra.mxu0 %v2688
    %2791 = vmatpush.msra.mxu0 %v2684
    %2792 = vmatpush.msra.mxu0 %v2680
    %2793 = vmatpush.msra.mxu0 %v2676
    %2794 = vmatpush.msra.mxu0 %v2672
    %2795 = vmatpush.msra.mxu0 %v2668
    %2796 = vmatmul.f32.gmra.mxu0 %v2665
    %v2797 = vpop.f32.mrf.mxu0
    %v2798 = vadd.f32 %v2734, %v2797
    %2799 = vdwg.mxu0
    %2800 = vmatpush.msra.mxu0 %v2729
    %2801 = vmatpush.msra.mxu0 %v2725
    %2802 = vmatpush.msra.mxu0 %v2721
    %2803 = vmatpush.msra.mxu0 %v2717
    %2804 = vmatpush.msra.mxu0 %v2713
    %2805 = vmatpush.msra.mxu0 %v2709
    %2806 = vmatpush.msra.mxu0 %v2705
    %2807 = vmatpush.msra.mxu0 %v2701
    %2808 = vmatpush.msra.mxu0 %v2697
    %2809 = vmatpush.msra.mxu0 %v2693
    %2810 = vmatpush.msra.mxu0 %v2689
    %2811 = vmatpush.msra.mxu0 %v2685
    %2812 = vmatpush.msra.mxu0 %v2681
    %2813 = vmatpush.msra.mxu0 %v2677
    %2814 = vmatpush.msra.mxu0 %v2673
    %2815 = vmatpush.msra.mxu0 %v2669
    %2816 = vmatmul.f32.gmra.mxu0 %v2665
    %v2817 = vpop.f32.mrf.mxu0
    %v2818 = vadd.f32 %v2735, %v2817
    %2819 = vdwg.mxu0
    %v2820 = vxor.u32 %v2758, 2147483648
    %v2821 = vmul.f32 %v2820, 1.442695
    %v2822 = vpow.pop %v2821
    %v2823 = vadd.f32 %v2822, 1.0
    %v2824 = vrcp.pop %v2823
    %v2825 = vmul.f32 %v2823, %v2824
    %v2826 = vsub.f32 1.0, %v2825
    %v2827 = vmul.f32 %v2824, %v2826
    %v2828 = vadd.f32 %v2824, %v2827
    %vm2829 = vweird.f32 %v2823
    %vm2830 = vweird.f32 %v2824
    %vm2831 = vmor %vm2829, %vm2830
    %v2832 = vsel %vm2831, %v2824, %v2828
    %v2833 = vand.u32 2147483647, %v2823
    %vm2834 = vcmp.eq.f32.partialorder %v2833, 8.507059e+37
    %v2835 = vand.u32 %v2823, 2147483648
    %v2836 = vor.u32 1.1754944e-38, %v2835
    %v2837 = vsel %vm2834, %v2836, %v2832
    %v2838 = vmul.f32 1.0, %v2837
    %v2839 = vxor.u32 %v2778, 2147483648
    %v2840 = vmul.f32 %v2839, 1.442695
    %v2841 = vpow.pop %v2840
    %v2842 = vadd.f32 %v2841, 1.0
    %v2843 = vrcp.pop %v2842
    %v2844 = vmul.f32 %v2842, %v2843
    %v2845 = vsub.f32 1.0, %v2844
    %v2846 = vmul.f32 %v2843, %v2845
    %v2847 = vadd.f32 %v2843, %v2846
    %vm2848 = vweird.f32 %v2842
    %vm2849 = vweird.f32 %v2843
    %vm2850 = vmor %vm2848, %vm2849
    %v2851 = vsel %vm2850, %v2843, %v2847
    %v2852 = vand.u32 2147483647, %v2842
    %vm2853 = vcmp.eq.f32.partialorder %v2852, 8.507059e+37
    %v2854 = vand.u32 %v2842, 2147483648
    %v2855 = vor.u32 1.1754944e-38, %v2854
    %v2856 = vsel %vm2853, %v2855, %v2851
    %v2857 = vmul.f32 1.0, %v2856
    %v2858 = vmul.f32 %v2838, %v2818
    %v2859 = vadd.f32 %v2798, %v2858
    %v2860 = vtanh.pop %v2859
    %v2861 = vsub.f32 %v2494, %v2860
    %v2862 = vmul.f32 %v2857, %v2861
    %v2863 = vadd.f32 %v2860, %v2862
    %s2864 = scalar_lea.vmem [#allocation3], 48
    %2865 = vst [vmem:[%s2864] sm:$0xff] %v2863
    %v2866 = vld [vmem:[#allocation7] sm:$0xff]
    %v2867 = vld [vmem:[#allocation7 + $0x8] sm:$0xff]
    %v2868 = vld [vmem:[#allocation7 + $0x10] sm:$0xff]
    %v2869 = vld [vmem:[#allocation7 + $0x18] sm:$0xff]
    %v2870 = vld [vmem:[#allocation7 + $0x20] sm:$0xff]
    %v2871 = vld [vmem:[#allocation7 + $0x28] sm:$0xff]
    %v2872 = vld [vmem:[#allocation7 + $0x30] sm:$0xff]
    %v2873 = vld [vmem:[#allocation7 + $0x38] sm:$0xff]
    %v2874 = vld [vmem:[#allocation7 + $0x40] sm:$0xff]
    %v2875 = vld [vmem:[#allocation7 + $0x48] sm:$0xff]
    %v2876 = vld [vmem:[#allocation7 + $0x50] sm:$0xff]
    %v2877 = vld [vmem:[#allocation7 + $0x58] sm:$0xff]
    %v2878 = vld [vmem:[#allocation7 + $0x60] sm:$0xff]
    %v2879 = vld [vmem:[#allocation7 + $0x68] sm:$0xff]
    %v2880 = vld [vmem:[#allocation7 + $0x70] sm:$0xff]
    %v2881 = vld [vmem:[#allocation7 + $0x78] sm:$0xff]
    %v2882 = vld [vmem:[#allocation7 + $0x80] sm:$0xff]
    %v2883 = vld [vmem:[#allocation7 + $0x88] sm:$0xff]
    %v2884 = vld [vmem:[#allocation7 + $0x90] sm:$0xff]
    %v2885 = vld [vmem:[#allocation7 + $0x98] sm:$0xff]
    %v2886 = vld [vmem:[#allocation7 + $0xa0] sm:$0xff]
    %v2887 = vld [vmem:[#allocation7 + $0xa8] sm:$0xff]
    %v2888 = vld [vmem:[#allocation7 + $0xb0] sm:$0xff]
    %v2889 = vld [vmem:[#allocation7 + $0xb8] sm:$0xff]
    %v2890 = vld [vmem:[#allocation7 + $0xc0] sm:$0xff]
    %v2891 = vld [vmem:[#allocation7 + $0xc8] sm:$0xff]
    %v2892 = vld [vmem:[#allocation7 + $0xd0] sm:$0xff]
    %v2893 = vld [vmem:[#allocation7 + $0xd8] sm:$0xff]
    %v2894 = vld [vmem:[#allocation7 + $0xe0] sm:$0xff]
    %v2895 = vld [vmem:[#allocation7 + $0xe8] sm:$0xff]
    %v2896 = vld [vmem:[#allocation7 + $0xf0] sm:$0xff]
    %v2897 = vld [vmem:[#allocation7 + $0xf8] sm:$0xff]
    %v2898 = vld [vmem:[#allocation7 + $0x100] sm:$0xff]
    %v2899 = vld [vmem:[#allocation7 + $0x108] sm:$0xff]
    %v2900 = vld [vmem:[#allocation7 + $0x110] sm:$0xff]
    %v2901 = vld [vmem:[#allocation7 + $0x118] sm:$0xff]
    %v2902 = vld [vmem:[#allocation7 + $0x120] sm:$0xff]
    %v2903 = vld [vmem:[#allocation7 + $0x128] sm:$0xff]
    %v2904 = vld [vmem:[#allocation7 + $0x130] sm:$0xff]
    %v2905 = vld [vmem:[#allocation7 + $0x138] sm:$0xff]
    %v2906 = vld [vmem:[#allocation7 + $0x140] sm:$0xff]
    %v2907 = vld [vmem:[#allocation7 + $0x148] sm:$0xff]
    %v2908 = vld [vmem:[#allocation7 + $0x150] sm:$0xff]
    %v2909 = vld [vmem:[#allocation7 + $0x158] sm:$0xff]
    %v2910 = vld [vmem:[#allocation7 + $0x160] sm:$0xff]
    %v2911 = vld [vmem:[#allocation7 + $0x168] sm:$0xff]
    %v2912 = vld [vmem:[#allocation7 + $0x170] sm:$0xff]
    %v2913 = vld [vmem:[#allocation7 + $0x178] sm:$0xff]
    %v2914 = vld [vmem:[%s5] sm:$0x7]
    %v2916 = vperm.slane %v2914, 0
    %v2917 = vperm.slane %v2914, 1
    %v2918 = vperm.slane %v2914, 2
    %2922 = vmatpush.msra.mxu0 %v2911
    %2923 = vmatpush.msra.mxu0 %v2908
    %2924 = vmatpush.msra.mxu0 %v2905
    %2925 = vmatpush.msra.mxu0 %v2902
    %2926 = vmatpush.msra.mxu0 %v2899
    %2927 = vmatpush.msra.mxu0 %v2896
    %2928 = vmatpush.msra.mxu0 %v2893
    %2929 = vmatpush.msra.mxu0 %v2890
    %2930 = vmatpush.msra.mxu0 %v2887
    %2931 = vmatpush.msra.mxu0 %v2884
    %2932 = vmatpush.msra.mxu0 %v2881
    %2933 = vmatpush.msra.mxu0 %v2878
    %2934 = vmatpush.msra.mxu0 %v2875
    %2935 = vmatpush.msra.mxu0 %v2872
    %2936 = vmatpush.msra.mxu0 %v2869
    %2937 = vmatpush.msra.mxu0 %v2866
    %2938 = vmatmul.f32.gmra.mxu0 %v2664
    %v2939 = vpop.f32.mrf.mxu0
    %v2940 = vadd.f32 %v2916, %v2939
    %2941 = vdwg.mxu0
    %2942 = vmatpush.msra.mxu0 %v2912
    %2943 = vmatpush.msra.mxu0 %v2909
    %2944 = vmatpush.msra.mxu0 %v2906
    %2945 = vmatpush.msra.mxu0 %v2903
    %2946 = vmatpush.msra.mxu0 %v2900
    %2947 = vmatpush.msra.mxu0 %v2897
    %2948 = vmatpush.msra.mxu0 %v2894
    %2949 = vmatpush.msra.mxu0 %v2891
    %2950 = vmatpush.msra.mxu0 %v2888
    %2951 = vmatpush.msra.mxu0 %v2885
    %2952 = vmatpush.msra.mxu0 %v2882
    %2953 = vmatpush.msra.mxu0 %v2879
    %2954 = vmatpush.msra.mxu0 %v2876
    %2955 = vmatpush.msra.mxu0 %v2873
    %2956 = vmatpush.msra.mxu0 %v2870
    %2957 = vmatpush.msra.mxu0 %v2867
    %2958 = vmatmul.f32.gmra.mxu0 %v2664
    %v2959 = vpop.f32.mrf.mxu0
    %v2960 = vadd.f32 %v2917, %v2959
    %2961 = vdwg.mxu0
    %2962 = vmatpush.msra.mxu0 %v2913
    %2963 = vmatpush.msra.mxu0 %v2910
    %2964 = vmatpush.msra.mxu0 %v2907
    %2965 = vmatpush.msra.mxu0 %v2904
    %2966 = vmatpush.msra.mxu0 %v2901
    %2967 = vmatpush.msra.mxu0 %v2898
    %2968 = vmatpush.msra.mxu0 %v2895
    %2969 = vmatpush.msra.mxu0 %v2892
    %2970 = vmatpush.msra.mxu0 %v2889
    %2971 = vmatpush.msra.mxu0 %v2886
    %2972 = vmatpush.msra.mxu0 %v2883
    %2973 = vmatpush.msra.mxu0 %v2880
    %2974 = vmatpush.msra.mxu0 %v2877
    %2975 = vmatpush.msra.mxu0 %v2874
    %2976 = vmatpush.msra.mxu0 %v2871
    %2977 = vmatpush.msra.mxu0 %v2868
    %2978 = vmatmul.f32.gmra.mxu0 %v2664
    %v2979 = vpop.f32.mrf.mxu0
    %v2980 = vadd.f32 %v2918, %v2979
    %2981 = vdwg.mxu0
    %s2982 = smul.u32 7, 3
    %s2983 = smul.addr %s2982, 8
    %s2984 = scalar_lea.vmem [#allocation2], %s2983
    %v2985 = vld [vmem:[%s2984] sm:$0xff]
    %v2986 = vld [vmem:[%s2984 + $0x8] sm:$0xff]
    %v2987 = vld [vmem:[%s2984 + $0x10] sm:$0xff]
    %v2988 = vadd.f32 %v2985, %v2940
    %v2989 = vxor.u32 %v2988, 2147483648
    %v2990 = vmul.f32 %v2989, 1.442695
    %v2991 = vpow.pop %v2990
    %v2992 = vadd.f32 %v2991, 1.0
    %v2993 = vrcp.pop %v2992
    %v2994 = vmul.f32 %v2992, %v2993
    %v2995 = vsub.f32 1.0, %v2994
    %v2996 = vmul.f32 %v2993, %v2995
    %v2997 = vadd.f32 %v2993, %v2996
    %vm2998 = vweird.f32 %v2992
    %vm2999 = vweird.f32 %v2993
    %vm3000 = vmor %vm2998, %vm2999
    %v3001 = vsel %vm3000, %v2993, %v2997
    %v3002 = vand.u32 2147483647, %v2992
    %vm3003 = vcmp.eq.f32.partialorder %v3002, 8.507059e+37
    %v3004 = vand.u32 %v2992, 2147483648
    %v3005 = vor.u32 1.1754944e-38, %v3004
    %v3006 = vsel %vm3003, %v3005, %v3001
    %v3007 = vmul.f32 1.0, %v3006
    %v3008 = vadd.f32 %v2986, %v2960
    %v3009 = vxor.u32 %v3008, 2147483648
    %v3010 = vmul.f32 %v3009, 1.442695
    %v3011 = vpow.pop %v3010
    %v3012 = vadd.f32 %v3011, 1.0
    %v3013 = vrcp.pop %v3012
    %v3014 = vmul.f32 %v3012, %v3013
    %v3015 = vsub.f32 1.0, %v3014
    %v3016 = vmul.f32 %v3013, %v3015
    %v3017 = vadd.f32 %v3013, %v3016
    %vm3018 = vweird.f32 %v3012
    %vm3019 = vweird.f32 %v3013
    %vm3020 = vmor %vm3018, %vm3019
    %v3021 = vsel %vm3020, %v3013, %v3017
    %v3022 = vand.u32 2147483647, %v3012
    %vm3023 = vcmp.eq.f32.partialorder %v3022, 8.507059e+37
    %v3024 = vand.u32 %v3012, 2147483648
    %v3025 = vor.u32 1.1754944e-38, %v3024
    %v3026 = vsel %vm3023, %v3025, %v3021
    %v3027 = vmul.f32 1.0, %v3026
    %v3028 = vmul.f32 %v3007, %v2980
    %v3029 = vadd.f32 %v2987, %v3028
    %v3030 = vtanh.pop %v3029
    %v3031 = vsub.f32 %v2664, %v3030
    %v3032 = vmul.f32 %v3027, %v3031
    %v3033 = vadd.f32 %v3030, %v3032
    %v3034 = vadd.f32 %v3033, %v2863
    %v3035 = vld [vmem:[%s6] sm:$0xff]
    %v3036 = vld [vmem:[%s6 + $0x8] sm:$0xff]
    %v3037 = vld [vmem:[%s6 + $0x10] sm:$0xff]
    %v3038 = vld [vmem:[%s6 + $0x18] sm:$0xff]
    %v3039 = vld [vmem:[%s6 + $0x20] sm:$0xff]
    %v3040 = vld [vmem:[%s6 + $0x28] sm:$0xff]
    %v3041 = vld [vmem:[%s6 + $0x30] sm:$0xff]
    %v3042 = vld [vmem:[%s6 + $0x38] sm:$0xff]
    %v3043 = vld [vmem:[%s6 + $0x40] sm:$0xff]
    %v3044 = vld [vmem:[%s6 + $0x48] sm:$0xff]
    %v3045 = vld [vmem:[%s6 + $0x50] sm:$0xff]
    %v3046 = vld [vmem:[%s6 + $0x58] sm:$0xff]
    %v3047 = vld [vmem:[%s6 + $0x60] sm:$0xff]
    %v3048 = vld [vmem:[%s6 + $0x68] sm:$0xff]
    %v3049 = vld [vmem:[%s6 + $0x70] sm:$0xff]
    %v3050 = vld [vmem:[%s6 + $0x78] sm:$0xff]
    %v3051 = vld [vmem:[%s6 + $0x80] sm:$0xff]
    %v3052 = vld [vmem:[%s6 + $0x88] sm:$0xff]
    %v3053 = vld [vmem:[%s6 + $0x90] sm:$0xff]
    %v3054 = vld [vmem:[%s6 + $0x98] sm:$0xff]
    %v3055 = vld [vmem:[%s6 + $0xa0] sm:$0xff]
    %v3056 = vld [vmem:[%s6 + $0xa8] sm:$0xff]
    %v3057 = vld [vmem:[%s6 + $0xb0] sm:$0xff]
    %v3058 = vld [vmem:[%s6 + $0xb8] sm:$0xff]
    %v3059 = vld [vmem:[%s6 + $0xc0] sm:$0xff]
    %v3060 = vld [vmem:[%s6 + $0xc8] sm:$0xff]
    %v3061 = vld [vmem:[%s6 + $0xd0] sm:$0xff]
    %v3062 = vld [vmem:[%s6 + $0xd8] sm:$0xff]
    %v3063 = vld [vmem:[%s6 + $0xe0] sm:$0xff]
    %v3064 = vld [vmem:[%s6 + $0xe8] sm:$0xff]
    %v3065 = vld [vmem:[%s6 + $0xf0] sm:$0xff]
    %v3066 = vld [vmem:[%s6 + $0xf8] sm:$0xff]
    %v3067 = vld [vmem:[%s6 + $0x100] sm:$0xff]
    %v3068 = vld [vmem:[%s6 + $0x108] sm:$0xff]
    %v3069 = vld [vmem:[%s6 + $0x110] sm:$0xff]
    %v3070 = vld [vmem:[%s6 + $0x118] sm:$0xff]
    %v3071 = vld [vmem:[%s6 + $0x120] sm:$0xff]
    %v3072 = vld [vmem:[%s6 + $0x128] sm:$0xff]
    %v3073 = vld [vmem:[%s6 + $0x130] sm:$0xff]
    %v3074 = vld [vmem:[%s6 + $0x138] sm:$0xff]
    %v3075 = vld [vmem:[%s6 + $0x140] sm:$0xff]
    %v3076 = vld [vmem:[%s6 + $0x148] sm:$0xff]
    %v3077 = vld [vmem:[%s6 + $0x150] sm:$0xff]
    %v3078 = vld [vmem:[%s6 + $0x158] sm:$0xff]
    %v3079 = vld [vmem:[%s6 + $0x160] sm:$0xff]
    %v3080 = vld [vmem:[%s6 + $0x168] sm:$0xff]
    %v3081 = vld [vmem:[%s6 + $0x170] sm:$0xff]
    %v3082 = vld [vmem:[%s6 + $0x178] sm:$0xff]
    %v3083 = vld [vmem:[%s6 + $0x180] sm:$0xff]
    %v3084 = vld [vmem:[%s6 + $0x188] sm:$0xff]
    %v3085 = vld [vmem:[%s6 + $0x190] sm:$0xff]
    %v3086 = vld [vmem:[%s6 + $0x198] sm:$0xff]
    %v3087 = vld [vmem:[%s6 + $0x1a0] sm:$0xff]
    %v3088 = vld [vmem:[%s6 + $0x1a8] sm:$0xff]
    %v3089 = vld [vmem:[%s6 + $0x1b0] sm:$0xff]
    %v3090 = vld [vmem:[%s6 + $0x1b8] sm:$0xff]
    %v3091 = vld [vmem:[%s6 + $0x1c0] sm:$0xff]
    %v3092 = vld [vmem:[%s6 + $0x1c8] sm:$0xff]
    %v3093 = vld [vmem:[%s6 + $0x1d0] sm:$0xff]
    %v3094 = vld [vmem:[%s6 + $0x1d8] sm:$0xff]
    %v3095 = vld [vmem:[%s6 + $0x1e0] sm:$0xff]
    %v3096 = vld [vmem:[%s6 + $0x1e8] sm:$0xff]
    %v3097 = vld [vmem:[%s6 + $0x1f0] sm:$0xff]
    %v3098 = vld [vmem:[%s6 + $0x1f8] sm:$0xff]
    %v3099 = vld [vmem:[%s7] sm:$0xf]
    %v3101 = vperm.slane %v3099, 0
    %v3102 = vperm.slane %v3099, 1
    %v3103 = vperm.slane %v3099, 2
    %v3104 = vperm.slane %v3099, 3
    %3109 = vmatpush.msra.mxu0 %v3095
    %3110 = vmatpush.msra.mxu0 %v3091
    %3111 = vmatpush.msra.mxu0 %v3087
    %3112 = vmatpush.msra.mxu0 %v3083
    %3113 = vmatpush.msra.mxu0 %v3079
    %3114 = vmatpush.msra.mxu0 %v3075
    %3115 = vmatpush.msra.mxu0 %v3071
    %3116 = vmatpush.msra.mxu0 %v3067
    %3117 = vmatpush.msra.mxu0 %v3063
    %3118 = vmatpush.msra.mxu0 %v3059
    %3119 = vmatpush.msra.mxu0 %v3055
    %3120 = vmatpush.msra.mxu0 %v3051
    %3121 = vmatpush.msra.mxu0 %v3047
    %3122 = vmatpush.msra.mxu0 %v3043
    %3123 = vmatpush.msra.mxu0 %v3039
    %3124 = vmatpush.msra.mxu0 %v3035
    %3125 = vmatmul.f32.gmra.mxu0 %v3034
    %v3126 = vpop.f32.mrf.mxu0
    %v3127 = vadd.f32 %v3101, %v3126
    %3128 = vdwg.mxu0
    %3129 = vmatpush.msra.mxu0 %v3096
    %3130 = vmatpush.msra.mxu0 %v3092
    %3131 = vmatpush.msra.mxu0 %v3088
    %3132 = vmatpush.msra.mxu0 %v3084
    %3133 = vmatpush.msra.mxu0 %v3080
    %3134 = vmatpush.msra.mxu0 %v3076
    %3135 = vmatpush.msra.mxu0 %v3072
    %3136 = vmatpush.msra.mxu0 %v3068
    %3137 = vmatpush.msra.mxu0 %v3064
    %3138 = vmatpush.msra.mxu0 %v3060
    %3139 = vmatpush.msra.mxu0 %v3056
    %3140 = vmatpush.msra.mxu0 %v3052
    %3141 = vmatpush.msra.mxu0 %v3048
    %3142 = vmatpush.msra.mxu0 %v3044
    %3143 = vmatpush.msra.mxu0 %v3040
    %3144 = vmatpush.msra.mxu0 %v3036
    %3145 = vmatmul.f32.gmra.mxu0 %v3034
    %v3146 = vpop.f32.mrf.mxu0
    %v3147 = vadd.f32 %v3102, %v3146
    %3148 = vdwg.mxu0
    %3149 = vmatpush.msra.mxu0 %v3097
    %3150 = vmatpush.msra.mxu0 %v3093
    %3151 = vmatpush.msra.mxu0 %v3089
    %3152 = vmatpush.msra.mxu0 %v3085
    %3153 = vmatpush.msra.mxu0 %v3081
    %3154 = vmatpush.msra.mxu0 %v3077
    %3155 = vmatpush.msra.mxu0 %v3073
    %3156 = vmatpush.msra.mxu0 %v3069
    %3157 = vmatpush.msra.mxu0 %v3065
    %3158 = vmatpush.msra.mxu0 %v3061
    %3159 = vmatpush.msra.mxu0 %v3057
    %3160 = vmatpush.msra.mxu0 %v3053
    %3161 = vmatpush.msra.mxu0 %v3049
    %3162 = vmatpush.msra.mxu0 %v3045
    %3163 = vmatpush.msra.mxu0 %v3041
    %3164 = vmatpush.msra.mxu0 %v3037
    %3165 = vmatmul.f32.gmra.mxu0 %v3034
    %v3166 = vpop.f32.mrf.mxu0
    %v3167 = vadd.f32 %v3103, %v3166
    %3168 = vdwg.mxu0
    %3169 = vmatpush.msra.mxu0 %v3098
    %3170 = vmatpush.msra.mxu0 %v3094
    %3171 = vmatpush.msra.mxu0 %v3090
    %3172 = vmatpush.msra.mxu0 %v3086
    %3173 = vmatpush.msra.mxu0 %v3082
    %3174 = vmatpush.msra.mxu0 %v3078
    %3175 = vmatpush.msra.mxu0 %v3074
    %3176 = vmatpush.msra.mxu0 %v3070
    %3177 = vmatpush.msra.mxu0 %v3066
    %3178 = vmatpush.msra.mxu0 %v3062
    %3179 = vmatpush.msra.mxu0 %v3058
    %3180 = vmatpush.msra.mxu0 %v3054
    %3181 = vmatpush.msra.mxu0 %v3050
    %3182 = vmatpush.msra.mxu0 %v3046
    %3183 = vmatpush.msra.mxu0 %v3042
    %3184 = vmatpush.msra.mxu0 %v3038
    %3185 = vmatmul.f32.gmra.mxu0 %v3034
    %v3186 = vpop.f32.mrf.mxu0
    %v3187 = vadd.f32 %v3104, %v3186
    %3188 = vdwg.mxu0
    %v3189 = vxor.u32 %v3127, 2147483648
    %v3190 = vmul.f32 %v3189, 1.442695
    %v3191 = vpow.pop %v3190
    %v3192 = vadd.f32 %v3191, 1.0
    %v3193 = vrcp.pop %v3192
    %v3194 = vmul.f32 %v3192, %v3193
    %v3195 = vsub.f32 1.0, %v3194
    %v3196 = vmul.f32 %v3193, %v3195
    %v3197 = vadd.f32 %v3193, %v3196
    %vm3198 = vweird.f32 %v3192
    %vm3199 = vweird.f32 %v3193
    %vm3200 = vmor %vm3198, %vm3199
    %v3201 = vsel %vm3200, %v3193, %v3197
    %v3202 = vand.u32 2147483647, %v3192
    %vm3203 = vcmp.eq.f32.partialorder %v3202, 8.507059e+37
    %v3204 = vand.u32 %v3192, 2147483648
    %v3205 = vor.u32 1.1754944e-38, %v3204
    %v3206 = vsel %vm3203, %v3205, %v3201
    %v3207 = vmul.f32 1.0, %v3206
    %v3208 = vxor.u32 %v3147, 2147483648
    %v3209 = vmul.f32 %v3208, 1.442695
    %v3210 = vpow.pop %v3209
    %v3211 = vadd.f32 %v3210, 1.0
    %v3212 = vrcp.pop %v3211
    %v3213 = vmul.f32 %v3211, %v3212
    %v3214 = vsub.f32 1.0, %v3213
    %v3215 = vmul.f32 %v3212, %v3214
    %v3216 = vadd.f32 %v3212, %v3215
    %vm3217 = vweird.f32 %v3211
    %vm3218 = vweird.f32 %v3212
    %vm3219 = vmor %vm3217, %vm3218
    %v3220 = vsel %vm3219, %v3212, %v3216
    %v3221 = vand.u32 2147483647, %v3211
    %vm3222 = vcmp.eq.f32.partialorder %v3221, 8.507059e+37
    %v3223 = vand.u32 %v3211, 2147483648
    %v3224 = vor.u32 1.1754944e-38, %v3223
    %v3225 = vsel %vm3222, %v3224, %v3220
    %v3226 = vmul.f32 1.0, %v3225
    %v3227 = vmul.f32 %v3207, %v3187
    %v3228 = vadd.f32 %v3167, %v3227
    %v3229 = vtanh.pop %v3228
    %v3230 = vsub.f32 %v2863, %v3229
    %v3231 = vmul.f32 %v3226, %v3230
    %v3232 = vadd.f32 %v3229, %v3231
    %s3233 = scalar_lea.vmem [#allocation3], 56
    %3234 = vst [vmem:[%s3233] sm:$0xff] %v3232
    %3235 = vst [vmem:[%s11] sm:$0xff] %v3033
    %s3236 = scalar_lea.vmem %s11, 8
    %3237 = vst [vmem:[%s3236] sm:$0xff] %v3232
    %v3238 = vld [vmem:[#allocation3] sm:$0xff]
    %v3239 = vld [vmem:[#allocation3 + $0x8] sm:$0xff]
    %v3240 = vld [vmem:[#allocation3 + $0x10] sm:$0xff]
    %v3241 = vld [vmem:[#allocation3 + $0x18] sm:$0xff]
    %v3242 = vld [vmem:[#allocation3 + $0x20] sm:$0xff]
    %v3243 = vld [vmem:[#allocation3 + $0x28] sm:$0xff]
    %v3244 = vld [vmem:[#allocation3 + $0x30] sm:$0xff]
    %v3245 = vld [vmem:[#allocation3 + $0x38] sm:$0xff]
    %v3246 = vld [vmem:[%s8] sm:$0xff]
    %v3247 = vld [vmem:[%s8 + $0x8] sm:$0xff]
    %v3248 = vld [vmem:[%s8 + $0x10] sm:$0xff]
    %v3249 = vld [vmem:[%s8 + $0x18] sm:$0xff]
    %v3250 = vld [vmem:[%s8 + $0x20] sm:$0xff]
    %v3251 = vld [vmem:[%s8 + $0x28] sm:$0xff]
    %v3252 = vld [vmem:[%s8 + $0x30] sm:$0xff]
    %v3253 = vld [vmem:[%s8 + $0x38] sm:$0xff]
    %v3254 = vld [vmem:[%s8 + $0x40] sm:$0xff]
    %v3255 = vld [vmem:[%s8 + $0x48] sm:$0xff]
    %v3256 = vld [vmem:[%s8 + $0x50] sm:$0xff]
    %v3257 = vld [vmem:[%s8 + $0x58] sm:$0xff]
    %v3258 = vld [vmem:[%s8 + $0x60] sm:$0xff]
    %v3259 = vld [vmem:[%s8 + $0x68] sm:$0xff]
    %v3260 = vld [vmem:[%s8 + $0x70] sm:$0xff]
    %v3261 = vld [vmem:[%s8 + $0x78] sm:$0xff]
    %v3262 = vld [vmem:[%s9] sm:$0x1]
    %v3264 = vperm.slane %v3262, 0
    %3266 = vmatpush.msra.mxu0 %v3261
    %3267 = vmatpush.msra.mxu0 %v3260
    %3268 = vmatpush.msra.mxu0 %v3259
    %3269 = vmatpush.msra.mxu0 %v3258
    %3270 = vmatpush.msra.mxu0 %v3257
    %3271 = vmatpush.msra.mxu0 %v3256
    %3272 = vmatpush.msra.mxu0 %v3255
    %3273 = vmatpush.msra.mxu0 %v3254
    %3274 = vmatpush.msra.mxu0 %v3253
    %3275 = vmatpush.msra.mxu0 %v3252
    %3276 = vmatpush.msra.mxu0 %v3251
    %3277 = vmatpush.msra.mxu0 %v3250
    %3278 = vmatpush.msra.mxu0 %v3249
    %3279 = vmatpush.msra.mxu0 %v3248
    %3280 = vmatpush.msra.mxu0 %v3247
    %3281 = vmatpush.msra.mxu0 %v3246
    %3282 = vmatmul.f32.gmra.mxu0 %v3238
    %v3283 = vpop.f32.mrf.mxu0
    %v3284 = vadd.f32 %v3264, %v3283
    %3285 = vmatmul.f32.gmra.mxu0 %v3239
    %v3286 = vpop.f32.mrf.mxu0
    %v3287 = vadd.f32 %v3264, %v3286
    %3288 = vmatmul.f32.gmra.mxu0 %v3240
    %v3289 = vpop.f32.mrf.mxu0
    %v3290 = vadd.f32 %v3264, %v3289
    %3291 = vmatmul.f32.gmra.mxu0 %v3241
    %v3292 = vpop.f32.mrf.mxu0
    %v3293 = vadd.f32 %v3264, %v3292
    %3294 = vmatmul.f32.gmra.mxu0 %v3242
    %v3295 = vpop.f32.mrf.mxu0
    %v3296 = vadd.f32 %v3264, %v3295
    %3297 = vmatmul.f32.gmra.mxu0 %v3243
    %v3298 = vpop.f32.mrf.mxu0
    %v3299 = vadd.f32 %v3264, %v3298
    %3300 = vmatmul.f32.gmra.mxu0 %v3244
    %v3301 = vpop.f32.mrf.mxu0
    %v3302 = vadd.f32 %v3264, %v3301
    %3303 = vmatmul.f32.gmra.mxu0 %v3245
    %v3304 = vpop.f32.mrf.mxu0
    %v3305 = vadd.f32 %v3264, %v3304
    %3306 = vdwg.mxu0
    %3307 = vst [vmem:[#allocation9] sm:$0xff] %v3284
    %3308 = vst [vmem:[#allocation9 + $0x8] sm:$0xff] %v3287
    %3309 = vst [vmem:[#allocation9 + $0x10] sm:$0xff] %v3290
    %3310 = vst [vmem:[#allocation9 + $0x18] sm:$0xff] %v3293
    %3311 = vst [vmem:[#allocation9 + $0x20] sm:$0xff] %v3296
    %3312 = vst [vmem:[#allocation9 + $0x28] sm:$0xff] %v3299
    %3313 = vst [vmem:[#allocation9 + $0x30] sm:$0xff] %v3302
    %3314 = vst [vmem:[#allocation9 + $0x38] sm:$0xff] %v3305
    // Predicated region
    $region50: #{rnn_decoder_decode.1} parent=1 // pred_check
      _
    $region51: #{rnn_decoder_decode.1} parent=1 // pred_check_branch
      %3316 = sbr.rel (0) target = $region53
    $region52: #{rnn_decoder_decode.1} parent=1 // pred_region
      %3318 = vsyncadd [#allocation6], 0
      %s3319 = sshll.u32 [#allocation9], 4
      %s3320 = int_to_ptr.vmem [resolvable:$true] %s3319
      %s3321 = sshll.u32 %s10, 4
      %s3322 = int_to_ptr.hbm [resolvable:$true] %s3321
      %3327 = dma.vmem_to_hbm [thread:$0]  %s3320, 1024, %s3322, [#allocation6], 128, 128, 8
    $region53: #{rnn_decoder_decode.1} parent=1 // pred_fallthru
      _
    // Predicated region
    $region54: #{rnn_decoder_decode.1} parent=1 // pred_check
      _
    $region55: #{rnn_decoder_decode.1} parent=1 // pred_check_branch
      %3329 = sbr.rel (0) target = $region57
    $region56: #{rnn_decoder_decode.1} parent=1 // pred_region
      _
    $region57: #{rnn_decoder_decode.1} parent=1 // pred_fallthru
      _
    // Predicated region
    $region58: #{rnn_decoder_decode.1} parent=1 // pred_check
      _
    $region59: #{rnn_decoder_decode.1} parent=1 // pred_check_branch
      %3331 = sbr.rel (0) target = $region61
    $region60: #{rnn_decoder_decode.1} parent=1 // pred_region
      %3333 = dma.done [#allocation6], 1024
    $region61: #{rnn_decoder_decode.1} parent=1 // pred_fallthru
      _
    // Predicated region
    $region62: #{rnn_decoder_decode.1} parent=1 // pred_check
      _
    $region63: #{rnn_decoder_decode.1} parent=1 // pred_check_branch
      %3335 = sbr.rel (0) target = $region65
    $region64: #{rnn_decoder_decode.1} parent=1 // pred_region
      _
    $region65: #{rnn_decoder_decode.1} parent=1 // pred_fallthru
      _
    %3336 = vsyncpa [#allocation5], 1
    %3337 = vsyncpa [#allocation8], 1
    %3338 = vsyncpa [#allocation6], 1

</llo_original>
